<compile_context>
chip_gen: v7x
topology: tpu7x:2x2x1
jax: 0.10.0
libtpu: 0.0.40
codegen_flags: <defaults>
</compile_context>

<pallas_src>
import functools

import jax
import jax.numpy as jnp
from jax import lax
from jax.experimental import pallas as pl
from jax.experimental.pallas import tpu as pltpu

D_HIDDEN = 256          # dim_embedding_key in the PyTorch module
C_OUT = 32              # channel_out of spatial_conv
KERNEL = 3
T_CHUNK = 32            # max timesteps of gi precompute resident in VMEM per chunk


def st_encoder_kernel(xf_ref,    # (Tc, TB, 3*d_h) fused conv taps for this chunk (f32)
                      wc_ref,    # (3*d_h, 32)     fused conv weight, tap-major rows (f32)
                      cb_ref,    # (1, 32)         conv bias (f32)
                      wih_ref,   # (32, 768)       GRU weight_ih_l0^T (bf16)
                      bih_ref,   # (1, 768)        GRU bias_ih_l0 (f32)
                      whh_ref,   # (256, 768)      GRU weight_hh_l0^T (bf16)
                      bhh_ref,   # (1, 768)        GRU bias_hh_l0 (f32)
                      out_ref,   # (TB, 256)       hidden state (carried across chunks)
                      gi_scr,    # scratch (Tc, TB, 768) f32: precomputed input gates
                      *, t_total, t_chunk):
    Tc, TB, K3 = xf_ref.shape
    H = D_HIDDEN
    k = pl.program_id(1)

    # h carry lives in the VMEM-resident output block (same block for every k).
    @pl.when(k == 0)
    def _():
        out_ref[...] = jnp.zeros_like(out_ref)

    # ---- fused spatial conv (Conv1d over time, padding=1) + ReLU (f32) ------
    x2 = xf_ref[...].reshape(Tc * TB, K3)
    conv = jnp.maximum(
        jnp.dot(x2, wc_ref[...], preferred_element_type=jnp.float32)
        + cb_ref[...], 0.0)                                       # (Tc*TB, 32)

    # ---- hoisted GRU input projection (bf16 feed, f32 acc, b_ih folded) -----
    gi = jnp.dot(conv.astype(jnp.bfloat16), wih_ref[...],
                 preferred_element_type=jnp.float32) + bih_ref[...]
    gi_scr[...] = gi.reshape(Tc, TB, 3 * H)                       # lane-dense scratch

    # ---- hoist Whh halves + bias broadcasts out of the recurrence -----------
    whh_rz = whh_ref[:, 0:2 * H]                                  # (256, 512) bf16
    whh_n = whh_ref[:, 2 * H:3 * H]                               # (256, 256) bf16
    bhh_rz = jnp.broadcast_to(bhh_ref[:, 0:2 * H], (TB, 2 * H))
    bhh_n = jnp.broadcast_to(bhh_ref[:, 2 * H:3 * H], (TB, H))

    needs_mask = (t_total % t_chunk) != 0                         # static Python bool

    # ---- temporal GRU recurrence (PyTorch gate order r, z, n) ---------------
    def gru_step(t, h):
        gi_t = gi_scr[t]                                          # (TB, 768) contiguous
        hb = h.astype(jnp.bfloat16)
        # split by gate: r/z depend only on the first 512 lanes, so their EUP
        # work can overlap the n-gate matmul still streaming through the MXU.
        gh_rz = jnp.dot(hb, whh_rz, preferred_element_type=jnp.float32) + bhh_rz
        gh_n = jnp.dot(hb, whh_n, preferred_element_type=jnp.float32) + bhh_n
        r = jax.nn.sigmoid(gi_t[:, 0:H] + gh_rz[:, 0:H])
        z = jax.nn.sigmoid(gi_t[:, H:2 * H] + gh_rz[:, H:2 * H])
        n = jnp.tanh(gi_t[:, 2 * H:3 * H] + r * gh_n)
        h_new = (1.0 - z) * n + z * h
        if needs_mask:                           # only the (padded) last chunk matters
            h_new = jnp.where(k * t_chunk + t < t_total, h_new, h)
        return h_new

    h0 = out_ref[...]
    unroll = True if Tc <= 16 else 8
    out_ref[...] = lax.fori_loop(0, Tc, gru_step, h0, unroll=unroll)


def _vmem_limit_bytes(TB, Tc, d_h):
    f32, bf16 = 4, 2
    xf_b = Tc * TB * 3 * d_h * f32
    w_b = ((KERNEL * d_h * C_OUT + C_OUT) * f32
           + (C_OUT * 3 * D_HIDDEN + D_HIDDEN * 3 * D_HIDDEN) * bf16
           + 2 * 3 * D_HIDDEN * f32)
    gi_b = Tc * TB * 3 * D_HIDDEN * f32
    out_b = TB * D_HIDDEN * f32
    # double-buffered pipeline buffers + gi scratch + proportional headroom
    need = 2 * (xf_b + w_b + out_b) + gi_b + max(2 << 20, gi_b // 2)
    try:
        cap = pltpu.get_tpu_info().vmem_capacity_bytes
    except Exception:
        cap = 64 << 20                       # conservative fallback (v7x per-core)
    return int(min(max(need, 16 << 20), int(cap * 0.9)))


def st_encoder_forward(X, params):
    """X: (b, T, d_h) float32  ->  (b, 256) float32."""
    b, T, d_h = X.shape

    # Batch split only when each block still has >=128 rows (2 TCs on v7x);
    # at small b it is pure sequential overhead on v5e/v6e.
    n_blk = 2 if (b % 16 == 0 and b // 2 >= 128) else 1
    TB = b // n_blk

    # T chunking bounds the gi scratch for long sequences (v7x 64 MiB VMEM).
    Tc = min(T, T_CHUNK)
    n_tc = pl.cdiv(T, Tc)
    T_pad = n_tc * Tc

    # Wrapper-side prep: time-major, zero-pad T, and build the 3-tap fuse here
    # (tiny HBM cost, removes in-kernel lane-axis concats of 6-wide slabs).
    x_tm = jnp.transpose(X, (1, 0, 2))                       # (T, b, d_h)
    xp = jnp.pad(x_tm, ((1, 1), (0, 0), (0, 0)))             # (T+2, b, d_h)
    x_fused = jnp.concatenate(
        [xp[0:T], xp[1:T + 1], xp[2:T + 2]], axis=-1)        # (T, b, 3*d_h)
    if T_pad != T:
        x_fused = jnp.pad(x_fused, ((0, T_pad - T), (0, 0), (0, 0)))

    kernel = functools.partial(st_encoder_kernel, t_total=T, t_chunk=Tc)

    return pl.pallas_call(
        kernel,
        out_shape=jax.ShapeDtypeStruct((b, D_HIDDEN), jnp.float32),
        grid=(n_blk, n_tc),
        in_specs=[
            pl.BlockSpec((Tc, TB, 3 * d_h), lambda i, k: (k, i, 0)),        # x_fused
            pl.BlockSpec((KERNEL * d_h, C_OUT), lambda i, k: (0, 0)),       # wc_fused
            pl.BlockSpec((1, C_OUT), lambda i, k: (0, 0)),                  # cb
            pl.BlockSpec((C_OUT, 3 * D_HIDDEN), lambda i, k: (0, 0)),       # wih_t
            pl.BlockSpec((1, 3 * D_HIDDEN), lambda i, k: (0, 0)),           # bih
            pl.BlockSpec((D_HIDDEN, 3 * D_HIDDEN), lambda i, k: (0, 0)),    # whh_t
            pl.BlockSpec((1, 3 * D_HIDDEN), lambda i, k: (0, 0)),           # bhh
        ],
        out_specs=pl.BlockSpec((TB, D_HIDDEN), lambda i, k: (i, 0)),
        scratch_shapes=[pltpu.VMEM((Tc, TB, 3 * D_HIDDEN), jnp.float32)],
        compiler_params=pltpu.CompilerParams(
            dimension_semantics=("parallel", "arbitrary"),
            vmem_limit_bytes=_vmem_limit_bytes(TB, Tc, d_h)),
    )(x_fused,
      params["wc_fused"], params["cb"],
      params["wih_t"], params["bih"],
      params["whh_t"], params["bhh"])


def init_params(key, d_h):
    """Kaiming-normal weights; small non-zero biases so bias wiring is tested."""
    k1, k2, k3, k4, k5, k6 = jax.random.split(key, 6)

    # Conv1d weight: (C_OUT, d_h, 3); kaiming fan_in = d_h * 3
    std_c = (2.0 / (d_h * KERNEL)) ** 0.5
    w_conv = std_c * jax.random.normal(k1, (C_OUT, d_h, KERNEL), jnp.float32)
    # fused taps: rows tap-major -> wc_fused[k*d_h + c, o] = w_conv[o, c, k]
    wc_fused = jnp.transpose(w_conv, (2, 1, 0)).reshape(KERNEL * d_h, C_OUT)
    b_conv = 0.1 * jax.random.normal(k4, (C_OUT,), jnp.float32)

    # GRU weight_ih_l0: (3*256, 32), fan_in = 32
    std_ih = (2.0 / C_OUT) ** 0.5
    w_ih = std_ih * jax.random.normal(k2, (3 * D_HIDDEN, C_OUT), jnp.float32)
    # GRU weight_hh_l0: (3*256, 256), fan_in = 256
    std_hh = (2.0 / D_HIDDEN) ** 0.5
    w_hh = std_hh * jax.random.normal(k3, (3 * D_HIDDEN, D_HIDDEN), jnp.float32)
    b_ih = 0.1 * jax.random.normal(k5, (3 * D_HIDDEN,), jnp.float32)
    b_hh = 0.1 * jax.random.normal(k6, (3 * D_HIDDEN,), jnp.float32)

    # bf16 weights fed to the MXU (f32 accumulation in-kernel)
    wih_t_bf16 = w_ih.T.astype(jnp.bfloat16)      # (32, 768)
    whh_t_bf16 = w_hh.T.astype(jnp.bfloat16)      # (256, 768)

    return {
        # kernel operands
        "wc_fused": wc_fused,
        "cb": b_conv.reshape(1, C_OUT),
        "wih_t": wih_t_bf16,
        "bih": b_ih.reshape(1, 3 * D_HIDDEN),
        "whh_t": whh_t_bf16,
        "bhh": b_hh.reshape(1, 3 * D_HIDDEN),
        # reference operands: SAME bf16-quantized weights dequantized to f32, so
        # the self-check isolates kernel-side error from weight quantization.
        "w_conv": w_conv, "b_conv": b_conv,
        "w_ih_ref": wih_t_bf16.astype(jnp.float32).T,
        "w_hh_ref": whh_t_bf16.astype(jnp.float32).T,
        "b_ih": b_ih, "b_hh": b_hh,
    }


def st_encoder_reference(X, params):
    """Pure-JAX reference matching PyTorch Conv1d + GRU semantics (f32)."""
    b, T, d_h = X.shape
    H = D_HIDDEN
    w_conv, b_conv = params["w_conv"], params["b_conv"]
    w_ih, w_hh = params["w_ih_ref"], params["w_hh_ref"]
    b_ih, b_hh = params["b_ih"], params["b_hh"]

    # Conv1d(padding=1) over time + bias + ReLU
    Xp = jnp.pad(X, ((0, 0), (1, 1), (0, 0)))
    y = jnp.zeros((b, T, C_OUT), jnp.float32) + b_conv
    for k in range(KERNEL):
        y = y + jnp.einsum("btc,oc->bto", Xp[:, k:k + T, :], w_conv[:, :, k])
    y = jnp.maximum(y, 0.0)

    # GRU (PyTorch gate ordering r, z, n; b_hn stays inside the r* product)
    def step(h, xt):
        gi = xt @ w_ih.T + b_ih
        gh = h @ w_hh.T + b_hh
        r = jax.nn.sigmoid(gi[:, 0:H] + gh[:, 0:H])
        z = jax.nn.sigmoid(gi[:, H:2 * H] + gh[:, H:2 * H])
        n = jnp.tanh(gi[:, 2 * H:3 * H] + r * gh[:, 2 * H:3 * H])
        return (1.0 - z) * n + z * h, None

    h0 = jnp.zeros((b, H), jnp.float32)
    h_final, _ = lax.scan(step, h0, jnp.transpose(y, (1, 0, 2)))
    return h_final


if __name__ == "__main__":
    key = jax.random.PRNGKey(0)
    k_x, k_p = jax.random.split(key)

    # d_h = d_f * 3 with d_f = 2; small shapes consistent with the module.
    b, T, d_h = 16, 8, 6
    X = jax.random.normal(k_x, (b, T, d_h), jnp.float32)
    params = init_params(k_p, d_h)

    out = jax.block_until_ready(st_encoder_forward(X, params))
    ref = jax.block_until_ready(st_encoder_reference(X, params))

    assert out.shape == (b, D_HIDDEN)
    # bf16 weight/activation feed on the MXU (f32 accumulation) -> mixed-precision
    # tolerance; wiring errors would show up as O(0.1..1) mismatches.
    assert jnp.allclose(out, ref, rtol=3e-2, atol=3e-2), "mismatch vs reference"

    print("KERNEL_OK")
</pallas_src>

<mosaic_0001>
module attributes {stable_mosaic.version = 11 : i64} {
  func.func @st_encoder_kernel(%arg0: i32, %arg1: i32, %arg2: memref<8x16x18xf32, #tpu.memory_space<vmem>>, %arg3: memref<18x32xf32, #tpu.memory_space<vmem>>, %arg4: memref<1x32xf32, #tpu.memory_space<vmem>>, %arg5: memref<32x768xbf16, #tpu.memory_space<vmem>>, %arg6: memref<1x768xf32, #tpu.memory_space<vmem>>, %arg7: memref<256x768xbf16, #tpu.memory_space<vmem>>, %arg8: memref<1x768xf32, #tpu.memory_space<vmem>>, %arg9: memref<16x256xf32, #tpu.memory_space<vmem>>, %arg10: memref<8x16x768xf32, #tpu.memory_space<vmem>>) attributes {dimension_semantics = [#tpu.dimension_semantics<parallel>, #tpu.dimension_semantics<arbitrary>], iteration_bounds = array<i64: 1, 1>, scalar_prefetch = 0 : i64, scratch_operands = 1 : i64, tpu.core_type = #tpu.core_type<tc>, window_params = [{transform_indices = @transform_0, window_bounds = array<i64: 8, 16, 18>}, {pipeline_mode = #tpu.pipeline_mode<synchronous>, transform_indices = @transform_1, window_bounds = array<i64: 18, 32>}, {pipeline_mode = #tpu.pipeline_mode<synchronous>, transform_indices = @transform_2, window_bounds = array<i64: 1, 32>}, {pipeline_mode = #tpu.pipeline_mode<synchronous>, transform_indices = @transform_3, window_bounds = array<i64: 32, 768>}, {pipeline_mode = #tpu.pipeline_mode<synchronous>, transform_indices = @transform_4, window_bounds = array<i64: 1, 768>}, {pipeline_mode = #tpu.pipeline_mode<synchronous>, transform_indices = @transform_5, window_bounds = array<i64: 256, 768>}, {pipeline_mode = #tpu.pipeline_mode<synchronous>, transform_indices = @transform_6, window_bounds = array<i64: 1, 768>}, {transform_indices = @transform_7, window_bounds = array<i64: 16, 256>}]} {
    %c0_i32 = arith.constant 0 : i32
    %0 = arith.cmpi eq, %arg1, %c0_i32 : i32
    %1 = arith.extui %0 : i1 to i32
    %c0_i32_0 = arith.constant 0 : i32
    %2 = arith.cmpi ne, %1, %c0_i32_0 : i32
    scf.if %2 {
      %cst_84 = arith.constant 0.000000e+00 : f32
      %294 = vector.broadcast %cst_84 : f32 to vector<16x256xf32>
      %c0_85 = arith.constant 0 : index
      %c0_86 = arith.constant 0 : index
      %295 = vector.load %arg9[%c0_85, %c0_86] : memref<16x256xf32, #tpu.memory_space<vmem>>, vector<16x256xf32>
      tpu.vector_store %arg9[%c0_85, %c0_86], %294 {strides = array<i32>} : memref<16x256xf32, #tpu.memory_space<vmem>>, vector<16x256xf32>,
    } else {
    }
    %c0 = arith.constant 0 : index
    %c0_1 = arith.constant 0 : index
    %c0_2 = arith.constant 0 : index
    %3 = vector.load %arg2[%c0, %c0_1, %c0_2] : memref<8x16x18xf32, #tpu.memory_space<vmem>>, vector<8x16x18xf32>
    %4 = vector.shape_cast %3 : vector<8x16x18xf32> to vector<128x18xf32>
    %c0_3 = arith.constant 0 : index
    %c0_4 = arith.constant 0 : index
    %5 = vector.load %arg3[%c0_3, %c0_4] : memref<18x32xf32, #tpu.memory_space<vmem>>, vector<18x32xf32>
    %cst = arith.constant dense<0.000000e+00> : vector<128x32xf32>
    %6 = tpu.matmul %4, %5, %cst {dimension_numbers = #tpu.dot_dimension_numbers<[1], [0], [0], [1], [0, 0, 1, 1], [], []>} : vector<128x18xf32>, vector<18x32xf32>, vector<128x32xf32> -> vector<128x32xf32>
    %c0_5 = arith.constant 0 : index
    %c0_6 = arith.constant 0 : index
    %7 = vector.load %arg4[%c0_5, %c0_6] : memref<1x32xf32, #tpu.memory_space<vmem>>, vector<1x32xf32>
    %8 = vector.broadcast %7 : vector<1x32xf32> to vector<128x32xf32>
    %9 = arith.addf %6, %8 : vector<128x32xf32>
    %cst_7 = arith.constant 0.000000e+00 : f32
    %10 = vector.broadcast %cst_7 : f32 to vector<128x32xf32>
    %11 = arith.maximumf %9, %10 : vector<128x32xf32>
    %12 = arith.truncf %11 : vector<128x32xf32> to vector<128x32xbf16>
    %c0_8 = arith.constant 0 : index
    %c0_9 = arith.constant 0 : index
    %13 = vector.load %arg5[%c0_8, %c0_9] : memref<32x768xbf16, #tpu.memory_space<vmem>>, vector<32x768xbf16>
    %cst_10 = arith.constant dense<0.000000e+00> : vector<128x768xf32>
    %14 = tpu.matmul %12, %13, %cst_10 {dimension_numbers = #tpu.dot_dimension_numbers<[1], [0], [0], [1], [0, 0, 1, 1], [], []>} : vector<128x32xbf16>, vector<32x768xbf16>, vector<128x768xf32> -> vector<128x768xf32>
    %c0_11 = arith.constant 0 : index
    %c0_12 = arith.constant 0 : index
    %15 = vector.load %arg6[%c0_11, %c0_12] : memref<1x768xf32, #tpu.memory_space<vmem>>, vector<1x768xf32>
    %16 = vector.broadcast %15 : vector<1x768xf32> to vector<128x768xf32>
    %17 = arith.addf %14, %16 : vector<128x768xf32>
    %18 = vector.shape_cast %17 : vector<128x768xf32> to vector<8x16x768xf32>
    %c0_13 = arith.constant 0 : index
    %c0_14 = arith.constant 0 : index
    %c0_15 = arith.constant 0 : index
    %19 = vector.load %arg10[%c0_13, %c0_14, %c0_15] : memref<8x16x768xf32, #tpu.memory_space<vmem>>, vector<8x16x768xf32>
    tpu.vector_store %arg10[%c0_13, %c0_14, %c0_15], %18 {strides = array<i32>} : memref<8x16x768xf32, #tpu.memory_space<vmem>>, vector<8x16x768xf32>,
    %c0_16 = arith.constant 0 : index
    %c0_17 = arith.constant 0 : index
    %20 = vector.load %arg7[%c0_16, %c0_17] : memref<256x768xbf16, #tpu.memory_space<vmem>>, vector<256x512xbf16>
    %c0_18 = arith.constant 0 : index
    %c512 = arith.constant 512 : index
    %21 = vector.load %arg7[%c0_18, %c512] : memref<256x768xbf16, #tpu.memory_space<vmem>>, vector<256x256xbf16>
    %c0_19 = arith.constant 0 : index
    %c0_20 = arith.constant 0 : index
    %22 = vector.load %arg8[%c0_19, %c0_20] : memref<1x768xf32, #tpu.memory_space<vmem>>, vector<1x512xf32>
    %23 = vector.shape_cast %22 : vector<1x512xf32> to vector<1x512xf32>
    %24 = vector.broadcast %23 : vector<1x512xf32> to vector<16x512xf32>
    %c0_21 = arith.constant 0 : index
    %c512_22 = arith.constant 512 : index
    %25 = vector.load %arg8[%c0_21, %c512_22] : memref<1x768xf32, #tpu.memory_space<vmem>>, vector<1x256xf32>
    %26 = vector.shape_cast %25 : vector<1x256xf32> to vector<1x256xf32>
    %27 = vector.broadcast %26 : vector<1x256xf32> to vector<16x256xf32>
    %c0_23 = arith.constant 0 : index
    %c0_24 = arith.constant 0 : index
    %28 = vector.load %arg9[%c0_23, %c0_24] : memref<16x256xf32, #tpu.memory_space<vmem>>, vector<16x256xf32>
    %c0_i32_25 = arith.constant 0 : i32
    %29 = arith.index_cast %c0_i32_25 : i32 to index
    %c0_26 = arith.constant 0 : index
    %c0_27 = arith.constant 0 : index
    %30 = vector.load %arg10[%29, %c0_26, %c0_27] : memref<8x16x768xf32, #tpu.memory_space<vmem>>, vector<1x16x768xf32>
    %31 = vector.shape_cast %30 : vector<1x16x768xf32> to vector<16x768xf32>
    %32 = arith.truncf %28 : vector<16x256xf32> to vector<16x256xbf16>
    %cst_28 = arith.constant dense<0.000000e+00> : vector<16x512xf32>
    %33 = tpu.matmul %32, %20, %cst_28 {dimension_numbers = #tpu.dot_dimension_numbers<[1], [0], [0], [1], [0, 0, 1, 1], [], []>} : vector<16x256xbf16>, vector<256x512xbf16>, vector<16x512xf32> -> vector<16x512xf32>
    %34 = arith.addf %33, %24 : vector<16x512xf32>
    %cst_29 = arith.constant dense<0.000000e+00> : vector<16x256xf32>
    %35 = tpu.matmul %32, %21, %cst_29 {dimension_numbers = #tpu.dot_dimension_numbers<[1], [0], [0], [1], [0, 0, 1, 1], [], []>} : vector<16x256xbf16>, vector<256x256xbf16>, vector<16x256xf32> -> vector<16x256xf32>
    %36 = arith.addf %35, %27 : vector<16x256xf32>
    %37 = vector.extract_strided_slice %31 {offsets = [0, 0], sizes = [16, 256], strides = [1, 1]} : vector<16x768xf32> to vector<16x256xf32>
    %38 = vector.extract_strided_slice %34 {offsets = [0, 0], sizes = [16, 256], strides = [1, 1]} : vector<16x512xf32> to vector<16x256xf32>
    %39 = arith.addf %37, %38 : vector<16x256xf32>
    %40 = arith.negf %39 : vector<16x256xf32>
    %41 = math.exp %40 : vector<16x256xf32>
    %cst_30 = arith.constant 1.000000e+00 : f32
    %42 = vector.broadcast %cst_30 : f32 to vector<16x256xf32>
    %43 = arith.addf %42, %41 : vector<16x256xf32>
    %44 = arith.divf %42, %43 : vector<16x256xf32>
    %45 = vector.extract_strided_slice %31 {offsets = [0, 256], sizes = [16, 256], strides = [1, 1]} : vector<16x768xf32> to vector<16x256xf32>
    %46 = vector.extract_strided_slice %34 {offsets = [0, 256], sizes = [16, 256], strides = [1, 1]} : vector<16x512xf32> to vector<16x256xf32>
    %47 = arith.addf %45, %46 : vector<16x256xf32>
    %48 = arith.negf %47 : vector<16x256xf32>
    %49 = math.exp %48 : vector<16x256xf32>
    %cst_31 = arith.constant 1.000000e+00 : f32
    %50 = vector.broadcast %cst_31 : f32 to vector<16x256xf32>
    %51 = arith.addf %50, %49 : vector<16x256xf32>
    %52 = arith.divf %50, %51 : vector<16x256xf32>
    %53 = vector.extract_strided_slice %31 {offsets = [0, 512], sizes = [16, 256], strides = [1, 1]} : vector<16x768xf32> to vector<16x256xf32>
    %54 = arith.mulf %44, %36 : vector<16x256xf32>
    %55 = arith.addf %53, %54 : vector<16x256xf32>
    %56 = math.tanh %55 : vector<16x256xf32>
    %cst_32 = arith.constant 1.000000e+00 : f32
    %57 = vector.broadcast %cst_32 : f32 to vector<16x256xf32>
    %58 = arith.subf %57, %52 : vector<16x256xf32>
    %59 = arith.mulf %58, %56 : vector<16x256xf32>
    %60 = arith.mulf %52, %28 : vector<16x256xf32>
    %61 = arith.addf %59, %60 : vector<16x256xf32>
    %c1_i32 = arith.constant 1 : i32
    %62 = arith.index_cast %c1_i32 : i32 to index
    %c0_33 = arith.constant 0 : index
    %c0_34 = arith.constant 0 : index
    %63 = vector.load %arg10[%62, %c0_33, %c0_34] : memref<8x16x768xf32, #tpu.memory_space<vmem>>, vector<1x16x768xf32>
    %64 = vector.shape_cast %63 : vector<1x16x768xf32> to vector<16x768xf32>
    %65 = arith.truncf %61 : vector<16x256xf32> to vector<16x256xbf16>
    %cst_35 = arith.constant dense<0.000000e+00> : vector<16x512xf32>
    %66 = tpu.matmul %65, %20, %cst_35 {dimension_numbers = #tpu.dot_dimension_numbers<[1], [0], [0], [1], [0, 0, 1, 1], [], []>} : vector<16x256xbf16>, vector<256x512xbf16>, vector<16x512xf32> -> vector<16x512xf32>
    %67 = arith.addf %66, %24 : vector<16x512xf32>
    %cst_36 = arith.constant dense<0.000000e+00> : vector<16x256xf32>
    %68 = tpu.matmul %65, %21, %cst_36 {dimension_numbers = #tpu.dot_dimension_numbers<[1], [0], [0], [1], [0, 0, 1, 1], [], []>} : vector<16x256xbf16>, vector<256x256xbf16>, vector<16x256xf32> -> vector<16x256xf32>
    %69 = arith.addf %68, %27 : vector<16x256xf32>
    %70 = vector.extract_strided_slice %64 {offsets = [0, 0], sizes = [16, 256], strides = [1, 1]} : vector<16x768xf32> to vector<16x256xf32>
    %71 = vector.extract_strided_slice %67 {offsets = [0, 0], sizes = [16, 256], strides = [1, 1]} : vector<16x512xf32> to vector<16x256xf32>
    %72 = arith.addf %70, %71 : vector<16x256xf32>
    %73 = arith.negf %72 : vector<16x256xf32>
    %74 = math.exp %73 : vector<16x256xf32>
    %cst_37 = arith.constant 1.000000e+00 : f32
    %75 = vector.broadcast %cst_37 : f32 to vector<16x256xf32>
    %76 = arith.addf %75, %74 : vector<16x256xf32>
    %77 = arith.divf %75, %76 : vector<16x256xf32>
    %78 = vector.extract_strided_slice %64 {offsets = [0, 256], sizes = [16, 256], strides = [1, 1]} : vector<16x768xf32> to vector<16x256xf32>
    %79 = vector.extract_strided_slice %67 {offsets = [0, 256], sizes = [16, 256], strides = [1, 1]} : vector<16x512xf32> to vector<16x256xf32>
    %80 = arith.addf %78, %79 : vector<16x256xf32>
    %81 = arith.negf %80 : vector<16x256xf32>
    %82 = math.exp %81 : vector<16x256xf32>
    %cst_38 = arith.constant 1.000000e+00 : f32
    %83 = vector.broadcast %cst_38 : f32 to vector<16x256xf32>
    %84 = arith.addf %83, %82 : vector<16x256xf32>
    %85 = arith.divf %83, %84 : vector<16x256xf32>
    %86 = vector.extract_strided_slice %64 {offsets = [0, 512], sizes = [16, 256], strides = [1, 1]} : vector<16x768xf32> to vector<16x256xf32>
    %87 = arith.mulf %77, %69 : vector<16x256xf32>
    %88 = arith.addf %86, %87 : vector<16x256xf32>
    %89 = math.tanh %88 : vector<16x256xf32>
    %cst_39 = arith.constant 1.000000e+00 : f32
    %90 = vector.broadcast %cst_39 : f32 to vector<16x256xf32>
    %91 = arith.subf %90, %85 : vector<16x256xf32>
    %92 = arith.mulf %91, %89 : vector<16x256xf32>
    %93 = arith.mulf %85, %61 : vector<16x256xf32>
    %94 = arith.addf %92, %93 : vector<16x256xf32>
    %c2_i32 = arith.constant 2 : i32
    %95 = arith.index_cast %c2_i32 : i32 to index
    %c0_40 = arith.constant 0 : index
    %c0_41 = arith.constant 0 : index
    %96 = vector.load %arg10[%95, %c0_40, %c0_41] : memref<8x16x768xf32, #tpu.memory_space<vmem>>, vector<1x16x768xf32>
    %97 = vector.shape_cast %96 : vector<1x16x768xf32> to vector<16x768xf32>
    %98 = arith.truncf %94 : vector<16x256xf32> to vector<16x256xbf16>
    %cst_42 = arith.constant dense<0.000000e+00> : vector<16x512xf32>
    %99 = tpu.matmul %98, %20, %cst_42 {dimension_numbers = #tpu.dot_dimension_numbers<[1], [0], [0], [1], [0, 0, 1, 1], [], []>} : vector<16x256xbf16>, vector<256x512xbf16>, vector<16x512xf32> -> vector<16x512xf32>
    %100 = arith.addf %99, %24 : vector<16x512xf32>
    %cst_43 = arith.constant dense<0.000000e+00> : vector<16x256xf32>
    %101 = tpu.matmul %98, %21, %cst_43 {dimension_numbers = #tpu.dot_dimension_numbers<[1], [0], [0], [1], [0, 0, 1, 1], [], []>} : vector<16x256xbf16>, vector<256x256xbf16>, vector<16x256xf32> -> vector<16x256xf32>
    %102 = arith.addf %101, %27 : vector<16x256xf32>
    %103 = vector.extract_strided_slice %97 {offsets = [0, 0], sizes = [16, 256], strides = [1, 1]} : vector<16x768xf32> to vector<16x256xf32>
    %104 = vector.extract_strided_slice %100 {offsets = [0, 0], sizes = [16, 256], strides = [1, 1]} : vector<16x512xf32> to vector<16x256xf32>
    %105 = arith.addf %103, %104 : vector<16x256xf32>
    %106 = arith.negf %105 : vector<16x256xf32>
    %107 = math.exp %106 : vector<16x256xf32>
    %cst_44 = arith.constant 1.000000e+00 : f32
    %108 = vector.broadcast %cst_44 : f32 to vector<16x256xf32>
    %109 = arith.addf %108, %107 : vector<16x256xf32>
    %110 = arith.divf %108, %109 : vector<16x256xf32>
    %111 = vector.extract_strided_slice %97 {offsets = [0, 256], sizes = [16, 256], strides = [1, 1]} : vector<16x768xf32> to vector<16x256xf32>
    %112 = vector.extract_strided_slice %100 {offsets = [0, 256], sizes = [16, 256], strides = [1, 1]} : vector<16x512xf32> to vector<16x256xf32>
    %113 = arith.addf %111, %112 : vector<16x256xf32>
    %114 = arith.negf %113 : vector<16x256xf32>
    %115 = math.exp %114 : vector<16x256xf32>
    %cst_45 = arith.constant 1.000000e+00 : f32
    %116 = vector.broadcast %cst_45 : f32 to vector<16x256xf32>
    %117 = arith.addf %116, %115 : vector<16x256xf32>
    %118 = arith.divf %116, %117 : vector<16x256xf32>
    %119 = vector.extract_strided_slice %97 {offsets = [0, 512], sizes = [16, 256], strides = [1, 1]} : vector<16x768xf32> to vector<16x256xf32>
    %120 = arith.mulf %110, %102 : vector<16x256xf32>
    %121 = arith.addf %119, %120 : vector<16x256xf32>
    %122 = math.tanh %121 : vector<16x256xf32>
    %cst_46 = arith.constant 1.000000e+00 : f32
    %123 = vector.broadcast %cst_46 : f32 to vector<16x256xf32>
    %124 = arith.subf %123, %118 : vector<16x256xf32>
    %125 = arith.mulf %124, %122 : vector<16x256xf32>
    %126 = arith.mulf %118, %94 : vector<16x256xf32>
    %127 = arith.addf %125, %126 : vector<16x256xf32>
    %c3_i32 = arith.constant 3 : i32
    %128 = arith.index_cast %c3_i32 : i32 to index
    %c0_47 = arith.constant 0 : index
    %c0_48 = arith.constant 0 : index
    %129 = vector.load %arg10[%128, %c0_47, %c0_48] : memref<8x16x768xf32, #tpu.memory_space<vmem>>, vector<1x16x768xf32>
    %130 = vector.shape_cast %129 : vector<1x16x768xf32> to vector<16x768xf32>
    %131 = arith.truncf %127 : vector<16x256xf32> to vector<16x256xbf16>
    %cst_49 = arith.constant dense<0.000000e+00> : vector<16x512xf32>
    %132 = tpu.matmul %131, %20, %cst_49 {dimension_numbers = #tpu.dot_dimension_numbers<[1], [0], [0], [1], [0, 0, 1, 1], [], []>} : vector<16x256xbf16>, vector<256x512xbf16>, vector<16x512xf32> -> vector<16x512xf32>
    %133 = arith.addf %132, %24 : vector<16x512xf32>
    %cst_50 = arith.constant dense<0.000000e+00> : vector<16x256xf32>
    %134 = tpu.matmul %131, %21, %cst_50 {dimension_numbers = #tpu.dot_dimension_numbers<[1], [0], [0], [1], [0, 0, 1, 1], [], []>} : vector<16x256xbf16>, vector<256x256xbf16>, vector<16x256xf32> -> vector<16x256xf32>
    %135 = arith.addf %134, %27 : vector<16x256xf32>
    %136 = vector.extract_strided_slice %130 {offsets = [0, 0], sizes = [16, 256], strides = [1, 1]} : vector<16x768xf32> to vector<16x256xf32>
    %137 = vector.extract_strided_slice %133 {offsets = [0, 0], sizes = [16, 256], strides = [1, 1]} : vector<16x512xf32> to vector<16x256xf32>
    %138 = arith.addf %136, %137 : vector<16x256xf32>
    %139 = arith.negf %138 : vector<16x256xf32>
    %140 = math.exp %139 : vector<16x256xf32>
    %cst_51 = arith.constant 1.000000e+00 : f32
    %141 = vector.broadcast %cst_51 : f32 to vector<16x256xf32>
    %142 = arith.addf %141, %140 : vector<16x256xf32>
    %143 = arith.divf %141, %142 : vector<16x256xf32>
    %144 = vector.extract_strided_slice %130 {offsets = [0, 256], sizes = [16, 256], strides = [1, 1]} : vector<16x768xf32> to vector<16x256xf32>
    %145 = vector.extract_strided_slice %133 {offsets = [0, 256], sizes = [16, 256], strides = [1, 1]} : vector<16x512xf32> to vector<16x256xf32>
    %146 = arith.addf %144, %145 : vector<16x256xf32>
    %147 = arith.negf %146 : vector<16x256xf32>
    %148 = math.exp %147 : vector<16x256xf32>
    %cst_52 = arith.constant 1.000000e+00 : f32
    %149 = vector.broadcast %cst_52 : f32 to vector<16x256xf32>
    %150 = arith.addf %149, %148 : vector<16x256xf32>
    %151 = arith.divf %149, %150 : vector<16x256xf32>
    %152 = vector.extract_strided_slice %130 {offsets = [0, 512], sizes = [16, 256], strides = [1, 1]} : vector<16x768xf32> to vector<16x256xf32>
    %153 = arith.mulf %143, %135 : vector<16x256xf32>
    %154 = arith.addf %152, %153 : vector<16x256xf32>
    %155 = math.tanh %154 : vector<16x256xf32>
    %cst_53 = arith.constant 1.000000e+00 : f32
    %156 = vector.broadcast %cst_53 : f32 to vector<16x256xf32>
    %157 = arith.subf %156, %151 : vector<16x256xf32>
    %158 = arith.mulf %157, %155 : vector<16x256xf32>
    %159 = arith.mulf %151, %127 : vector<16x256xf32>
    %160 = arith.addf %158, %159 : vector<16x256xf32>
    %c4_i32 = arith.constant 4 : i32
    %161 = arith.index_cast %c4_i32 : i32 to index
    %c0_54 = arith.constant 0 : index
    %c0_55 = arith.constant 0 : index
    %162 = vector.load %arg10[%161, %c0_54, %c0_55] : memref<8x16x768xf32, #tpu.memory_space<vmem>>, vector<1x16x768xf32>
    %163 = vector.shape_cast %162 : vector<1x16x768xf32> to vector<16x768xf32>
    %164 = arith.truncf %160 : vector<16x256xf32> to vector<16x256xbf16>
    %cst_56 = arith.constant dense<0.000000e+00> : vector<16x512xf32>
    %165 = tpu.matmul %164, %20, %cst_56 {dimension_numbers = #tpu.dot_dimension_numbers<[1], [0], [0], [1], [0, 0, 1, 1], [], []>} : vector<16x256xbf16>, vector<256x512xbf16>, vector<16x512xf32> -> vector<16x512xf32>
    %166 = arith.addf %165, %24 : vector<16x512xf32>
    %cst_57 = arith.constant dense<0.000000e+00> : vector<16x256xf32>
    %167 = tpu.matmul %164, %21, %cst_57 {dimension_numbers = #tpu.dot_dimension_numbers<[1], [0], [0], [1], [0, 0, 1, 1], [], []>} : vector<16x256xbf16>, vector<256x256xbf16>, vector<16x256xf32> -> vector<16x256xf32>
    %168 = arith.addf %167, %27 : vector<16x256xf32>
    %169 = vector.extract_strided_slice %163 {offsets = [0, 0], sizes = [16, 256], strides = [1, 1]} : vector<16x768xf32> to vector<16x256xf32>
    %170 = vector.extract_strided_slice %166 {offsets = [0, 0], sizes = [16, 256], strides = [1, 1]} : vector<16x512xf32> to vector<16x256xf32>
    %171 = arith.addf %169, %170 : vector<16x256xf32>
    %172 = arith.negf %171 : vector<16x256xf32>
    %173 = math.exp %172 : vector<16x256xf32>
    %cst_58 = arith.constant 1.000000e+00 : f32
    %174 = vector.broadcast %cst_58 : f32 to vector<16x256xf32>
    %175 = arith.addf %174, %173 : vector<16x256xf32>
    %176 = arith.divf %174, %175 : vector<16x256xf32>
    %177 = vector.extract_strided_slice %163 {offsets = [0, 256], sizes = [16, 256], strides = [1, 1]} : vector<16x768xf32> to vector<16x256xf32>
    %178 = vector.extract_strided_slice %166 {offsets = [0, 256], sizes = [16, 256], strides = [1, 1]} : vector<16x512xf32> to vector<16x256xf32>
    %179 = arith.addf %177, %178 : vector<16x256xf32>
    %180 = arith.negf %179 : vector<16x256xf32>
    %181 = math.exp %180 : vector<16x256xf32>
    %cst_59 = arith.constant 1.000000e+00 : f32
    %182 = vector.broadcast %cst_59 : f32 to vector<16x256xf32>
    %183 = arith.addf %182, %181 : vector<16x256xf32>
    %184 = arith.divf %182, %183 : vector<16x256xf32>
    %185 = vector.extract_strided_slice %163 {offsets = [0, 512], sizes = [16, 256], strides = [1, 1]} : vector<16x768xf32> to vector<16x256xf32>
    %186 = arith.mulf %176, %168 : vector<16x256xf32>
    %187 = arith.addf %185, %186 : vector<16x256xf32>
    %188 = math.tanh %187 : vector<16x256xf32>
    %cst_60 = arith.constant 1.000000e+00 : f32
    %189 = vector.broadcast %cst_60 : f32 to vector<16x256xf32>
    %190 = arith.subf %189, %184 : vector<16x256xf32>
    %191 = arith.mulf %190, %188 : vector<16x256xf32>
    %192 = arith.mulf %184, %160 : vector<16x256xf32>
    %193 = arith.addf %191, %192 : vector<16x256xf32>
    %c5_i32 = arith.constant 5 : i32
    %194 = arith.index_cast %c5_i32 : i32 to index
    %c0_61 = arith.constant 0 : index
    %c0_62 = arith.constant 0 : index
    %195 = vector.load %arg10[%194, %c0_61, %c0_62] : memref<8x16x768xf32, #tpu.memory_space<vmem>>, vector<1x16x768xf32>
    %196 = vector.shape_cast %195 : vector<1x16x768xf32> to vector<16x768xf32>
    %197 = arith.truncf %193 : vector<16x256xf32> to vector<16x256xbf16>
    %cst_63 = arith.constant dense<0.000000e+00> : vector<16x512xf32>
    %198 = tpu.matmul %197, %20, %cst_63 {dimension_numbers = #tpu.dot_dimension_numbers<[1], [0], [0], [1], [0, 0, 1, 1], [], []>} : vector<16x256xbf16>, vector<256x512xbf16>, vector<16x512xf32> -> vector<16x512xf32>
    %199 = arith.addf %198, %24 : vector<16x512xf32>
    %cst_64 = arith.constant dense<0.000000e+00> : vector<16x256xf32>
    %200 = tpu.matmul %197, %21, %cst_64 {dimension_numbers = #tpu.dot_dimension_numbers<[1], [0], [0], [1], [0, 0, 1, 1], [], []>} : vector<16x256xbf16>, vector<256x256xbf16>, vector<16x256xf32> -> vector<16x256xf32>
    %201 = arith.addf %200, %27 : vector<16x256xf32>
    %202 = vector.extract_strided_slice %196 {offsets = [0, 0], sizes = [16, 256], strides = [1, 1]} : vector<16x768xf32> to vector<16x256xf32>
    %203 = vector.extract_strided_slice %199 {offsets = [0, 0], sizes = [16, 256], strides = [1, 1]} : vector<16x512xf32> to vector<16x256xf32>
    %204 = arith.addf %202, %203 : vector<16x256xf32>
    %205 = arith.negf %204 : vector<16x256xf32>
    %206 = math.exp %205 : vector<16x256xf32>
    %cst_65 = arith.constant 1.000000e+00 : f32
    %207 = vector.broadcast %cst_65 : f32 to vector<16x256xf32>
    %208 = arith.addf %207, %206 : vector<16x256xf32>
    %209 = arith.divf %207, %208 : vector<16x256xf32>
    %210 = vector.extract_strided_slice %196 {offsets = [0, 256], sizes = [16, 256], strides = [1, 1]} : vector<16x768xf32> to vector<16x256xf32>
    %211 = vector.extract_strided_slice %199 {offsets = [0, 256], sizes = [16, 256], strides = [1, 1]} : vector<16x512xf32> to vector<16x256xf32>
    %212 = arith.addf %210, %211 : vector<16x256xf32>
    %213 = arith.negf %212 : vector<16x256xf32>
    %214 = math.exp %213 : vector<16x256xf32>
    %cst_66 = arith.constant 1.000000e+00 : f32
    %215 = vector.broadcast %cst_66 : f32 to vector<16x256xf32>
    %216 = arith.addf %215, %214 : vector<16x256xf32>
    %217 = arith.divf %215, %216 : vector<16x256xf32>
    %218 = vector.extract_strided_slice %196 {offsets = [0, 512], sizes = [16, 256], strides = [1, 1]} : vector<16x768xf32> to vector<16x256xf32>
    %219 = arith.mulf %209, %201 : vector<16x256xf32>
    %220 = arith.addf %218, %219 : vector<16x256xf32>
    %221 = math.tanh %220 : vector<16x256xf32>
    %cst_67 = arith.constant 1.000000e+00 : f32
    %222 = vector.broadcast %cst_67 : f32 to vector<16x256xf32>
    %223 = arith.subf %222, %217 : vector<16x256xf32>
    %224 = arith.mulf %223, %221 : vector<16x256xf32>
    %225 = arith.mulf %217, %193 : vector<16x256xf32>
    %226 = arith.addf %224, %225 : vector<16x256xf32>
    %c6_i32 = arith.constant 6 : i32
    %227 = arith.index_cast %c6_i32 : i32 to index
    %c0_68 = arith.constant 0 : index
    %c0_69 = arith.constant 0 : index
    %228 = vector.load %arg10[%227, %c0_68, %c0_69] : memref<8x16x768xf32, #tpu.memory_space<vmem>>, vector<1x16x768xf32>
    %229 = vector.shape_cast %228 : vector<1x16x768xf32> to vector<16x768xf32>
    %230 = arith.truncf %226 : vector<16x256xf32> to vector<16x256xbf16>
    %cst_70 = arith.constant dense<0.000000e+00> : vector<16x512xf32>
    %231 = tpu.matmul %230, %20, %cst_70 {dimension_numbers = #tpu.dot_dimension_numbers<[1], [0], [0], [1], [0, 0, 1, 1], [], []>} : vector<16x256xbf16>, vector<256x512xbf16>, vector<16x512xf32> -> vector<16x512xf32>
    %232 = arith.addf %231, %24 : vector<16x512xf32>
    %cst_71 = arith.constant dense<0.000000e+00> : vector<16x256xf32>
    %233 = tpu.matmul %230, %21, %cst_71 {dimension_numbers = #tpu.dot_dimension_numbers<[1], [0], [0], [1], [0, 0, 1, 1], [], []>} : vector<16x256xbf16>, vector<256x256xbf16>, vector<16x256xf32> -> vector<16x256xf32>
    %234 = arith.addf %233, %27 : vector<16x256xf32>
    %235 = vector.extract_strided_slice %229 {offsets = [0, 0], sizes = [16, 256], strides = [1, 1]} : vector<16x768xf32> to vector<16x256xf32>
    %236 = vector.extract_strided_slice %232 {offsets = [0, 0], sizes = [16, 256], strides = [1, 1]} : vector<16x512xf32> to vector<16x256xf32>
    %237 = arith.addf %235, %236 : vector<16x256xf32>
    %238 = arith.negf %237 : vector<16x256xf32>
    %239 = math.exp %238 : vector<16x256xf32>
    %cst_72 = arith.constant 1.000000e+00 : f32
    %240 = vector.broadcast %cst_72 : f32 to vector<16x256xf32>
    %241 = arith.addf %240, %239 : vector<16x256xf32>
    %242 = arith.divf %240, %241 : vector<16x256xf32>
    %243 = vector.extract_strided_slice %229 {offsets = [0, 256], sizes = [16, 256], strides = [1, 1]} : vector<16x768xf32> to vector<16x256xf32>
    %244 = vector.extract_strided_slice %232 {offsets = [0, 256], sizes = [16, 256], strides = [1, 1]} : vector<16x512xf32> to vector<16x256xf32>
    %245 = arith.addf %243, %244 : vector<16x256xf32>
    %246 = arith.negf %245 : vector<16x256xf32>
    %247 = math.exp %246 : vector<16x256xf32>
    %cst_73 = arith.constant 1.000000e+00 : f32
    %248 = vector.broadcast %cst_73 : f32 to vector<16x256xf32>
    %249 = arith.addf %248, %247 : vector<16x256xf32>
    %250 = arith.divf %248, %249 : vector<16x256xf32>
    %251 = vector.extract_strided_slice %229 {offsets = [0, 512], sizes = [16, 256], strides = [1, 1]} : vector<16x768xf32> to vector<16x256xf32>
    %252 = arith.mulf %242, %234 : vector<16x256xf32>
    %253 = arith.addf %251, %252 : vector<16x256xf32>
    %254 = math.tanh %253 : vector<16x256xf32>
    %cst_74 = arith.constant 1.000000e+00 : f32
    %255 = vector.broadcast %cst_74 : f32 to vector<16x256xf32>
    %256 = arith.subf %255, %250 : vector<16x256xf32>
    %257 = arith.mulf %256, %254 : vector<16x256xf32>
    %258 = arith.mulf %250, %226 : vector<16x256xf32>
    %259 = arith.addf %257, %258 : vector<16x256xf32>
    %c7_i32 = arith.constant 7 : i32
    %260 = arith.index_cast %c7_i32 : i32 to index
    %c0_75 = arith.constant 0 : index
    %c0_76 = arith.constant 0 : index
    %261 = vector.load %arg10[%260, %c0_75, %c0_76] : memref<8x16x768xf32, #tpu.memory_space<vmem>>, vector<1x16x768xf32>
    %262 = vector.shape_cast %261 : vector<1x16x768xf32> to vector<16x768xf32>
    %263 = arith.truncf %259 : vector<16x256xf32> to vector<16x256xbf16>
    %cst_77 = arith.constant dense<0.000000e+00> : vector<16x512xf32>
    %264 = tpu.matmul %263, %20, %cst_77 {dimension_numbers = #tpu.dot_dimension_numbers<[1], [0], [0], [1], [0, 0, 1, 1], [], []>} : vector<16x256xbf16>, vector<256x512xbf16>, vector<16x512xf32> -> vector<16x512xf32>
    %265 = arith.addf %264, %24 : vector<16x512xf32>
    %cst_78 = arith.constant dense<0.000000e+00> : vector<16x256xf32>
    %266 = tpu.matmul %263, %21, %cst_78 {dimension_numbers = #tpu.dot_dimension_numbers<[1], [0], [0], [1], [0, 0, 1, 1], [], []>} : vector<16x256xbf16>, vector<256x256xbf16>, vector<16x256xf32> -> vector<16x256xf32>
    %267 = arith.addf %266, %27 : vector<16x256xf32>
    %268 = vector.extract_strided_slice %262 {offsets = [0, 0], sizes = [16, 256], strides = [1, 1]} : vector<16x768xf32> to vector<16x256xf32>
    %269 = vector.extract_strided_slice %265 {offsets = [0, 0], sizes = [16, 256], strides = [1, 1]} : vector<16x512xf32> to vector<16x256xf32>
    %270 = arith.addf %268, %269 : vector<16x256xf32>
    %271 = arith.negf %270 : vector<16x256xf32>
    %272 = math.exp %271 : vector<16x256xf32>
    %cst_79 = arith.constant 1.000000e+00 : f32
    %273 = vector.broadcast %cst_79 : f32 to vector<16x256xf32>
    %274 = arith.addf %273, %272 : vector<16x256xf32>
    %275 = arith.divf %273, %274 : vector<16x256xf32>
    %276 = vector.extract_strided_slice %262 {offsets = [0, 256], sizes = [16, 256], strides = [1, 1]} : vector<16x768xf32> to vector<16x256xf32>
    %277 = vector.extract_strided_slice %265 {offsets = [0, 256], sizes = [16, 256], strides = [1, 1]} : vector<16x512xf32> to vector<16x256xf32>
    %278 = arith.addf %276, %277 : vector<16x256xf32>
    %279 = arith.negf %278 : vector<16x256xf32>
    %280 = math.exp %279 : vector<16x256xf32>
    %cst_80 = arith.constant 1.000000e+00 : f32
    %281 = vector.broadcast %cst_80 : f32 to vector<16x256xf32>
    %282 = arith.addf %281, %280 : vector<16x256xf32>
    %283 = arith.divf %281, %282 : vector<16x256xf32>
    %284 = vector.extract_strided_slice %262 {offsets = [0, 512], sizes = [16, 256], strides = [1, 1]} : vector<16x768xf32> to vector<16x256xf32>
    %285 = arith.mulf %275, %267 : vector<16x256xf32>
    %286 = arith.addf %284, %285 : vector<16x256xf32>
    %287 = math.tanh %286 : vector<16x256xf32>
    %cst_81 = arith.constant 1.000000e+00 : f32
    %288 = vector.broadcast %cst_81 : f32 to vector<16x256xf32>
    %289 = arith.subf %288, %283 : vector<16x256xf32>
    %290 = arith.mulf %289, %287 : vector<16x256xf32>
    %291 = arith.mulf %283, %259 : vector<16x256xf32>
    %292 = arith.addf %290, %291 : vector<16x256xf32>
    %c8_i32 = arith.constant 8 : i32
    %c0_82 = arith.constant 0 : index
    %c0_83 = arith.constant 0 : index
    %293 = vector.load %arg9[%c0_82, %c0_83] : memref<16x256xf32, #tpu.memory_space<vmem>>, vector<16x256xf32>
    tpu.vector_store %arg9[%c0_82, %c0_83], %292 {strides = array<i32>} : memref<16x256xf32, #tpu.memory_space<vmem>>, vector<16x256xf32>,
    return
  }
  func.func @transform_0(%arg0: i32, %arg1: i32) -> (i32, i32, i32) {
    %c0_i32 = arith.constant 0 : i32
    %c0_i32_0 = arith.constant 0 : i32
    return %arg1, %arg0, %c0_i32 : i32, i32, i32
  }
  func.func @transform_1(%arg0: i32, %arg1: i32) -> (i32, i32) {
    %c0_i32 = arith.constant 0 : i32
    %c0_i32_0 = arith.constant 0 : i32
    %c0_i32_1 = arith.constant 0 : i32
    return %c0_i32, %c0_i32_0 : i32, i32
  }
  func.func @transform_2(%arg0: i32, %arg1: i32) -> (i32, i32) {
    %c0_i32 = arith.constant 0 : i32
    %c0_i32_0 = arith.constant 0 : i32
    %c0_i32_1 = arith.constant 0 : i32
    return %c0_i32, %c0_i32_0 : i32, i32
  }
  func.func @transform_3(%arg0: i32, %arg1: i32) -> (i32, i32) {
    %c0_i32 = arith.constant 0 : i32
    %c0_i32_0 = arith.constant 0 : i32
    %c0_i32_1 = arith.constant 0 : i32
    return %c0_i32, %c0_i32_0 : i32, i32
  }
  func.func @transform_4(%arg0: i32, %arg1: i32) -> (i32, i32) {
    %c0_i32 = arith.constant 0 : i32
    %c0_i32_0 = arith.constant 0 : i32
    %c0_i32_1 = arith.constant 0 : i32
    return %c0_i32, %c0_i32_0 : i32, i32
  }
  func.func @transform_5(%arg0: i32, %arg1: i32) -> (i32, i32) {
    %c0_i32 = arith.constant 0 : i32
    %c0_i32_0 = arith.constant 0 : i32
    %c0_i32_1 = arith.constant 0 : i32
    return %c0_i32, %c0_i32_0 : i32, i32
  }
  func.func @transform_6(%arg0: i32, %arg1: i32) -> (i32, i32) {
    %c0_i32 = arith.constant 0 : i32
    %c0_i32_0 = arith.constant 0 : i32
    %c0_i32_1 = arith.constant 0 : i32
    return %c0_i32, %c0_i32_0 : i32, i32
  }
  func.func @transform_7(%arg0: i32, %arg1: i32) -> (i32, i32) {
    %c0_i32 = arith.constant 0 : i32
    %c0_i32_0 = arith.constant 0 : i32
    return %arg0, %c0_i32 : i32, i32
  }
}

</mosaic_0001>

<llo_original>
// kernel: tpu_custom_call.1
$region0: #{tpu_custom_call.1}
  #allocation0 [shape = 'u32[]', space=smem, size = 0x4, offset = 0x4, fixed_abs, tag = 'smem constant byte address 0x4 - core index']
  #allocation1 [shape = 'u32[144,128]{1,0:T(1,128)}', space=vmem, size = 0x12000, scoped, tag = 'internal scratch']
  #allocation2 [shape = 'f32[8,16,768]{2,1,0:T(8,128)}', space=vmem, size = 0x60000, scoped, tag = 'scratch operand']
  %s0 = inlined_call_operand.hbm [shape: f32[8,16,18], index: 0, kind: input, shape index: {}]
  %s1 = inlined_call_operand.hbm [shape: f32[18,32], index: 1, kind: input, shape index: {}]
  %s2 = inlined_call_operand.vmem [shape: f32[1,32], index: 2, kind: input, shape index: {}]
  %s3 = inlined_call_operand.hbm [shape: bf16[32,768], index: 3, kind: input, shape index: {}]
  %s4 = inlined_call_operand.vmem [shape: f32[1,768], index: 4, kind: input, shape index: {}]
  %s5 = inlined_call_operand.hbm [shape: bf16[256,768], index: 5, kind: input, shape index: {}]
  %s6 = inlined_call_operand.vmem [shape: f32[1,768], index: 6, kind: input, shape index: {}]
  %s7 = inlined_call_operand.hbm [shape: f32[16,256], index: 7, kind: output, shape index: {}]
  %s8 = sld [smem:[#allocation0]]
  $region58: #{tpu_custom_call.1} parent=0
    _
  %s10 = ssub.s32 1, %s8
  %s11 = scalar_select 0, %s10, %s8
  $region1: #{tpu_custom_call.1} parent=0
    #allocation3 [shape = 'u8[65536]{0}', space=vmem, size = 0x10000, scoped, tag = 'input window, operand 0, single buffered']
    #allocation4 [shape = 's32[1]{0}', space=sflag, size = 0x4, scoped, tag = 'scoped memory for tpu_custom_call.1']
    #allocation5 [shape = 's32[1]{0}', space=sflag, size = 0x4, scoped, tag = 'scoped memory for tpu_custom_call.1']
    #allocation6 [shape = 'u8[12288]{0}', space=vmem, size = 0x3000, scoped, tag = 'input window, operand 1, single buffered']
    #allocation7 [shape = 's32[1]{0}', space=sflag, size = 0x4, scoped, tag = 'scoped memory for tpu_custom_call.1']
    #allocation8 [shape = 'u8[49152]{0}', space=vmem, size = 0xc000, scoped, tag = 'input window, operand 3, single buffered']
    #allocation9 [shape = 'u8[393216]{0}', space=vmem, size = 0x60000, scoped, tag = 'input window, operand 5, single buffered']
    #allocation10 [shape = 's32[1]{0}', space=sflag, size = 0x4, scoped, tag = 'scoped memory for tpu_custom_call.1']
    #allocation11 [shape = 'u8[16384]{0}', space=vmem, size = 0x4000, scoped, tag = 'output window, operand 0, single buffered']
    %12 = vsyncpa [#allocation4], 0
    %13 = vsyncpa [#allocation7], 0
    %14 = vsyncpa [#allocation10], 0
    %15 = vsyncpa [#allocation5], 0
    // Predicated region
    $region2: #{tpu_custom_call.1} parent=1 // pred_check
      _
    $region3: #{tpu_custom_call.1} parent=1 // pred_check_branch
      %17 = sbr.rel (0) target = $region5
    $region4: #{tpu_custom_call.1} parent=1 // pred_region
      %s19 = ssub.s32 2048, 2048
      %20 = vsyncadd [#allocation4], %s19
      %s21 = sshll.u32 [#allocation3], 4
      %s22 = int_to_ptr.vmem [resolvable:$true] %s21
      %27 = dma.hbm_to_vmem [thread:$0]  %s0, 2048, %s22, [#allocation4], 128, 128, 8
    $region5: #{tpu_custom_call.1} parent=1 // pred_fallthru
      _
    // Predicated region
    $region6: #{tpu_custom_call.1} parent=1 // pred_check
      _
    $region7: #{tpu_custom_call.1} parent=1 // pred_check_branch
      %29 = sbr.rel (0) target = $region9
    $region8: #{tpu_custom_call.1} parent=1 // pred_region
      %s31 = ssub.s32 384, 384
      %32 = vsyncadd [#allocation7], %s31
      %s33 = sshll.u32 [#allocation6], 4
      %s34 = int_to_ptr.vmem [resolvable:$true] %s33
      %39 = dma.hbm_to_vmem [thread:$0]  %s1, 384, %s34, [#allocation7], 128, 128, 8
    $region9: #{tpu_custom_call.1} parent=1 // pred_fallthru
      _
    // Predicated region
    $region10: #{tpu_custom_call.1} parent=1 // pred_check
      _
    $region11: #{tpu_custom_call.1} parent=1 // pred_check_branch
      %41 = sbr.rel (0) target = $region13
    $region12: #{tpu_custom_call.1} parent=1 // pred_region
      _
    $region13: #{tpu_custom_call.1} parent=1 // pred_fallthru
      _
    // Predicated region
    $region14: #{tpu_custom_call.1} parent=1 // pred_check
      _
    $region15: #{tpu_custom_call.1} parent=1 // pred_check_branch
      %43 = sbr.rel (0) target = $region17
    $region16: #{tpu_custom_call.1} parent=1 // pred_region
      %s45 = ssub.s32 1536, 1536
      %46 = vsyncadd [#allocation7], %s45
      %s47 = sshll.u32 [#allocation8], 4
      %s48 = int_to_ptr.vmem [resolvable:$true] %s47
      %53 = dma.hbm_to_vmem [thread:$0]  %s3, 1536, %s48, [#allocation7], 384, 384, 24
    $region17: #{tpu_custom_call.1} parent=1 // pred_fallthru
      _
    // Predicated region
    $region18: #{tpu_custom_call.1} parent=1 // pred_check
      _
    $region19: #{tpu_custom_call.1} parent=1 // pred_check_branch
      %55 = sbr.rel (0) target = $region21
    $region20: #{tpu_custom_call.1} parent=1 // pred_region
      _
    $region21: #{tpu_custom_call.1} parent=1 // pred_fallthru
      _
    // Predicated region
    $region22: #{tpu_custom_call.1} parent=1 // pred_check
      _
    $region23: #{tpu_custom_call.1} parent=1 // pred_check_branch
      %57 = sbr.rel (0) target = $region25
    $region24: #{tpu_custom_call.1} parent=1 // pred_region
      %s59 = ssub.s32 12288, 12288
      %60 = vsyncadd [#allocation10], %s59
      %s61 = sshll.u32 [#allocation9], 4
      %s62 = int_to_ptr.vmem [resolvable:$true] %s61
      %67 = dma.hbm_to_vmem [thread:$0]  %s5, 12288, %s62, [#allocation10], 384, 384, 24
    $region25: #{tpu_custom_call.1} parent=1 // pred_fallthru
      _
    // Predicated region
    $region26: #{tpu_custom_call.1} parent=1 // pred_check
      _
    $region27: #{tpu_custom_call.1} parent=1 // pred_check_branch
      %69 = sbr.rel (0) target = $region29
    $region28: #{tpu_custom_call.1} parent=1 // pred_region
      _
    $region29: #{tpu_custom_call.1} parent=1 // pred_fallthru
      _
    // Predicated region
    $region30: #{tpu_custom_call.1} parent=1 // pred_check
      _
    $region31: #{tpu_custom_call.1} parent=1 // pred_check_branch
      %71 = sbr.rel (0) target = $region33
    $region32: #{tpu_custom_call.1} parent=1 // pred_region
      %72 = dma.done [#allocation4], 2048
    $region33: #{tpu_custom_call.1} parent=1 // pred_fallthru
      _
    // Predicated region
    $region34: #{tpu_custom_call.1} parent=1 // pred_check
      _
    $region35: #{tpu_custom_call.1} parent=1 // pred_check_branch
      %74 = sbr.rel (0) target = $region37
    $region36: #{tpu_custom_call.1} parent=1 // pred_region
      %75 = dma.done [#allocation7], 384
    $region37: #{tpu_custom_call.1} parent=1 // pred_fallthru
      _
    // Predicated region
    $region38: #{tpu_custom_call.1} parent=1 // pred_check
      _
    $region39: #{tpu_custom_call.1} parent=1 // pred_check_branch
      %77 = sbr.rel (0) target = $region41
    $region40: #{tpu_custom_call.1} parent=1 // pred_region
      %78 = dma.done [#allocation7], 1536
    $region41: #{tpu_custom_call.1} parent=1 // pred_fallthru
      _
    // Predicated region
    $region42: #{tpu_custom_call.1} parent=1 // pred_check
      _
    $region43: #{tpu_custom_call.1} parent=1 // pred_check_branch
      %80 = sbr.rel (0) target = $region45
    $region44: #{tpu_custom_call.1} parent=1 // pred_region
      %81 = dma.done [#allocation10], 12288
    $region45: #{tpu_custom_call.1} parent=1 // pred_fallthru
      _
    %p83 = scmp.eq.s32.totalorder 0, 0
    // Predicated region
    $region46: #{tpu_custom_call.1} parent=1 // pred_check
      %p84 = pneg %p83
    $region47: #{tpu_custom_call.1} parent=1 // pred_check_branch
      %86 = sbr.rel (%p84) target = $region49
    $region48: #{tpu_custom_call.1} parent=1 // pred_region
      %87 = vst [vmem:[#allocation11] sm:$0xff] 0.0
      %88 = vst [vmem:[#allocation11 + $0x8] sm:$0xff] 0.0
      %89 = vst [vmem:[#allocation11 + $0x10] sm:$0xff] 0.0
      %90 = vst [vmem:[#allocation11 + $0x18] sm:$0xff] 0.0
    $region49: #{tpu_custom_call.1} parent=1 // pred_fallthru
      _
    %v91 = vld [vmem:[#allocation3] sm:$0xff]
    %v92 = vld [vmem:[#allocation3 + $0x8] sm:$0xff]
    %v93 = vld [vmem:[#allocation3 + $0x10] sm:$0xff]
    %v94 = vld [vmem:[#allocation3 + $0x18] sm:$0xff]
    %v95 = vld [vmem:[#allocation3 + $0x20] sm:$0xff]
    %v96 = vld [vmem:[#allocation3 + $0x28] sm:$0xff]
    %v97 = vld [vmem:[#allocation3 + $0x30] sm:$0xff]
    %v98 = vld [vmem:[#allocation3 + $0x38] sm:$0xff]
    %v99 = vld [vmem:[#allocation3 + $0x40] sm:$0xff]
    %v100 = vld [vmem:[#allocation3 + $0x48] sm:$0xff]
    %v101 = vld [vmem:[#allocation3 + $0x50] sm:$0xff]
    %v102 = vld [vmem:[#allocation3 + $0x58] sm:$0xff]
    %v103 = vld [vmem:[#allocation3 + $0x60] sm:$0xff]
    %v104 = vld [vmem:[#allocation3 + $0x68] sm:$0xff]
    %v105 = vld [vmem:[#allocation3 + $0x70] sm:$0xff]
    %v106 = vld [vmem:[#allocation3 + $0x78] sm:$0xff]
    %v107 = vld [vmem:[#allocation6] sm:$0xff]
    %v108 = vld [vmem:[#allocation6 + $0x8] sm:$0xff]
    %v109 = vld [vmem:[#allocation6 + $0x10] sm:$0x3]
    %v110 = vld [vmem:[%s2] sm:$0x1]
    %v112 = vlaneseq
    %v113 = vshrl.u32 %v112, 7
    %v114 = vsub.s32 0, %v113
    %v115 = vrot.slane %v110, %v114
    %vm117 = vcmask 146432
    %v119 = vsel %vm117, %v91, 0
    %v122 = vsel %vm117, %v92, 0
    %v125 = vsel %vm117, %v93, 0
    %v128 = vsel %vm117, %v94, 0
    %v131 = vsel %vm117, %v95, 0
    %v134 = vsel %vm117, %v96, 0
    %v137 = vsel %vm117, %v97, 0
    %v140 = vsel %vm117, %v98, 0
    %v143 = vsel %vm117, %v99, 0
    %v146 = vsel %vm117, %v100, 0
    %v149 = vsel %vm117, %v101, 0
    %v152 = vsel %vm117, %v102, 0
    %v155 = vsel %vm117, %v103, 0
    %v158 = vsel %vm117, %v104, 0
    %v161 = vsel %vm117, %v105, 0
    %v164 = vsel %vm117, %v106, 0
    %vm166 = vcmask 1041408
    %v168 = vsel %vm166, %v109, 0
    %170 = vmatprep.subr.mxu0 0.0
    %171 = vmatpush1.msra.mxu0 %v107
    %172 = vmatprep.subr.mxu0 0.0
    %173 = vmatpush1.msra.mxu0 %v108
    %174 = vmatprep.subr.mxu0 0.0
    %175 = vmatpush1.msra.mxu0 %v168
    %176 = vmatprep.subr.mxu0 0.0
    %177 = vmatpush1.msra.mxu0 0.0
    %178 = vmatprep.subr.mxu0 0.0
    %179 = vmatpush1.msra.mxu0 0.0
    %180 = vmatprep.subr.mxu0 0.0
    %181 = vmatpush1.msra.mxu0 0.0
    %182 = vmatprep.subr.mxu0 0.0
    %183 = vmatpush1.msra.mxu0 0.0
    %184 = vmatprep.subr.mxu0 0.0
    %185 = vmatpush1.msra.mxu0 0.0
    %186 = vmatprep.subr.mxu0 0.0
    %187 = vmatpush1.msra.mxu0 0.0
    %188 = vmatprep.subr.mxu0 0.0
    %189 = vmatpush1.msra.mxu0 0.0
    %190 = vmatprep.subr.mxu0 0.0
    %191 = vmatpush1.msra.mxu0 0.0
    %192 = vmatprep.subr.mxu0 0.0
    %193 = vmatpush1.msra.mxu0 0.0
    %194 = vmatprep.subr.mxu0 0.0
    %195 = vmatpush1.msra.mxu0 0.0
    %196 = vmatprep.subr.mxu0 0.0
    %197 = vmatpush1.msra.mxu0 0.0
    %198 = vmatprep.subr.mxu0 0.0
    %199 = vmatpush1.msra.mxu0 0.0
    %200 = vmatprep.subr.mxu0 0.0
    %201 = vmatpush1.msra.mxu0 0.0
    %202 = vmatprep.subr.mxu0 0.0
    %203 = vmatpush1.msra.mxu0 0.0
    %204 = vmatprep.subr.mxu0 0.0
    %205 = vmatpush1.msra.mxu0 0.0
    %206 = vmatprep.subr.mxu0 0.0
    %207 = vmatpush1.msra.mxu0 0.0
    %208 = vmatprep.subr.mxu0 0.0
    %209 = vmatpush1.msra.mxu0 0.0
    %210 = vmatprep.subr.mxu0 0.0
    %211 = vmatpush1.msra.mxu0 0.0
    %212 = vmatprep.subr.mxu0 0.0
    %213 = vmatpush1.msra.mxu0 0.0
    %214 = vmatprep.subr.mxu0 0.0
    %215 = vmatpush1.msra.mxu0 0.0
    %216 = vmatprep.subr.mxu0 0.0
    %217 = vmatpush1.msra.mxu0 0.0
    %218 = vmatprep.subr.mxu0 0.0
    %219 = vmatpush1.msra.mxu0 0.0
    %220 = vmatprep.subr.mxu0 0.0
    %221 = vmatpush1.msra.mxu0 0.0
    %222 = vmatprep.subr.mxu0 0.0
    %223 = vmatpush1.msra.mxu0 0.0
    %224 = vmatprep.subr.mxu0 0.0
    %225 = vmatpush1.msra.mxu0 0.0
    %226 = vmatprep.subr.mxu0 0.0
    %227 = vmatpush1.msra.mxu0 0.0
    %228 = vmatprep.subr.mxu0 0.0
    %229 = vmatpush1.msra.mxu0 0.0
    %230 = vmatprep.subr.mxu0 0.0
    %231 = vmatpush1.msra.mxu0 0.0
    %232 = vmatprep.subr.mxu0 0.0
    %233 = vmatpush1.msra.mxu0 0.0
    %234 = vmatprep.mubr.f32.mxu0 0.0
    %235 = vmatmul.mubr.f32.gmra.mrb[0].mxu0 %v119
    %v236 = vpop.f32.mrb[0].mxu0
    %v237 = vadd.f32 %v115, %v236
    %v238 = vpop.f32.mrb[0].mxu0
    %239 = vmatprep.mubr.f32.mxu0 0.0
    %240 = vmatmul.mubr.f32.gmra.mrb[0].mxu0 %v122
    %v241 = vpop.f32.mrb[0].mxu0
    %v242 = vadd.f32 %v115, %v241
    %v243 = vpop.f32.mrb[0].mxu0
    %244 = vmatprep.mubr.f32.mxu0 0.0
    %245 = vmatmul.mubr.f32.gmra.mrb[0].mxu0 %v125
    %v246 = vpop.f32.mrb[0].mxu0
    %v247 = vadd.f32 %v115, %v246
    %v248 = vpop.f32.mrb[0].mxu0
    %249 = vmatprep.mubr.f32.mxu0 0.0
    %250 = vmatmul.mubr.f32.gmra.mrb[0].mxu0 %v128
    %v251 = vpop.f32.mrb[0].mxu0
    %v252 = vadd.f32 %v115, %v251
    %v253 = vpop.f32.mrb[0].mxu0
    %254 = vmatprep.mubr.f32.mxu0 0.0
    %255 = vmatmul.mubr.f32.gmra.mrb[0].mxu0 %v131
    %v256 = vpop.f32.mrb[0].mxu0
    %v257 = vadd.f32 %v115, %v256
    %v258 = vpop.f32.mrb[0].mxu0
    %259 = vmatprep.mubr.f32.mxu0 0.0
    %260 = vmatmul.mubr.f32.gmra.mrb[0].mxu0 %v134
    %v261 = vpop.f32.mrb[0].mxu0
    %v262 = vadd.f32 %v115, %v261
    %v263 = vpop.f32.mrb[0].mxu0
    %264 = vmatprep.mubr.f32.mxu0 0.0
    %265 = vmatmul.mubr.f32.gmra.mrb[0].mxu0 %v137
    %v266 = vpop.f32.mrb[0].mxu0
    %v267 = vadd.f32 %v115, %v266
    %v268 = vpop.f32.mrb[0].mxu0
    %269 = vmatprep.mubr.f32.mxu0 0.0
    %270 = vmatmul.mubr.f32.gmra.mrb[0].mxu0 %v140
    %v271 = vpop.f32.mrb[0].mxu0
    %v272 = vadd.f32 %v115, %v271
    %v273 = vpop.f32.mrb[0].mxu0
    %274 = vmatprep.mubr.f32.mxu0 0.0
    %275 = vmatmul.mubr.f32.gmra.mrb[0].mxu0 %v143
    %v276 = vpop.f32.mrb[0].mxu0
    %v277 = vadd.f32 %v115, %v276
    %v278 = vpop.f32.mrb[0].mxu0
    %279 = vmatprep.mubr.f32.mxu0 0.0
    %280 = vmatmul.mubr.f32.gmra.mrb[0].mxu0 %v146
    %v281 = vpop.f32.mrb[0].mxu0
    %v282 = vadd.f32 %v115, %v281
    %v283 = vpop.f32.mrb[0].mxu0
    %284 = vmatprep.mubr.f32.mxu0 0.0
    %285 = vmatmul.mubr.f32.gmra.mrb[0].mxu0 %v149
    %v286 = vpop.f32.mrb[0].mxu0
    %v287 = vadd.f32 %v115, %v286
    %v288 = vpop.f32.mrb[0].mxu0
    %289 = vmatprep.mubr.f32.mxu0 0.0
    %290 = vmatmul.mubr.f32.gmra.mrb[0].mxu0 %v152
    %v291 = vpop.f32.mrb[0].mxu0
    %v292 = vadd.f32 %v115, %v291
    %v293 = vpop.f32.mrb[0].mxu0
    %294 = vmatprep.mubr.f32.mxu0 0.0
    %295 = vmatmul.mubr.f32.gmra.mrb[0].mxu0 %v155
    %v296 = vpop.f32.mrb[0].mxu0
    %v297 = vadd.f32 %v115, %v296
    %v298 = vpop.f32.mrb[0].mxu0
    %299 = vmatprep.mubr.f32.mxu0 0.0
    %300 = vmatmul.mubr.f32.gmra.mrb[0].mxu0 %v158
    %v301 = vpop.f32.mrb[0].mxu0
    %v302 = vadd.f32 %v115, %v301
    %v303 = vpop.f32.mrb[0].mxu0
    %304 = vmatprep.mubr.f32.mxu0 0.0
    %305 = vmatmul.mubr.f32.gmra.mrb[0].mxu0 %v161
    %v306 = vpop.f32.mrb[0].mxu0
    %v307 = vadd.f32 %v115, %v306
    %v308 = vpop.f32.mrb[0].mxu0
    %309 = vmatprep.mubr.f32.mxu0 0.0
    %310 = vmatmul.mubr.f32.gmra.mrb[0].mxu0 %v164
    %v311 = vpop.f32.mrb[0].mxu0
    %v312 = vadd.f32 %v115, %v311
    %v313 = vpop.f32.mrb[0].mxu0
    %314 = vdwg.mxu0
    %v315 = vmax.f32 %v237, 0.0
    %v316 = vmax.f32 %v242, 0.0
    %v317 = vmax.f32 %v247, 0.0
    %v318 = vmax.f32 %v252, 0.0
    %v319 = vmax.f32 %v257, 0.0
    %v320 = vmax.f32 %v262, 0.0
    %v321 = vmax.f32 %v267, 0.0
    %v322 = vmax.f32 %v272, 0.0
    %v323 = vmax.f32 %v277, 0.0
    %v324 = vmax.f32 %v282, 0.0
    %v325 = vmax.f32 %v287, 0.0
    %v326 = vmax.f32 %v292, 0.0
    %v327 = vmax.f32 %v297, 0.0
    %v328 = vmax.f32 %v302, 0.0
    %v329 = vmax.f32 %v307, 0.0
    %v330 = vmax.f32 %v312, 0.0
    %v331 = vpack.c.bf16 %v316, %v315
    %v332 = vpack.c.bf16 %v318, %v317
    %v333 = vpack.c.bf16 %v320, %v319
    %v334 = vpack.c.bf16 %v322, %v321
    %v335 = vpack.c.bf16 %v324, %v323
    %v336 = vpack.c.bf16 %v326, %v325
    %v337 = vpack.c.bf16 %v328, %v327
    %v338 = vpack.c.bf16 %v330, %v329
    %v339 = vld [vmem:[#allocation8] sm:$0xff]
    %v340 = vld [vmem:[#allocation8 + $0x8] sm:$0xff]
    %v341 = vld [vmem:[#allocation8 + $0x10] sm:$0xff]
    %v342 = vld [vmem:[#allocation8 + $0x18] sm:$0xff]
    %v343 = vld [vmem:[#allocation8 + $0x20] sm:$0xff]
    %v344 = vld [vmem:[#allocation8 + $0x28] sm:$0xff]
    %v345 = vld [vmem:[#allocation8 + $0x30] sm:$0xff]
    %v346 = vld [vmem:[#allocation8 + $0x38] sm:$0xff]
    %v347 = vld [vmem:[#allocation8 + $0x40] sm:$0xff]
    %v348 = vld [vmem:[#allocation8 + $0x48] sm:$0xff]
    %v349 = vld [vmem:[#allocation8 + $0x50] sm:$0xff]
    %v350 = vld [vmem:[#allocation8 + $0x58] sm:$0xff]
    %v351 = vld [vmem:[%s4] sm:$0x3f]
    %v353 = vlaneseq
    %v354 = vshrl.u32 %v353, 7
    %v355 = vsub.s32 0, %v354
    %v356 = vrot.slane %v351, %v355
    %v357 = vlaneseq
    %v358 = vshrl.u32 %v357, 7
    %v359 = vsub.s32 1, %v358
    %v360 = vrot.slane %v351, %v359
    %v361 = vlaneseq
    %v362 = vshrl.u32 %v361, 7
    %v363 = vsub.s32 2, %v362
    %v364 = vrot.slane %v351, %v363
    %v365 = vlaneseq
    %v366 = vshrl.u32 %v365, 7
    %v367 = vsub.s32 3, %v366
    %v368 = vrot.slane %v351, %v367
    %v369 = vlaneseq
    %v370 = vshrl.u32 %v369, 7
    %v371 = vsub.s32 4, %v370
    %v372 = vrot.slane %v351, %v371
    %v373 = vlaneseq
    %v374 = vshrl.u32 %v373, 7
    %v375 = vsub.s32 5, %v374
    %v376 = vrot.slane %v351, %v375
    %v395 = vunpack.c.l.b16 %v339
    %v396 = vunpack.c.h.b16 %v339
    %v397 = vunpack.c.l.b16 %v340
    %v398 = vunpack.c.h.b16 %v340
    %v399 = vunpack.c.l.b16 %v341
    %v400 = vunpack.c.h.b16 %v341
    %v401 = vunpack.c.l.b16 %v342
    %v402 = vunpack.c.h.b16 %v342
    %v403 = vunpack.c.l.b16 %v343
    %v404 = vunpack.c.h.b16 %v343
    %v405 = vunpack.c.l.b16 %v344
    %v406 = vunpack.c.h.b16 %v344
    %v407 = vunpack.c.l.b16 %v345
    %v408 = vunpack.c.h.b16 %v345
    %v409 = vunpack.c.l.b16 %v346
    %v410 = vunpack.c.h.b16 %v346
    %v411 = vunpack.c.l.b16 %v347
    %v412 = vunpack.c.h.b16 %v347
    %v413 = vunpack.c.l.b16 %v348
    %v414 = vunpack.c.h.b16 %v348
    %v415 = vunpack.c.l.b16 %v349
    %v416 = vunpack.c.h.b16 %v349
    %v417 = vunpack.c.l.b16 %v350
    %v418 = vunpack.c.h.b16 %v350
    %v419 = vpack.c.b16 %v401, %v395
    %v420 = vpack.c.b16 %v402, %v396
    %v421 = vpack.c.b16 %v403, %v397
    %v422 = vpack.c.b16 %v404, %v398
    %v423 = vpack.c.b16 %v405, %v399
    %v424 = vpack.c.b16 %v406, %v400
    %v425 = vpack.c.b16 %v413, %v407
    %v426 = vpack.c.b16 %v414, %v408
    %v427 = vpack.c.b16 %v415, %v409
    %v428 = vpack.c.b16 %v416, %v410
    %v429 = vpack.c.b16 %v417, %v411
    %v430 = vpack.c.b16 %v418, %v412
    %vm443 = vcmask 261120
    %v445 = vsel %vm443, %v331, 0
    %v448 = vsel %vm443, %v332, 0
    %v451 = vsel %vm443, %v333, 0
    %v454 = vsel %vm443, %v334, 0
    %v457 = vsel %vm443, %v335, 0
    %v460 = vsel %vm443, %v336, 0
    %v463 = vsel %vm443, %v337, 0
    %v466 = vsel %vm443, %v338, 0
    %468 = vmatprep.subr.bf16.mxu0 %v420
    %469 = vmatpush1.bf16.msra.mxu0 %v419
    %470 = vmatprep.subr.bf16.mxu0 %v426
    %471 = vmatpush1.bf16.msra.mxu0 %v425
    %472 = vmatprep.subr.bf16.mxu0 0
    %473 = vmatpush1.bf16.msra.mxu0 0
    %474 = vmatprep.subr.bf16.mxu0 0
    %475 = vmatpush1.bf16.msra.mxu0 0
    %476 = vmatprep.subr.bf16.mxu0 0
    %477 = vmatpush1.bf16.msra.mxu0 0
    %478 = vmatprep.subr.bf16.mxu0 0
    %479 = vmatpush1.bf16.msra.mxu0 0
    %480 = vmatprep.subr.bf16.mxu0 0
    %481 = vmatpush1.bf16.msra.mxu0 0
    %482 = vmatprep.subr.bf16.mxu0 0
    %483 = vmatpush1.bf16.msra.mxu0 0
    %484 = vmatprep.subr.bf16.mxu0 0
    %485 = vmatpush1.bf16.msra.mxu0 0
    %486 = vmatprep.subr.bf16.mxu0 0
    %487 = vmatpush1.bf16.msra.mxu0 0
    %488 = vmatprep.subr.bf16.mxu0 0
    %489 = vmatpush1.bf16.msra.mxu0 0
    %490 = vmatprep.subr.bf16.mxu0 0
    %491 = vmatpush1.bf16.msra.mxu0 0
    %492 = vmatprep.subr.bf16.mxu0 0
    %493 = vmatpush1.bf16.msra.mxu0 0
    %494 = vmatprep.subr.bf16.mxu0 0
    %495 = vmatpush1.bf16.msra.mxu0 0
    %496 = vmatprep.subr.bf16.mxu0 0
    %497 = vmatpush1.bf16.msra.mxu0 0
    %498 = vmatprep.subr.bf16.mxu0 0
    %499 = vmatpush1.bf16.msra.mxu0 0
    %500 = vmatprep.mubr.bf16.mxu0 0
    %501 = vmatmul.mubr.bf16.gmra.mrb[0].mxu0 %v445
    %v502 = vpop.f32.mrb[0].mxu0
    %v503 = vadd.f32 %v356, %v502
    %v504 = vpop.f32.mrb[0].mxu0
    %v505 = vadd.f32 %v360, %v504
    %v506 = vpop.f32.mrb[0].mxu0
    %v507 = vadd.f32 %v356, %v506
    %v508 = vpop.f32.mrb[0].mxu0
    %v509 = vadd.f32 %v360, %v508
    %510 = vmatprep.mubr.bf16.mxu0 0
    %511 = vmatmul.mubr.bf16.gmra.mrb[0].mxu0 %v448
    %v512 = vpop.f32.mrb[0].mxu0
    %v513 = vadd.f32 %v356, %v512
    %v514 = vpop.f32.mrb[0].mxu0
    %v515 = vadd.f32 %v360, %v514
    %v516 = vpop.f32.mrb[0].mxu0
    %v517 = vadd.f32 %v356, %v516
    %v518 = vpop.f32.mrb[0].mxu0
    %v519 = vadd.f32 %v360, %v518
    %520 = vmatprep.mubr.bf16.mxu0 0
    %521 = vmatmul.mubr.bf16.gmra.mrb[0].mxu0 %v451
    %v522 = vpop.f32.mrb[0].mxu0
    %v523 = vadd.f32 %v356, %v522
    %v524 = vpop.f32.mrb[0].mxu0
    %v525 = vadd.f32 %v360, %v524
    %v526 = vpop.f32.mrb[0].mxu0
    %v527 = vadd.f32 %v356, %v526
    %v528 = vpop.f32.mrb[0].mxu0
    %v529 = vadd.f32 %v360, %v528
    %530 = vmatprep.mubr.bf16.mxu0 0
    %531 = vmatmul.mubr.bf16.gmra.mrb[0].mxu0 %v454
    %v532 = vpop.f32.mrb[0].mxu0
    %v533 = vadd.f32 %v356, %v532
    %v534 = vpop.f32.mrb[0].mxu0
    %v535 = vadd.f32 %v360, %v534
    %v536 = vpop.f32.mrb[0].mxu0
    %v537 = vadd.f32 %v356, %v536
    %v538 = vpop.f32.mrb[0].mxu0
    %v539 = vadd.f32 %v360, %v538
    %540 = vmatprep.mubr.bf16.mxu0 0
    %541 = vmatmul.mubr.bf16.gmra.mrb[0].mxu0 %v457
    %v542 = vpop.f32.mrb[0].mxu0
    %v543 = vadd.f32 %v356, %v542
    %v544 = vpop.f32.mrb[0].mxu0
    %v545 = vadd.f32 %v360, %v544
    %v546 = vpop.f32.mrb[0].mxu0
    %v547 = vadd.f32 %v356, %v546
    %v548 = vpop.f32.mrb[0].mxu0
    %v549 = vadd.f32 %v360, %v548
    %550 = vmatprep.mubr.bf16.mxu0 0
    %551 = vmatmul.mubr.bf16.gmra.mrb[0].mxu0 %v460
    %v552 = vpop.f32.mrb[0].mxu0
    %v553 = vadd.f32 %v356, %v552
    %v554 = vpop.f32.mrb[0].mxu0
    %v555 = vadd.f32 %v360, %v554
    %v556 = vpop.f32.mrb[0].mxu0
    %v557 = vadd.f32 %v356, %v556
    %v558 = vpop.f32.mrb[0].mxu0
    %v559 = vadd.f32 %v360, %v558
    %560 = vmatprep.mubr.bf16.mxu0 0
    %561 = vmatmul.mubr.bf16.gmra.mrb[0].mxu0 %v463
    %v562 = vpop.f32.mrb[0].mxu0
    %v563 = vadd.f32 %v356, %v562
    %v564 = vpop.f32.mrb[0].mxu0
    %v565 = vadd.f32 %v360, %v564
    %v566 = vpop.f32.mrb[0].mxu0
    %v567 = vadd.f32 %v356, %v566
    %v568 = vpop.f32.mrb[0].mxu0
    %v569 = vadd.f32 %v360, %v568
    %570 = vmatprep.mubr.bf16.mxu0 0
    %571 = vmatmul.mubr.bf16.gmra.mrb[0].mxu0 %v466
    %v572 = vpop.f32.mrb[0].mxu0
    %v573 = vadd.f32 %v356, %v572
    %v574 = vpop.f32.mrb[0].mxu0
    %v575 = vadd.f32 %v360, %v574
    %v576 = vpop.f32.mrb[0].mxu0
    %v577 = vadd.f32 %v356, %v576
    %v578 = vpop.f32.mrb[0].mxu0
    %v579 = vadd.f32 %v360, %v578
    %580 = vdwg.mxu0
    %581 = vmatprep.subr.bf16.mxu0 %v422
    %582 = vmatpush1.bf16.msra.mxu0 %v421
    %583 = vmatprep.subr.bf16.mxu0 %v428
    %584 = vmatpush1.bf16.msra.mxu0 %v427
    %585 = vmatprep.subr.bf16.mxu0 0
    %586 = vmatpush1.bf16.msra.mxu0 0
    %587 = vmatprep.subr.bf16.mxu0 0
    %588 = vmatpush1.bf16.msra.mxu0 0
    %589 = vmatprep.subr.bf16.mxu0 0
    %590 = vmatpush1.bf16.msra.mxu0 0
    %591 = vmatprep.subr.bf16.mxu0 0
    %592 = vmatpush1.bf16.msra.mxu0 0
    %593 = vmatprep.subr.bf16.mxu0 0
    %594 = vmatpush1.bf16.msra.mxu0 0
    %595 = vmatprep.subr.bf16.mxu0 0
    %596 = vmatpush1.bf16.msra.mxu0 0
    %597 = vmatprep.subr.bf16.mxu0 0
    %598 = vmatpush1.bf16.msra.mxu0 0
    %599 = vmatprep.subr.bf16.mxu0 0
    %600 = vmatpush1.bf16.msra.mxu0 0
    %601 = vmatprep.subr.bf16.mxu0 0
    %602 = vmatpush1.bf16.msra.mxu0 0
    %603 = vmatprep.subr.bf16.mxu0 0
    %604 = vmatpush1.bf16.msra.mxu0 0
    %605 = vmatprep.subr.bf16.mxu0 0
    %606 = vmatpush1.bf16.msra.mxu0 0
    %607 = vmatprep.subr.bf16.mxu0 0
    %608 = vmatpush1.bf16.msra.mxu0 0
    %609 = vmatprep.subr.bf16.mxu0 0
    %610 = vmatpush1.bf16.msra.mxu0 0
    %611 = vmatprep.subr.bf16.mxu0 0
    %612 = vmatpush1.bf16.msra.mxu0 0
    %613 = vmatprep.mubr.bf16.mxu0 0
    %614 = vmatmul.mubr.bf16.gmra.mrb[0].mxu0 %v445
    %v615 = vpop.f32.mrb[0].mxu0
    %v616 = vadd.f32 %v364, %v615
    %v617 = vpop.f32.mrb[0].mxu0
    %v618 = vadd.f32 %v368, %v617
    %v619 = vpop.f32.mrb[0].mxu0
    %v620 = vadd.f32 %v364, %v619
    %v621 = vpop.f32.mrb[0].mxu0
    %v622 = vadd.f32 %v368, %v621
    %623 = vmatprep.mubr.bf16.mxu0 0
    %624 = vmatmul.mubr.bf16.gmra.mrb[0].mxu0 %v448
    %v625 = vpop.f32.mrb[0].mxu0
    %v626 = vadd.f32 %v364, %v625
    %v627 = vpop.f32.mrb[0].mxu0
    %v628 = vadd.f32 %v368, %v627
    %v629 = vpop.f32.mrb[0].mxu0
    %v630 = vadd.f32 %v364, %v629
    %v631 = vpop.f32.mrb[0].mxu0
    %v632 = vadd.f32 %v368, %v631
    %633 = vmatprep.mubr.bf16.mxu0 0
    %634 = vmatmul.mubr.bf16.gmra.mrb[0].mxu0 %v451
    %v635 = vpop.f32.mrb[0].mxu0
    %v636 = vadd.f32 %v364, %v635
    %v637 = vpop.f32.mrb[0].mxu0
    %v638 = vadd.f32 %v368, %v637
    %v639 = vpop.f32.mrb[0].mxu0
    %v640 = vadd.f32 %v364, %v639
    %v641 = vpop.f32.mrb[0].mxu0
    %v642 = vadd.f32 %v368, %v641
    %643 = vmatprep.mubr.bf16.mxu0 0
    %644 = vmatmul.mubr.bf16.gmra.mrb[0].mxu0 %v454
    %v645 = vpop.f32.mrb[0].mxu0
    %v646 = vadd.f32 %v364, %v645
    %v647 = vpop.f32.mrb[0].mxu0
    %v648 = vadd.f32 %v368, %v647
    %v649 = vpop.f32.mrb[0].mxu0
    %v650 = vadd.f32 %v364, %v649
    %v651 = vpop.f32.mrb[0].mxu0
    %v652 = vadd.f32 %v368, %v651
    %653 = vmatprep.mubr.bf16.mxu0 0
    %654 = vmatmul.mubr.bf16.gmra.mrb[0].mxu0 %v457
    %v655 = vpop.f32.mrb[0].mxu0
    %v656 = vadd.f32 %v364, %v655
    %v657 = vpop.f32.mrb[0].mxu0
    %v658 = vadd.f32 %v368, %v657
    %v659 = vpop.f32.mrb[0].mxu0
    %v660 = vadd.f32 %v364, %v659
    %v661 = vpop.f32.mrb[0].mxu0
    %v662 = vadd.f32 %v368, %v661
    %663 = vmatprep.mubr.bf16.mxu0 0
    %664 = vmatmul.mubr.bf16.gmra.mrb[0].mxu0 %v460
    %v665 = vpop.f32.mrb[0].mxu0
    %v666 = vadd.f32 %v364, %v665
    %v667 = vpop.f32.mrb[0].mxu0
    %v668 = vadd.f32 %v368, %v667
    %v669 = vpop.f32.mrb[0].mxu0
    %v670 = vadd.f32 %v364, %v669
    %v671 = vpop.f32.mrb[0].mxu0
    %v672 = vadd.f32 %v368, %v671
    %673 = vmatprep.mubr.bf16.mxu0 0
    %674 = vmatmul.mubr.bf16.gmra.mrb[0].mxu0 %v463
    %v675 = vpop.f32.mrb[0].mxu0
    %v676 = vadd.f32 %v364, %v675
    %v677 = vpop.f32.mrb[0].mxu0
    %v678 = vadd.f32 %v368, %v677
    %v679 = vpop.f32.mrb[0].mxu0
    %v680 = vadd.f32 %v364, %v679
    %v681 = vpop.f32.mrb[0].mxu0
    %v682 = vadd.f32 %v368, %v681
    %683 = vmatprep.mubr.bf16.mxu0 0
    %684 = vmatmul.mubr.bf16.gmra.mrb[0].mxu0 %v466
    %v685 = vpop.f32.mrb[0].mxu0
    %v686 = vadd.f32 %v364, %v685
    %v687 = vpop.f32.mrb[0].mxu0
    %v688 = vadd.f32 %v368, %v687
    %v689 = vpop.f32.mrb[0].mxu0
    %v690 = vadd.f32 %v364, %v689
    %v691 = vpop.f32.mrb[0].mxu0
    %v692 = vadd.f32 %v368, %v691
    %693 = vdwg.mxu0
    %694 = vmatprep.subr.bf16.mxu0 %v424
    %695 = vmatpush1.bf16.msra.mxu0 %v423
    %696 = vmatprep.subr.bf16.mxu0 %v430
    %697 = vmatpush1.bf16.msra.mxu0 %v429
    %698 = vmatprep.subr.bf16.mxu0 0
    %699 = vmatpush1.bf16.msra.mxu0 0
    %700 = vmatprep.subr.bf16.mxu0 0
    %701 = vmatpush1.bf16.msra.mxu0 0
    %702 = vmatprep.subr.bf16.mxu0 0
    %703 = vmatpush1.bf16.msra.mxu0 0
    %704 = vmatprep.subr.bf16.mxu0 0
    %705 = vmatpush1.bf16.msra.mxu0 0
    %706 = vmatprep.subr.bf16.mxu0 0
    %707 = vmatpush1.bf16.msra.mxu0 0
    %708 = vmatprep.subr.bf16.mxu0 0
    %709 = vmatpush1.bf16.msra.mxu0 0
    %710 = vmatprep.subr.bf16.mxu0 0
    %711 = vmatpush1.bf16.msra.mxu0 0
    %712 = vmatprep.subr.bf16.mxu0 0
    %713 = vmatpush1.bf16.msra.mxu0 0
    %714 = vmatprep.subr.bf16.mxu0 0
    %715 = vmatpush1.bf16.msra.mxu0 0
    %716 = vmatprep.subr.bf16.mxu0 0
    %717 = vmatpush1.bf16.msra.mxu0 0
    %718 = vmatprep.subr.bf16.mxu0 0
    %719 = vmatpush1.bf16.msra.mxu0 0
    %720 = vmatprep.subr.bf16.mxu0 0
    %721 = vmatpush1.bf16.msra.mxu0 0
    %722 = vmatprep.subr.bf16.mxu0 0
    %723 = vmatpush1.bf16.msra.mxu0 0
    %724 = vmatprep.subr.bf16.mxu0 0
    %725 = vmatpush1.bf16.msra.mxu0 0
    %726 = vmatprep.mubr.bf16.mxu0 0
    %727 = vmatmul.mubr.bf16.gmra.mrb[0].mxu0 %v445
    %v728 = vpop.f32.mrb[0].mxu0
    %v729 = vadd.f32 %v372, %v728
    %v730 = vpop.f32.mrb[0].mxu0
    %v731 = vadd.f32 %v376, %v730
    %v732 = vpop.f32.mrb[0].mxu0
    %v733 = vadd.f32 %v372, %v732
    %v734 = vpop.f32.mrb[0].mxu0
    %v735 = vadd.f32 %v376, %v734
    %736 = vmatprep.mubr.bf16.mxu0 0
    %737 = vmatmul.mubr.bf16.gmra.mrb[0].mxu0 %v448
    %v738 = vpop.f32.mrb[0].mxu0
    %v739 = vadd.f32 %v372, %v738
    %v740 = vpop.f32.mrb[0].mxu0
    %v741 = vadd.f32 %v376, %v740
    %v742 = vpop.f32.mrb[0].mxu0
    %v743 = vadd.f32 %v372, %v742
    %v744 = vpop.f32.mrb[0].mxu0
    %v745 = vadd.f32 %v376, %v744
    %746 = vmatprep.mubr.bf16.mxu0 0
    %747 = vmatmul.mubr.bf16.gmra.mrb[0].mxu0 %v451
    %v748 = vpop.f32.mrb[0].mxu0
    %v749 = vadd.f32 %v372, %v748
    %v750 = vpop.f32.mrb[0].mxu0
    %v751 = vadd.f32 %v376, %v750
    %v752 = vpop.f32.mrb[0].mxu0
    %v753 = vadd.f32 %v372, %v752
    %v754 = vpop.f32.mrb[0].mxu0
    %v755 = vadd.f32 %v376, %v754
    %756 = vmatprep.mubr.bf16.mxu0 0
    %757 = vmatmul.mubr.bf16.gmra.mrb[0].mxu0 %v454
    %v758 = vpop.f32.mrb[0].mxu0
    %v759 = vadd.f32 %v372, %v758
    %v760 = vpop.f32.mrb[0].mxu0
    %v761 = vadd.f32 %v376, %v760
    %v762 = vpop.f32.mrb[0].mxu0
    %v763 = vadd.f32 %v372, %v762
    %v764 = vpop.f32.mrb[0].mxu0
    %v765 = vadd.f32 %v376, %v764
    %766 = vmatprep.mubr.bf16.mxu0 0
    %767 = vmatmul.mubr.bf16.gmra.mrb[0].mxu0 %v457
    %v768 = vpop.f32.mrb[0].mxu0
    %v769 = vadd.f32 %v372, %v768
    %v770 = vpop.f32.mrb[0].mxu0
    %v771 = vadd.f32 %v376, %v770
    %v772 = vpop.f32.mrb[0].mxu0
    %v773 = vadd.f32 %v372, %v772
    %v774 = vpop.f32.mrb[0].mxu0
    %v775 = vadd.f32 %v376, %v774
    %776 = vmatprep.mubr.bf16.mxu0 0
    %777 = vmatmul.mubr.bf16.gmra.mrb[0].mxu0 %v460
    %v778 = vpop.f32.mrb[0].mxu0
    %v779 = vadd.f32 %v372, %v778
    %v780 = vpop.f32.mrb[0].mxu0
    %v781 = vadd.f32 %v376, %v780
    %v782 = vpop.f32.mrb[0].mxu0
    %v783 = vadd.f32 %v372, %v782
    %v784 = vpop.f32.mrb[0].mxu0
    %v785 = vadd.f32 %v376, %v784
    %786 = vmatprep.mubr.bf16.mxu0 0
    %787 = vmatmul.mubr.bf16.gmra.mrb[0].mxu0 %v463
    %v788 = vpop.f32.mrb[0].mxu0
    %v789 = vadd.f32 %v372, %v788
    %v790 = vpop.f32.mrb[0].mxu0
    %v791 = vadd.f32 %v376, %v790
    %v792 = vpop.f32.mrb[0].mxu0
    %v793 = vadd.f32 %v372, %v792
    %v794 = vpop.f32.mrb[0].mxu0
    %v795 = vadd.f32 %v376, %v794
    %796 = vmatprep.mubr.bf16.mxu0 0
    %797 = vmatmul.mubr.bf16.gmra.mrb[0].mxu0 %v466
    %v798 = vpop.f32.mrb[0].mxu0
    %v799 = vadd.f32 %v372, %v798
    %v800 = vpop.f32.mrb[0].mxu0
    %v801 = vadd.f32 %v376, %v800
    %v802 = vpop.f32.mrb[0].mxu0
    %v803 = vadd.f32 %v372, %v802
    %v804 = vpop.f32.mrb[0].mxu0
    %v805 = vadd.f32 %v376, %v804
    %806 = vdwg.mxu0
    %807 = vst [vmem:[#allocation2] sm:$0xff] %v503
    %808 = vst [vmem:[#allocation2 + $0x8] sm:$0xff] %v505
    %809 = vst [vmem:[#allocation2 + $0x10] sm:$0xff] %v616
    %810 = vst [vmem:[#allocation2 + $0x18] sm:$0xff] %v618
    %811 = vst [vmem:[#allocation2 + $0x20] sm:$0xff] %v729
    %812 = vst [vmem:[#allocation2 + $0x28] sm:$0xff] %v731
    %813 = vst [vmem:[#allocation2 + $0x30] sm:$0xff] %v507
    %814 = vst [vmem:[#allocation2 + $0x38] sm:$0xff] %v509
    %815 = vst [vmem:[#allocation2 + $0x40] sm:$0xff] %v620
    %816 = vst [vmem:[#allocation2 + $0x48] sm:$0xff] %v622
    %817 = vst [vmem:[#allocation2 + $0x50] sm:$0xff] %v733
    %818 = vst [vmem:[#allocation2 + $0x58] sm:$0xff] %v735
    %819 = vst [vmem:[#allocation2 + $0x60] sm:$0xff] %v513
    %820 = vst [vmem:[#allocation2 + $0x68] sm:$0xff] %v515
    %821 = vst [vmem:[#allocation2 + $0x70] sm:$0xff] %v626
    %822 = vst [vmem:[#allocation2 + $0x78] sm:$0xff] %v628
    %823 = vst [vmem:[#allocation2 + $0x80] sm:$0xff] %v739
    %824 = vst [vmem:[#allocation2 + $0x88] sm:$0xff] %v741
    %825 = vst [vmem:[#allocation2 + $0x90] sm:$0xff] %v517
    %826 = vst [vmem:[#allocation2 + $0x98] sm:$0xff] %v519
    %827 = vst [vmem:[#allocation2 + $0xa0] sm:$0xff] %v630
    %828 = vst [vmem:[#allocation2 + $0xa8] sm:$0xff] %v632
    %829 = vst [vmem:[#allocation2 + $0xb0] sm:$0xff] %v743
    %830 = vst [vmem:[#allocation2 + $0xb8] sm:$0xff] %v745
    %831 = vst [vmem:[#allocation2 + $0xc0] sm:$0xff] %v523
    %832 = vst [vmem:[#allocation2 + $0xc8] sm:$0xff] %v525
    %833 = vst [vmem:[#allocation2 + $0xd0] sm:$0xff] %v636
    %834 = vst [vmem:[#allocation2 + $0xd8] sm:$0xff] %v638
    %835 = vst [vmem:[#allocation2 + $0xe0] sm:$0xff] %v749
    %836 = vst [vmem:[#allocation2 + $0xe8] sm:$0xff] %v751
    %837 = vst [vmem:[#allocation2 + $0xf0] sm:$0xff] %v527
    %838 = vst [vmem:[#allocation2 + $0xf8] sm:$0xff] %v529
    %839 = vst [vmem:[#allocation2 + $0x100] sm:$0xff] %v640
    %840 = vst [vmem:[#allocation2 + $0x108] sm:$0xff] %v642
    %841 = vst [vmem:[#allocation2 + $0x110] sm:$0xff] %v753
    %842 = vst [vmem:[#allocation2 + $0x118] sm:$0xff] %v755
    %843 = vst [vmem:[#allocation2 + $0x120] sm:$0xff] %v533
    %844 = vst [vmem:[#allocation2 + $0x128] sm:$0xff] %v535
    %845 = vst [vmem:[#allocation2 + $0x130] sm:$0xff] %v646
    %846 = vst [vmem:[#allocation2 + $0x138] sm:$0xff] %v648
    %847 = vst [vmem:[#allocation2 + $0x140] sm:$0xff] %v759
    %848 = vst [vmem:[#allocation2 + $0x148] sm:$0xff] %v761
    %849 = vst [vmem:[#allocation2 + $0x150] sm:$0xff] %v537
    %850 = vst [vmem:[#allocation2 + $0x158] sm:$0xff] %v539
    %851 = vst [vmem:[#allocation2 + $0x160] sm:$0xff] %v650
    %852 = vst [vmem:[#allocation2 + $0x168] sm:$0xff] %v652
    %853 = vst [vmem:[#allocation2 + $0x170] sm:$0xff] %v763
    %854 = vst [vmem:[#allocation2 + $0x178] sm:$0xff] %v765
    %855 = vst [vmem:[#allocation2 + $0x180] sm:$0xff] %v543
    %856 = vst [vmem:[#allocation2 + $0x188] sm:$0xff] %v545
    %857 = vst [vmem:[#allocation2 + $0x190] sm:$0xff] %v656
    %858 = vst [vmem:[#allocation2 + $0x198] sm:$0xff] %v658
    %859 = vst [vmem:[#allocation2 + $0x1a0] sm:$0xff] %v769
    %860 = vst [vmem:[#allocation2 + $0x1a8] sm:$0xff] %v771
    %861 = vst [vmem:[#allocation2 + $0x1b0] sm:$0xff] %v547
    %862 = vst [vmem:[#allocation2 + $0x1b8] sm:$0xff] %v549
    %863 = vst [vmem:[#allocation2 + $0x1c0] sm:$0xff] %v660
    %864 = vst [vmem:[#allocation2 + $0x1c8] sm:$0xff] %v662
    %865 = vst [vmem:[#allocation2 + $0x1d0] sm:$0xff] %v773
    %866 = vst [vmem:[#allocation2 + $0x1d8] sm:$0xff] %v775
    %867 = vst [vmem:[#allocation2 + $0x1e0] sm:$0xff] %v553
    %868 = vst [vmem:[#allocation2 + $0x1e8] sm:$0xff] %v555
    %869 = vst [vmem:[#allocation2 + $0x1f0] sm:$0xff] %v666
    %870 = vst [vmem:[#allocation2 + $0x1f8] sm:$0xff] %v668
    %871 = vst [vmem:[#allocation2 + $0x200] sm:$0xff] %v779
    %872 = vst [vmem:[#allocation2 + $0x208] sm:$0xff] %v781
    %873 = vst [vmem:[#allocation2 + $0x210] sm:$0xff] %v557
    %874 = vst [vmem:[#allocation2 + $0x218] sm:$0xff] %v559
    %875 = vst [vmem:[#allocation2 + $0x220] sm:$0xff] %v670
    %876 = vst [vmem:[#allocation2 + $0x228] sm:$0xff] %v672
    %877 = vst [vmem:[#allocation2 + $0x230] sm:$0xff] %v783
    %878 = vst [vmem:[#allocation2 + $0x238] sm:$0xff] %v785
    %879 = vst [vmem:[#allocation2 + $0x240] sm:$0xff] %v563
    %880 = vst [vmem:[#allocation2 + $0x248] sm:$0xff] %v565
    %881 = vst [vmem:[#allocation2 + $0x250] sm:$0xff] %v676
    %882 = vst [vmem:[#allocation2 + $0x258] sm:$0xff] %v678
    %883 = vst [vmem:[#allocation2 + $0x260] sm:$0xff] %v789
    %884 = vst [vmem:[#allocation2 + $0x268] sm:$0xff] %v791
    %885 = vst [vmem:[#allocation2 + $0x270] sm:$0xff] %v567
    %886 = vst [vmem:[#allocation2 + $0x278] sm:$0xff] %v569
    %887 = vst [vmem:[#allocation2 + $0x280] sm:$0xff] %v680
    %888 = vst [vmem:[#allocation2 + $0x288] sm:$0xff] %v682
    %889 = vst [vmem:[#allocation2 + $0x290] sm:$0xff] %v793
    %890 = vst [vmem:[#allocation2 + $0x298] sm:$0xff] %v795
    %891 = vst [vmem:[#allocation2 + $0x2a0] sm:$0xff] %v573
    %892 = vst [vmem:[#allocation2 + $0x2a8] sm:$0xff] %v575
    %893 = vst [vmem:[#allocation2 + $0x2b0] sm:$0xff] %v686
    %894 = vst [vmem:[#allocation2 + $0x2b8] sm:$0xff] %v688
    %895 = vst [vmem:[#allocation2 + $0x2c0] sm:$0xff] %v799
    %896 = vst [vmem:[#allocation2 + $0x2c8] sm:$0xff] %v801
    %897 = vst [vmem:[#allocation2 + $0x2d0] sm:$0xff] %v577
    %898 = vst [vmem:[#allocation2 + $0x2d8] sm:$0xff] %v579
    %899 = vst [vmem:[#allocation2 + $0x2e0] sm:$0xff] %v690
    %900 = vst [vmem:[#allocation2 + $0x2e8] sm:$0xff] %v692
    %901 = vst [vmem:[#allocation2 + $0x2f0] sm:$0xff] %v803
    %902 = vst [vmem:[#allocation2 + $0x2f8] sm:$0xff] %v805
    %v903 = vld [vmem:[#allocation9] sm:$0xff]
    %v904 = vld [vmem:[#allocation9 + $0x8] sm:$0xff]
    %v905 = vld [vmem:[#allocation9 + $0x18] sm:$0xff]
    %v906 = vld [vmem:[#allocation9 + $0x20] sm:$0xff]
    %v907 = vld [vmem:[#allocation9 + $0x30] sm:$0xff]
    %v908 = vld [vmem:[#allocation9 + $0x38] sm:$0xff]
    %v909 = vld [vmem:[#allocation9 + $0x48] sm:$0xff]
    %v910 = vld [vmem:[#allocation9 + $0x50] sm:$0xff]
    %v911 = vld [vmem:[#allocation9 + $0x60] sm:$0xff]
    %v912 = vld [vmem:[#allocation9 + $0x68] sm:$0xff]
    %v913 = vld [vmem:[#allocation9 + $0x78] sm:$0xff]
    %v914 = vld [vmem:[#allocation9 + $0x80] sm:$0xff]
    %v915 = vld [vmem:[#allocation9 + $0x90] sm:$0xff]
    %v916 = vld [vmem:[#allocation9 + $0x98] sm:$0xff]
    %v917 = vld [vmem:[#allocation9 + $0xa8] sm:$0xff]
    %v918 = vld [vmem:[#allocation9 + $0xb0] sm:$0xff]
    %v919 = vld [vmem:[#allocation9 + $0xc0] sm:$0xff]
    %v920 = vld [vmem:[#allocation9 + $0xc8] sm:$0xff]
    %v921 = vld [vmem:[#allocation9 + $0xd8] sm:$0xff]
    %v922 = vld [vmem:[#allocation9 + $0xe0] sm:$0xff]
    %v923 = vld [vmem:[#allocation9 + $0xf0] sm:$0xff]
    %v924 = vld [vmem:[#allocation9 + $0xf8] sm:$0xff]
    %v925 = vld [vmem:[#allocation9 + $0x108] sm:$0xff]
    %v926 = vld [vmem:[#allocation9 + $0x110] sm:$0xff]
    %v927 = vld [vmem:[#allocation9 + $0x120] sm:$0xff]
    %v928 = vld [vmem:[#allocation9 + $0x128] sm:$0xff]
    %v929 = vld [vmem:[#allocation9 + $0x138] sm:$0xff]
    %v930 = vld [vmem:[#allocation9 + $0x140] sm:$0xff]
    %v931 = vld [vmem:[#allocation9 + $0x150] sm:$0xff]
    %v932 = vld [vmem:[#allocation9 + $0x158] sm:$0xff]
    %v933 = vld [vmem:[#allocation9 + $0x168] sm:$0xff]
    %v934 = vld [vmem:[#allocation9 + $0x170] sm:$0xff]
    %v935 = vld [vmem:[#allocation9 + $0x180] sm:$0xff]
    %v936 = vld [vmem:[#allocation9 + $0x188] sm:$0xff]
    %v937 = vld [vmem:[#allocation9 + $0x198] sm:$0xff]
    %v938 = vld [vmem:[#allocation9 + $0x1a0] sm:$0xff]
    %v939 = vld [vmem:[#allocation9 + $0x1b0] sm:$0xff]
    %v940 = vld [vmem:[#allocation9 + $0x1b8] sm:$0xff]
    %v941 = vld [vmem:[#allocation9 + $0x1c8] sm:$0xff]
    %v942 = vld [vmem:[#allocation9 + $0x1d0] sm:$0xff]
    %v943 = vld [vmem:[#allocation9 + $0x1e0] sm:$0xff]
    %v944 = vld [vmem:[#allocation9 + $0x1e8] sm:$0xff]
    %v945 = vld [vmem:[#allocation9 + $0x1f8] sm:$0xff]
    %v946 = vld [vmem:[#allocation9 + $0x200] sm:$0xff]
    %v947 = vld [vmem:[#allocation9 + $0x210] sm:$0xff]
    %v948 = vld [vmem:[#allocation9 + $0x218] sm:$0xff]
    %v949 = vld [vmem:[#allocation9 + $0x228] sm:$0xff]
    %v950 = vld [vmem:[#allocation9 + $0x230] sm:$0xff]
    %v951 = vld [vmem:[#allocation9 + $0x240] sm:$0xff]
    %v952 = vld [vmem:[#allocation9 + $0x248] sm:$0xff]
    %v953 = vld [vmem:[#allocation9 + $0x258] sm:$0xff]
    %v954 = vld [vmem:[#allocation9 + $0x260] sm:$0xff]
    %v955 = vld [vmem:[#allocation9 + $0x270] sm:$0xff]
    %v956 = vld [vmem:[#allocation9 + $0x278] sm:$0xff]
    %v957 = vld [vmem:[#allocation9 + $0x288] sm:$0xff]
    %v958 = vld [vmem:[#allocation9 + $0x290] sm:$0xff]
    %v959 = vld [vmem:[#allocation9 + $0x2a0] sm:$0xff]
    %v960 = vld [vmem:[#allocation9 + $0x2a8] sm:$0xff]
    %v961 = vld [vmem:[#allocation9 + $0x2b8] sm:$0xff]
    %v962 = vld [vmem:[#allocation9 + $0x2c0] sm:$0xff]
    %v963 = vld [vmem:[#allocation9 + $0x2d0] sm:$0xff]
    %v964 = vld [vmem:[#allocation9 + $0x2d8] sm:$0xff]
    %v965 = vld [vmem:[#allocation9 + $0x2e8] sm:$0xff]
    %v966 = vld [vmem:[#allocation9 + $0x2f0] sm:$0xff]
    %v967 = vld [vmem:[#allocation9 + $0x10] sm:$0xff]
    %v968 = vld [vmem:[#allocation9 + $0x28] sm:$0xff]
    %v969 = vld [vmem:[#allocation9 + $0x40] sm:$0xff]
    %v970 = vld [vmem:[#allocation9 + $0x58] sm:$0xff]
    %v971 = vld [vmem:[#allocation9 + $0x70] sm:$0xff]
    %v972 = vld [vmem:[#allocation9 + $0x88] sm:$0xff]
    %v973 = vld [vmem:[#allocation9 + $0xa0] sm:$0xff]
    %v974 = vld [vmem:[#allocation9 + $0xb8] sm:$0xff]
    %v975 = vld [vmem:[#allocation9 + $0xd0] sm:$0xff]
    %v976 = vld [vmem:[#allocation9 + $0xe8] sm:$0xff]
    %v977 = vld [vmem:[#allocation9 + $0x100] sm:$0xff]
    %v978 = vld [vmem:[#allocation9 + $0x118] sm:$0xff]
    %v979 = vld [vmem:[#allocation9 + $0x130] sm:$0xff]
    %v980 = vld [vmem:[#allocation9 + $0x148] sm:$0xff]
    %v981 = vld [vmem:[#allocation9 + $0x160] sm:$0xff]
    %v982 = vld [vmem:[#allocation9 + $0x178] sm:$0xff]
    %v983 = vld [vmem:[#allocation9 + $0x190] sm:$0xff]
    %v984 = vld [vmem:[#allocation9 + $0x1a8] sm:$0xff]
    %v985 = vld [vmem:[#allocation9 + $0x1c0] sm:$0xff]
    %v986 = vld [vmem:[#allocation9 + $0x1d8] sm:$0xff]
    %v987 = vld [vmem:[#allocation9 + $0x1f0] sm:$0xff]
    %v988 = vld [vmem:[#allocation9 + $0x208] sm:$0xff]
    %v989 = vld [vmem:[#allocation9 + $0x220] sm:$0xff]
    %v990 = vld [vmem:[#allocation9 + $0x238] sm:$0xff]
    %v991 = vld [vmem:[#allocation9 + $0x250] sm:$0xff]
    %v992 = vld [vmem:[#allocation9 + $0x268] sm:$0xff]
    %v993 = vld [vmem:[#allocation9 + $0x280] sm:$0xff]
    %v994 = vld [vmem:[#allocation9 + $0x298] sm:$0xff]
    %v995 = vld [vmem:[#allocation9 + $0x2b0] sm:$0xff]
    %v996 = vld [vmem:[#allocation9 + $0x2c8] sm:$0xff]
    %v997 = vld [vmem:[#allocation9 + $0x2e0] sm:$0xff]
    %v998 = vld [vmem:[#allocation9 + $0x2f8] sm:$0xff]
    %v999 = vld [vmem:[%s6] sm:$0xf]
    %v1001 = vlaneseq
    %v1002 = vshrl.u32 %v1001, 7
    %v1003 = vsub.s32 0, %v1002
    %v1004 = vrot.slane %v999, %v1003
    %v1005 = vlaneseq
    %v1006 = vshrl.u32 %v1005, 7
    %v1007 = vsub.s32 1, %v1006
    %v1008 = vrot.slane %v999, %v1007
    %v1009 = vlaneseq
    %v1010 = vshrl.u32 %v1009, 7
    %v1011 = vsub.s32 2, %v1010
    %v1012 = vrot.slane %v999, %v1011
    %v1013 = vlaneseq
    %v1014 = vshrl.u32 %v1013, 7
    %v1015 = vsub.s32 3, %v1014
    %v1016 = vrot.slane %v999, %v1015
    %v1021 = vld [vmem:[%s6 + $0x4] sm:$0x3]
    %v1023 = vlaneseq
    %v1024 = vshrl.u32 %v1023, 7
    %v1025 = vsub.s32 0, %v1024
    %v1026 = vrot.slane %v1021, %v1025
    %v1027 = vlaneseq
    %v1028 = vshrl.u32 %v1027, 7
    %v1029 = vsub.s32 1, %v1028
    %v1030 = vrot.slane %v1021, %v1029
    %v1033 = vld [vmem:[#allocation11] sm:$0xff]
    %v1034 = vld [vmem:[#allocation11 + $0x8] sm:$0xff]
    %v1035 = vld [vmem:[#allocation11 + $0x10] sm:$0xff]
    %v1036 = vld [vmem:[#allocation11 + $0x18] sm:$0xff]
    %v1037 = vld [vmem:[#allocation2] sm:$0xff]
    %v1038 = vld [vmem:[#allocation2 + $0x8] sm:$0xff]
    %v1039 = vld [vmem:[#allocation2 + $0x10] sm:$0xff]
    %v1040 = vld [vmem:[#allocation2 + $0x18] sm:$0xff]
    %v1041 = vld [vmem:[#allocation2 + $0x20] sm:$0xff]
    %v1042 = vld [vmem:[#allocation2 + $0x28] sm:$0xff]
    %v1043 = vld [vmem:[#allocation2 + $0x30] sm:$0xff]
    %v1044 = vld [vmem:[#allocation2 + $0x38] sm:$0xff]
    %v1045 = vld [vmem:[#allocation2 + $0x40] sm:$0xff]
    %v1046 = vld [vmem:[#allocation2 + $0x48] sm:$0xff]
    %v1047 = vld [vmem:[#allocation2 + $0x50] sm:$0xff]
    %v1048 = vld [vmem:[#allocation2 + $0x58] sm:$0xff]
    %v1049 = vpack.c.bf16 %v1035, %v1033
    %v1050 = vpack.c.bf16 %v1036, %v1034
    %v1115 = vunpack.c.l.b16 %v903
    %v1116 = vunpack.c.h.b16 %v903
    %v1117 = vunpack.c.l.b16 %v904
    %v1118 = vunpack.c.h.b16 %v904
    %v1119 = vunpack.c.l.b16 %v905
    %v1120 = vunpack.c.h.b16 %v905
    %v1121 = vunpack.c.l.b16 %v906
    %v1122 = vunpack.c.h.b16 %v906
    %v1123 = vunpack.c.l.b16 %v907
    %v1124 = vunpack.c.h.b16 %v907
    %v1125 = vunpack.c.l.b16 %v908
    %v1126 = vunpack.c.h.b16 %v908
    %v1127 = vunpack.c.l.b16 %v909
    %v1128 = vunpack.c.h.b16 %v909
    %v1129 = vunpack.c.l.b16 %v910
    %v1130 = vunpack.c.h.b16 %v910
    %v1131 = vunpack.c.l.b16 %v911
    %v1132 = vunpack.c.h.b16 %v911
    %v1133 = vunpack.c.l.b16 %v912
    %v1134 = vunpack.c.h.b16 %v912
    %v1135 = vunpack.c.l.b16 %v913
    %v1136 = vunpack.c.h.b16 %v913
    %v1137 = vunpack.c.l.b16 %v914
    %v1138 = vunpack.c.h.b16 %v914
    %v1139 = vunpack.c.l.b16 %v915
    %v1140 = vunpack.c.h.b16 %v915
    %v1141 = vunpack.c.l.b16 %v916
    %v1142 = vunpack.c.h.b16 %v916
    %v1143 = vunpack.c.l.b16 %v917
    %v1144 = vunpack.c.h.b16 %v917
    %v1145 = vunpack.c.l.b16 %v918
    %v1146 = vunpack.c.h.b16 %v918
    %v1147 = vunpack.c.l.b16 %v919
    %v1148 = vunpack.c.h.b16 %v919
    %v1149 = vunpack.c.l.b16 %v920
    %v1150 = vunpack.c.h.b16 %v920
    %v1151 = vunpack.c.l.b16 %v921
    %v1152 = vunpack.c.h.b16 %v921
    %v1153 = vunpack.c.l.b16 %v922
    %v1154 = vunpack.c.h.b16 %v922
    %v1155 = vunpack.c.l.b16 %v923
    %v1156 = vunpack.c.h.b16 %v923
    %v1157 = vunpack.c.l.b16 %v924
    %v1158 = vunpack.c.h.b16 %v924
    %v1159 = vunpack.c.l.b16 %v925
    %v1160 = vunpack.c.h.b16 %v925
    %v1161 = vunpack.c.l.b16 %v926
    %v1162 = vunpack.c.h.b16 %v926
    %v1163 = vunpack.c.l.b16 %v927
    %v1164 = vunpack.c.h.b16 %v927
    %v1165 = vunpack.c.l.b16 %v928
    %v1166 = vunpack.c.h.b16 %v928
    %v1167 = vunpack.c.l.b16 %v929
    %v1168 = vunpack.c.h.b16 %v929
    %v1169 = vunpack.c.l.b16 %v930
    %v1170 = vunpack.c.h.b16 %v930
    %v1171 = vunpack.c.l.b16 %v931
    %v1172 = vunpack.c.h.b16 %v931
    %v1173 = vunpack.c.l.b16 %v932
    %v1174 = vunpack.c.h.b16 %v932
    %v1175 = vunpack.c.l.b16 %v933
    %v1176 = vunpack.c.h.b16 %v933
    %v1177 = vunpack.c.l.b16 %v934
    %v1178 = vunpack.c.h.b16 %v934
    %v1179 = vunpack.c.l.b16 %v935
    %v1180 = vunpack.c.h.b16 %v935
    %v1181 = vunpack.c.l.b16 %v936
    %v1182 = vunpack.c.h.b16 %v936
    %v1183 = vunpack.c.l.b16 %v937
    %v1184 = vunpack.c.h.b16 %v937
    %v1185 = vunpack.c.l.b16 %v938
    %v1186 = vunpack.c.h.b16 %v938
    %v1187 = vunpack.c.l.b16 %v939
    %v1188 = vunpack.c.h.b16 %v939
    %v1189 = vunpack.c.l.b16 %v940
    %v1190 = vunpack.c.h.b16 %v940
    %v1191 = vunpack.c.l.b16 %v941
    %v1192 = vunpack.c.h.b16 %v941
    %v1193 = vunpack.c.l.b16 %v942
    %v1194 = vunpack.c.h.b16 %v942
    %v1195 = vunpack.c.l.b16 %v943
    %v1196 = vunpack.c.h.b16 %v943
    %v1197 = vunpack.c.l.b16 %v944
    %v1198 = vunpack.c.h.b16 %v944
    %v1199 = vunpack.c.l.b16 %v945
    %v1200 = vunpack.c.h.b16 %v945
    %v1201 = vunpack.c.l.b16 %v946
    %v1202 = vunpack.c.h.b16 %v946
    %v1203 = vunpack.c.l.b16 %v947
    %v1204 = vunpack.c.h.b16 %v947
    %v1205 = vunpack.c.l.b16 %v948
    %v1206 = vunpack.c.h.b16 %v948
    %v1207 = vunpack.c.l.b16 %v949
    %v1208 = vunpack.c.h.b16 %v949
    %v1209 = vunpack.c.l.b16 %v950
    %v1210 = vunpack.c.h.b16 %v950
    %v1211 = vunpack.c.l.b16 %v951
    %v1212 = vunpack.c.h.b16 %v951
    %v1213 = vunpack.c.l.b16 %v952
    %v1214 = vunpack.c.h.b16 %v952
    %v1215 = vunpack.c.l.b16 %v953
    %v1216 = vunpack.c.h.b16 %v953
    %v1217 = vunpack.c.l.b16 %v954
    %v1218 = vunpack.c.h.b16 %v954
    %v1219 = vunpack.c.l.b16 %v955
    %v1220 = vunpack.c.h.b16 %v955
    %v1221 = vunpack.c.l.b16 %v956
    %v1222 = vunpack.c.h.b16 %v956
    %v1223 = vunpack.c.l.b16 %v957
    %v1224 = vunpack.c.h.b16 %v957
    %v1225 = vunpack.c.l.b16 %v958
    %v1226 = vunpack.c.h.b16 %v958
    %v1227 = vunpack.c.l.b16 %v959
    %v1228 = vunpack.c.h.b16 %v959
    %v1229 = vunpack.c.l.b16 %v960
    %v1230 = vunpack.c.h.b16 %v960
    %v1231 = vunpack.c.l.b16 %v961
    %v1232 = vunpack.c.h.b16 %v961
    %v1233 = vunpack.c.l.b16 %v962
    %v1234 = vunpack.c.h.b16 %v962
    %v1235 = vunpack.c.l.b16 %v963
    %v1236 = vunpack.c.h.b16 %v963
    %v1237 = vunpack.c.l.b16 %v964
    %v1238 = vunpack.c.h.b16 %v964
    %v1239 = vunpack.c.l.b16 %v965
    %v1240 = vunpack.c.h.b16 %v965
    %v1241 = vunpack.c.l.b16 %v966
    %v1242 = vunpack.c.h.b16 %v966
    %v1243 = vpack.c.b16 %v1119, %v1115
    %v1244 = vpack.c.b16 %v1120, %v1116
    %v1245 = vpack.c.b16 %v1121, %v1117
    %v1246 = vpack.c.b16 %v1122, %v1118
    %v1247 = vpack.c.b16 %v1127, %v1123
    %v1248 = vpack.c.b16 %v1128, %v1124
    %v1249 = vpack.c.b16 %v1129, %v1125
    %v1250 = vpack.c.b16 %v1130, %v1126
    %v1251 = vpack.c.b16 %v1135, %v1131
    %v1252 = vpack.c.b16 %v1136, %v1132
    %v1253 = vpack.c.b16 %v1137, %v1133
    %v1254 = vpack.c.b16 %v1138, %v1134
    %v1255 = vpack.c.b16 %v1143, %v1139
    %v1256 = vpack.c.b16 %v1144, %v1140
    %v1257 = vpack.c.b16 %v1145, %v1141
    %v1258 = vpack.c.b16 %v1146, %v1142
    %v1259 = vpack.c.b16 %v1151, %v1147
    %v1260 = vpack.c.b16 %v1152, %v1148
    %v1261 = vpack.c.b16 %v1153, %v1149
    %v1262 = vpack.c.b16 %v1154, %v1150
    %v1263 = vpack.c.b16 %v1159, %v1155
    %v1264 = vpack.c.b16 %v1160, %v1156
    %v1265 = vpack.c.b16 %v1161, %v1157
    %v1266 = vpack.c.b16 %v1162, %v1158
    %v1267 = vpack.c.b16 %v1167, %v1163
    %v1268 = vpack.c.b16 %v1168, %v1164
    %v1269 = vpack.c.b16 %v1169, %v1165
    %v1270 = vpack.c.b16 %v1170, %v1166
    %v1271 = vpack.c.b16 %v1175, %v1171
    %v1272 = vpack.c.b16 %v1176, %v1172
    %v1273 = vpack.c.b16 %v1177, %v1173
    %v1274 = vpack.c.b16 %v1178, %v1174
    %v1275 = vpack.c.b16 %v1183, %v1179
    %v1276 = vpack.c.b16 %v1184, %v1180
    %v1277 = vpack.c.b16 %v1185, %v1181
    %v1278 = vpack.c.b16 %v1186, %v1182
    %v1279 = vpack.c.b16 %v1191, %v1187
    %v1280 = vpack.c.b16 %v1192, %v1188
    %v1281 = vpack.c.b16 %v1193, %v1189
    %v1282 = vpack.c.b16 %v1194, %v1190
    %v1283 = vpack.c.b16 %v1199, %v1195
    %v1284 = vpack.c.b16 %v1200, %v1196
    %v1285 = vpack.c.b16 %v1201, %v1197
    %v1286 = vpack.c.b16 %v1202, %v1198
    %v1287 = vpack.c.b16 %v1207, %v1203
    %v1288 = vpack.c.b16 %v1208, %v1204
    %v1289 = vpack.c.b16 %v1209, %v1205
    %v1290 = vpack.c.b16 %v1210, %v1206
    %v1291 = vpack.c.b16 %v1215, %v1211
    %v1292 = vpack.c.b16 %v1216, %v1212
    %v1293 = vpack.c.b16 %v1217, %v1213
    %v1294 = vpack.c.b16 %v1218, %v1214
    %v1295 = vpack.c.b16 %v1223, %v1219
    %v1296 = vpack.c.b16 %v1224, %v1220
    %v1297 = vpack.c.b16 %v1225, %v1221
    %v1298 = vpack.c.b16 %v1226, %v1222
    %v1299 = vpack.c.b16 %v1231, %v1227
    %v1300 = vpack.c.b16 %v1232, %v1228
    %v1301 = vpack.c.b16 %v1233, %v1229
    %v1302 = vpack.c.b16 %v1234, %v1230
    %v1303 = vpack.c.b16 %v1239, %v1235
    %v1304 = vpack.c.b16 %v1240, %v1236
    %v1305 = vpack.c.b16 %v1241, %v1237
    %v1306 = vpack.c.b16 %v1242, %v1238
    %1371 = vmatprep.subr.bf16.mxu0 %v1244
    %1372 = vmatpush1.bf16.msra.mxu0 %v1243
    %1373 = vmatprep.subr.bf16.mxu0 %v1248
    %1374 = vmatpush1.bf16.msra.mxu0 %v1247
    %1375 = vmatprep.subr.bf16.mxu0 %v1252
    %1376 = vmatpush1.bf16.msra.mxu0 %v1251
    %1377 = vmatprep.subr.bf16.mxu0 %v1256
    %1378 = vmatpush1.bf16.msra.mxu0 %v1255
    %1379 = vmatprep.subr.bf16.mxu0 %v1260
    %1380 = vmatpush1.bf16.msra.mxu0 %v1259
    %1381 = vmatprep.subr.bf16.mxu0 %v1264
    %1382 = vmatpush1.bf16.msra.mxu0 %v1263
    %1383 = vmatprep.subr.bf16.mxu0 %v1268
    %1384 = vmatpush1.bf16.msra.mxu0 %v1267
    %1385 = vmatprep.subr.bf16.mxu0 %v1272
    %1386 = vmatpush1.bf16.msra.mxu0 %v1271
    %1387 = vmatprep.subr.bf16.mxu0 %v1276
    %1388 = vmatpush1.bf16.msra.mxu0 %v1275
    %1389 = vmatprep.subr.bf16.mxu0 %v1280
    %1390 = vmatpush1.bf16.msra.mxu0 %v1279
    %1391 = vmatprep.subr.bf16.mxu0 %v1284
    %1392 = vmatpush1.bf16.msra.mxu0 %v1283
    %1393 = vmatprep.subr.bf16.mxu0 %v1288
    %1394 = vmatpush1.bf16.msra.mxu0 %v1287
    %1395 = vmatprep.subr.bf16.mxu0 %v1292
    %1396 = vmatpush1.bf16.msra.mxu0 %v1291
    %1397 = vmatprep.subr.bf16.mxu0 %v1296
    %1398 = vmatpush1.bf16.msra.mxu0 %v1295
    %1399 = vmatprep.subr.bf16.mxu0 %v1300
    %1400 = vmatpush1.bf16.msra.mxu0 %v1299
    %1401 = vmatprep.subr.bf16.mxu0 %v1304
    %1402 = vmatpush1.bf16.msra.mxu0 %v1303
    %1403 = vmatprep.mubr.bf16.mxu0 %v1050
    %1404 = vmatmul.mubr.bf16.gmra.mrb[0].mxu0 %v1049
    %v1405 = vpop.f32.mrb[0].mxu0
    %v1406 = vadd.f32 %v1004, %v1405
    %v1407 = vpop.f32.mrb[0].mxu0
    %v1408 = vadd.f32 %v1008, %v1407
    %v1409 = vpop.f32.mrb[0].mxu0
    %v1410 = vadd.f32 %v1004, %v1409
    %v1411 = vpop.f32.mrb[0].mxu0
    %v1412 = vadd.f32 %v1008, %v1411
    %1413 = vdwg.mxu0
    %1414 = vmatprep.subr.bf16.mxu0 %v1246
    %1415 = vmatpush1.bf16.msra.mxu0 %v1245
    %1416 = vmatprep.subr.bf16.mxu0 %v1250
    %1417 = vmatpush1.bf16.msra.mxu0 %v1249
    %1418 = vmatprep.subr.bf16.mxu0 %v1254
    %1419 = vmatpush1.bf16.msra.mxu0 %v1253
    %1420 = vmatprep.subr.bf16.mxu0 %v1258
    %1421 = vmatpush1.bf16.msra.mxu0 %v1257
    %1422 = vmatprep.subr.bf16.mxu0 %v1262
    %1423 = vmatpush1.bf16.msra.mxu0 %v1261
    %1424 = vmatprep.subr.bf16.mxu0 %v1266
    %1425 = vmatpush1.bf16.msra.mxu0 %v1265
    %1426 = vmatprep.subr.bf16.mxu0 %v1270
    %1427 = vmatpush1.bf16.msra.mxu0 %v1269
    %1428 = vmatprep.subr.bf16.mxu0 %v1274
    %1429 = vmatpush1.bf16.msra.mxu0 %v1273
    %1430 = vmatprep.subr.bf16.mxu0 %v1278
    %1431 = vmatpush1.bf16.msra.mxu0 %v1277
    %1432 = vmatprep.subr.bf16.mxu0 %v1282
    %1433 = vmatpush1.bf16.msra.mxu0 %v1281
    %1434 = vmatprep.subr.bf16.mxu0 %v1286
    %1435 = vmatpush1.bf16.msra.mxu0 %v1285
    %1436 = vmatprep.subr.bf16.mxu0 %v1290
    %1437 = vmatpush1.bf16.msra.mxu0 %v1289
    %1438 = vmatprep.subr.bf16.mxu0 %v1294
    %1439 = vmatpush1.bf16.msra.mxu0 %v1293
    %1440 = vmatprep.subr.bf16.mxu0 %v1298
    %1441 = vmatpush1.bf16.msra.mxu0 %v1297
    %1442 = vmatprep.subr.bf16.mxu0 %v1302
    %1443 = vmatpush1.bf16.msra.mxu0 %v1301
    %1444 = vmatprep.subr.bf16.mxu0 %v1306
    %1445 = vmatpush1.bf16.msra.mxu0 %v1305
    %1446 = vmatprep.mubr.bf16.mxu0 %v1050
    %1447 = vmatmul.mubr.bf16.gmra.mrb[0].mxu0 %v1049
    %v1448 = vpop.f32.mrb[0].mxu0
    %v1449 = vadd.f32 %v1012, %v1448
    %v1450 = vpop.f32.mrb[0].mxu0
    %v1451 = vadd.f32 %v1016, %v1450
    %v1452 = vpop.f32.mrb[0].mxu0
    %v1453 = vadd.f32 %v1012, %v1452
    %v1454 = vpop.f32.mrb[0].mxu0
    %v1455 = vadd.f32 %v1016, %v1454
    %1456 = vdwg.mxu0
    %v1489 = vunpack.c.l.b16 %v967
    %v1490 = vunpack.c.h.b16 %v967
    %v1491 = vunpack.c.l.b16 %v968
    %v1492 = vunpack.c.h.b16 %v968
    %v1493 = vunpack.c.l.b16 %v969
    %v1494 = vunpack.c.h.b16 %v969
    %v1495 = vunpack.c.l.b16 %v970
    %v1496 = vunpack.c.h.b16 %v970
    %v1497 = vunpack.c.l.b16 %v971
    %v1498 = vunpack.c.h.b16 %v971
    %v1499 = vunpack.c.l.b16 %v972
    %v1500 = vunpack.c.h.b16 %v972
    %v1501 = vunpack.c.l.b16 %v973
    %v1502 = vunpack.c.h.b16 %v973
    %v1503 = vunpack.c.l.b16 %v974
    %v1504 = vunpack.c.h.b16 %v974
    %v1505 = vunpack.c.l.b16 %v975
    %v1506 = vunpack.c.h.b16 %v975
    %v1507 = vunpack.c.l.b16 %v976
    %v1508 = vunpack.c.h.b16 %v976
    %v1509 = vunpack.c.l.b16 %v977
    %v1510 = vunpack.c.h.b16 %v977
    %v1511 = vunpack.c.l.b16 %v978
    %v1512 = vunpack.c.h.b16 %v978
    %v1513 = vunpack.c.l.b16 %v979
    %v1514 = vunpack.c.h.b16 %v979
    %v1515 = vunpack.c.l.b16 %v980
    %v1516 = vunpack.c.h.b16 %v980
    %v1517 = vunpack.c.l.b16 %v981
    %v1518 = vunpack.c.h.b16 %v981
    %v1519 = vunpack.c.l.b16 %v982
    %v1520 = vunpack.c.h.b16 %v982
    %v1521 = vunpack.c.l.b16 %v983
    %v1522 = vunpack.c.h.b16 %v983
    %v1523 = vunpack.c.l.b16 %v984
    %v1524 = vunpack.c.h.b16 %v984
    %v1525 = vunpack.c.l.b16 %v985
    %v1526 = vunpack.c.h.b16 %v985
    %v1527 = vunpack.c.l.b16 %v986
    %v1528 = vunpack.c.h.b16 %v986
    %v1529 = vunpack.c.l.b16 %v987
    %v1530 = vunpack.c.h.b16 %v987
    %v1531 = vunpack.c.l.b16 %v988
    %v1532 = vunpack.c.h.b16 %v988
    %v1533 = vunpack.c.l.b16 %v989
    %v1534 = vunpack.c.h.b16 %v989
    %v1535 = vunpack.c.l.b16 %v990
    %v1536 = vunpack.c.h.b16 %v990
    %v1537 = vunpack.c.l.b16 %v991
    %v1538 = vunpack.c.h.b16 %v991
    %v1539 = vunpack.c.l.b16 %v992
    %v1540 = vunpack.c.h.b16 %v992
    %v1541 = vunpack.c.l.b16 %v993
    %v1542 = vunpack.c.h.b16 %v993
    %v1543 = vunpack.c.l.b16 %v994
    %v1544 = vunpack.c.h.b16 %v994
    %v1545 = vunpack.c.l.b16 %v995
    %v1546 = vunpack.c.h.b16 %v995
    %v1547 = vunpack.c.l.b16 %v996
    %v1548 = vunpack.c.h.b16 %v996
    %v1549 = vunpack.c.l.b16 %v997
    %v1550 = vunpack.c.h.b16 %v997
    %v1551 = vunpack.c.l.b16 %v998
    %v1552 = vunpack.c.h.b16 %v998
    %v1553 = vpack.c.b16 %v1491, %v1489
    %v1554 = vpack.c.b16 %v1492, %v1490
    %v1555 = vpack.c.b16 %v1495, %v1493
    %v1556 = vpack.c.b16 %v1496, %v1494
    %v1557 = vpack.c.b16 %v1499, %v1497
    %v1558 = vpack.c.b16 %v1500, %v1498
    %v1559 = vpack.c.b16 %v1503, %v1501
    %v1560 = vpack.c.b16 %v1504, %v1502
    %v1561 = vpack.c.b16 %v1507, %v1505
    %v1562 = vpack.c.b16 %v1508, %v1506
    %v1563 = vpack.c.b16 %v1511, %v1509
    %v1564 = vpack.c.b16 %v1512, %v1510
    %v1565 = vpack.c.b16 %v1515, %v1513
    %v1566 = vpack.c.b16 %v1516, %v1514
    %v1567 = vpack.c.b16 %v1519, %v1517
    %v1568 = vpack.c.b16 %v1520, %v1518
    %v1569 = vpack.c.b16 %v1523, %v1521
    %v1570 = vpack.c.b16 %v1524, %v1522
    %v1571 = vpack.c.b16 %v1527, %v1525
    %v1572 = vpack.c.b16 %v1528, %v1526
    %v1573 = vpack.c.b16 %v1531, %v1529
    %v1574 = vpack.c.b16 %v1532, %v1530
    %v1575 = vpack.c.b16 %v1535, %v1533
    %v1576 = vpack.c.b16 %v1536, %v1534
    %v1577 = vpack.c.b16 %v1539, %v1537
    %v1578 = vpack.c.b16 %v1540, %v1538
    %v1579 = vpack.c.b16 %v1543, %v1541
    %v1580 = vpack.c.b16 %v1544, %v1542
    %v1581 = vpack.c.b16 %v1547, %v1545
    %v1582 = vpack.c.b16 %v1548, %v1546
    %v1583 = vpack.c.b16 %v1551, %v1549
    %v1584 = vpack.c.b16 %v1552, %v1550
    %1617 = vmatprep.subr.bf16.mxu0 %v1554
    %1618 = vmatpush1.bf16.msra.mxu0 %v1553
    %1619 = vmatprep.subr.bf16.mxu0 %v1556
    %1620 = vmatpush1.bf16.msra.mxu0 %v1555
    %1621 = vmatprep.subr.bf16.mxu0 %v1558
    %1622 = vmatpush1.bf16.msra.mxu0 %v1557
    %1623 = vmatprep.subr.bf16.mxu0 %v1560
    %1624 = vmatpush1.bf16.msra.mxu0 %v1559
    %1625 = vmatprep.subr.bf16.mxu0 %v1562
    %1626 = vmatpush1.bf16.msra.mxu0 %v1561
    %1627 = vmatprep.subr.bf16.mxu0 %v1564
    %1628 = vmatpush1.bf16.msra.mxu0 %v1563
    %1629 = vmatprep.subr.bf16.mxu0 %v1566
    %1630 = vmatpush1.bf16.msra.mxu0 %v1565
    %1631 = vmatprep.subr.bf16.mxu0 %v1568
    %1632 = vmatpush1.bf16.msra.mxu0 %v1567
    %1633 = vmatprep.subr.bf16.mxu0 %v1570
    %1634 = vmatpush1.bf16.msra.mxu0 %v1569
    %1635 = vmatprep.subr.bf16.mxu0 %v1572
    %1636 = vmatpush1.bf16.msra.mxu0 %v1571
    %1637 = vmatprep.subr.bf16.mxu0 %v1574
    %1638 = vmatpush1.bf16.msra.mxu0 %v1573
    %1639 = vmatprep.subr.bf16.mxu0 %v1576
    %1640 = vmatpush1.bf16.msra.mxu0 %v1575
    %1641 = vmatprep.subr.bf16.mxu0 %v1578
    %1642 = vmatpush1.bf16.msra.mxu0 %v1577
    %1643 = vmatprep.subr.bf16.mxu0 %v1580
    %1644 = vmatpush1.bf16.msra.mxu0 %v1579
    %1645 = vmatprep.subr.bf16.mxu0 %v1582
    %1646 = vmatpush1.bf16.msra.mxu0 %v1581
    %1647 = vmatprep.subr.bf16.mxu0 %v1584
    %1648 = vmatpush1.bf16.msra.mxu0 %v1583
    %1649 = vmatprep.mubr.bf16.mxu0 %v1050
    %1650 = vmatmul.mubr.bf16.gmra.mrb[0].mxu0 %v1049
    %v1651 = vpop.f32.mrb[0].mxu0
    %v1652 = vadd.f32 %v1026, %v1651
    %v1653 = vpop.f32.mrb[0].mxu0
    %v1654 = vadd.f32 %v1030, %v1653
    %v1655 = vpop.f32.mrb[0].mxu0
    %v1656 = vadd.f32 %v1026, %v1655
    %v1657 = vpop.f32.mrb[0].mxu0
    %v1658 = vadd.f32 %v1030, %v1657
    %1659 = vdwg.mxu0
    %v1660 = vadd.f32 %v1037, %v1406
    %v1661 = vadd.f32 %v1038, %v1408
    %v1662 = vadd.f32 %v1043, %v1410
    %v1663 = vadd.f32 %v1044, %v1412
    %v1664 = vxor.u32 %v1660, 2147483648
    %v1665 = vxor.u32 %v1661, 2147483648
    %v1666 = vxor.u32 %v1662, 2147483648
    %v1667 = vxor.u32 %v1663, 2147483648
    %v1668 = vmul.f32 %v1664, 1.442695
    %v1669 = vpow.pop %v1668
    %v1670 = vmul.f32 %v1665, 1.442695
    %v1671 = vpow.pop %v1670
    %v1672 = vmul.f32 %v1666, 1.442695
    %v1673 = vpow.pop %v1672
    %v1674 = vmul.f32 %v1667, 1.442695
    %v1675 = vpow.pop %v1674
    %v1676 = vadd.f32 %v1669, 1.0
    %v1677 = vadd.f32 %v1671, 1.0
    %v1678 = vadd.f32 %v1673, 1.0
    %v1679 = vadd.f32 %v1675, 1.0
    %v1680 = vrcp.pop %v1676
    %v1681 = vmul.f32 1.0, %v1680
    %v1682 = vrcp.pop %v1677
    %v1683 = vmul.f32 1.0, %v1682
    %v1684 = vrcp.pop %v1678
    %v1685 = vmul.f32 1.0, %v1684
    %v1686 = vrcp.pop %v1679
    %v1687 = vmul.f32 1.0, %v1686
    %v1688 = vadd.f32 %v1039, %v1449
    %v1689 = vadd.f32 %v1040, %v1451
    %v1690 = vadd.f32 %v1045, %v1453
    %v1691 = vadd.f32 %v1046, %v1455
    %v1692 = vxor.u32 %v1688, 2147483648
    %v1693 = vxor.u32 %v1689, 2147483648
    %v1694 = vxor.u32 %v1690, 2147483648
    %v1695 = vxor.u32 %v1691, 2147483648
    %v1696 = vmul.f32 %v1692, 1.442695
    %v1697 = vpow.pop %v1696
    %v1698 = vmul.f32 %v1693, 1.442695
    %v1699 = vpow.pop %v1698
    %v1700 = vmul.f32 %v1694, 1.442695
    %v1701 = vpow.pop %v1700
    %v1702 = vmul.f32 %v1695, 1.442695
    %v1703 = vpow.pop %v1702
    %v1704 = vadd.f32 %v1697, 1.0
    %v1705 = vadd.f32 %v1699, 1.0
    %v1706 = vadd.f32 %v1701, 1.0
    %v1707 = vadd.f32 %v1703, 1.0
    %v1708 = vrcp.pop %v1704
    %v1709 = vmul.f32 1.0, %v1708
    %v1710 = vrcp.pop %v1705
    %v1711 = vmul.f32 1.0, %v1710
    %v1712 = vrcp.pop %v1706
    %v1713 = vmul.f32 1.0, %v1712
    %v1714 = vrcp.pop %v1707
    %v1715 = vmul.f32 1.0, %v1714
    %v1716 = vmul.f32 %v1681, %v1652
    %v1717 = vmul.f32 %v1683, %v1654
    %v1718 = vmul.f32 %v1685, %v1656
    %v1719 = vmul.f32 %v1687, %v1658
    %v1720 = vadd.f32 %v1041, %v1716
    %v1721 = vadd.f32 %v1042, %v1717
    %v1722 = vadd.f32 %v1047, %v1718
    %v1723 = vadd.f32 %v1048, %v1719
    %v1724 = vtanh.pop %v1720
    %v1725 = vtanh.pop %v1721
    %v1726 = vtanh.pop %v1722
    %v1727 = vtanh.pop %v1723
    %v1728 = vsub.f32 1.0, %v1709
    %v1729 = vsub.f32 1.0, %v1711
    %v1730 = vsub.f32 1.0, %v1713
    %v1731 = vsub.f32 1.0, %v1715
    %v1732 = vmul.f32 %v1728, %v1724
    %v1733 = vmul.f32 %v1729, %v1725
    %v1734 = vmul.f32 %v1730, %v1726
    %v1735 = vmul.f32 %v1731, %v1727
    %v1736 = vmul.f32 %v1709, %v1033
    %v1737 = vmul.f32 %v1711, %v1034
    %v1738 = vmul.f32 %v1713, %v1035
    %v1739 = vmul.f32 %v1715, %v1036
    %v1740 = vadd.f32 %v1732, %v1736
    %v1741 = vadd.f32 %v1733, %v1737
    %v1742 = vadd.f32 %v1734, %v1738
    %v1743 = vadd.f32 %v1735, %v1739
    %s1744 = scalar_lea.vmem [#allocation2], 96
    %v1745 = vld [vmem:[%s1744] sm:$0xff]
    %v1746 = vld [vmem:[%s1744 + $0x8] sm:$0xff]
    %v1747 = vld [vmem:[%s1744 + $0x10] sm:$0xff]
    %v1748 = vld [vmem:[%s1744 + $0x18] sm:$0xff]
    %v1749 = vld [vmem:[%s1744 + $0x20] sm:$0xff]
    %v1750 = vld [vmem:[%s1744 + $0x28] sm:$0xff]
    %v1751 = vld [vmem:[%s1744 + $0x30] sm:$0xff]
    %v1752 = vld [vmem:[%s1744 + $0x38] sm:$0xff]
    %v1753 = vld [vmem:[%s1744 + $0x40] sm:$0xff]
    %v1754 = vld [vmem:[%s1744 + $0x48] sm:$0xff]
    %v1755 = vld [vmem:[%s1744 + $0x50] sm:$0xff]
    %v1756 = vld [vmem:[%s1744 + $0x58] sm:$0xff]
    %v1757 = vpack.c.bf16 %v1742, %v1740
    %v1758 = vpack.c.bf16 %v1743, %v1741
    %1759 = vmatprep.subr.bf16.mxu0 %v1244
    %1760 = vmatpush1.bf16.msra.mxu0 %v1243
    %1761 = vmatprep.subr.bf16.mxu0 %v1248
    %1762 = vmatpush1.bf16.msra.mxu0 %v1247
    %1763 = vmatprep.subr.bf16.mxu0 %v1252
    %1764 = vmatpush1.bf16.msra.mxu0 %v1251
    %1765 = vmatprep.subr.bf16.mxu0 %v1256
    %1766 = vmatpush1.bf16.msra.mxu0 %v1255
    %1767 = vmatprep.subr.bf16.mxu0 %v1260
    %1768 = vmatpush1.bf16.msra.mxu0 %v1259
    %1769 = vmatprep.subr.bf16.mxu0 %v1264
    %1770 = vmatpush1.bf16.msra.mxu0 %v1263
    %1771 = vmatprep.subr.bf16.mxu0 %v1268
    %1772 = vmatpush1.bf16.msra.mxu0 %v1267
    %1773 = vmatprep.subr.bf16.mxu0 %v1272
    %1774 = vmatpush1.bf16.msra.mxu0 %v1271
    %1775 = vmatprep.subr.bf16.mxu0 %v1276
    %1776 = vmatpush1.bf16.msra.mxu0 %v1275
    %1777 = vmatprep.subr.bf16.mxu0 %v1280
    %1778 = vmatpush1.bf16.msra.mxu0 %v1279
    %1779 = vmatprep.subr.bf16.mxu0 %v1284
    %1780 = vmatpush1.bf16.msra.mxu0 %v1283
    %1781 = vmatprep.subr.bf16.mxu0 %v1288
    %1782 = vmatpush1.bf16.msra.mxu0 %v1287
    %1783 = vmatprep.subr.bf16.mxu0 %v1292
    %1784 = vmatpush1.bf16.msra.mxu0 %v1291
    %1785 = vmatprep.subr.bf16.mxu0 %v1296
    %1786 = vmatpush1.bf16.msra.mxu0 %v1295
    %1787 = vmatprep.subr.bf16.mxu0 %v1300
    %1788 = vmatpush1.bf16.msra.mxu0 %v1299
    %1789 = vmatprep.subr.bf16.mxu0 %v1304
    %1790 = vmatpush1.bf16.msra.mxu0 %v1303
    %1791 = vmatprep.mubr.bf16.mxu0 %v1758
    %1792 = vmatmul.mubr.bf16.gmra.mrb[0].mxu0 %v1757
    %v1793 = vpop.f32.mrb[0].mxu0
    %v1794 = vadd.f32 %v1004, %v1793
    %v1795 = vpop.f32.mrb[0].mxu0
    %v1796 = vadd.f32 %v1008, %v1795
    %v1797 = vpop.f32.mrb[0].mxu0
    %v1798 = vadd.f32 %v1004, %v1797
    %v1799 = vpop.f32.mrb[0].mxu0
    %v1800 = vadd.f32 %v1008, %v1799
    %1801 = vdwg.mxu0
    %1802 = vmatprep.subr.bf16.mxu0 %v1246
    %1803 = vmatpush1.bf16.msra.mxu0 %v1245
    %1804 = vmatprep.subr.bf16.mxu0 %v1250
    %1805 = vmatpush1.bf16.msra.mxu0 %v1249
    %1806 = vmatprep.subr.bf16.mxu0 %v1254
    %1807 = vmatpush1.bf16.msra.mxu0 %v1253
    %1808 = vmatprep.subr.bf16.mxu0 %v1258
    %1809 = vmatpush1.bf16.msra.mxu0 %v1257
    %1810 = vmatprep.subr.bf16.mxu0 %v1262
    %1811 = vmatpush1.bf16.msra.mxu0 %v1261
    %1812 = vmatprep.subr.bf16.mxu0 %v1266
    %1813 = vmatpush1.bf16.msra.mxu0 %v1265
    %1814 = vmatprep.subr.bf16.mxu0 %v1270
    %1815 = vmatpush1.bf16.msra.mxu0 %v1269
    %1816 = vmatprep.subr.bf16.mxu0 %v1274
    %1817 = vmatpush1.bf16.msra.mxu0 %v1273
    %1818 = vmatprep.subr.bf16.mxu0 %v1278
    %1819 = vmatpush1.bf16.msra.mxu0 %v1277
    %1820 = vmatprep.subr.bf16.mxu0 %v1282
    %1821 = vmatpush1.bf16.msra.mxu0 %v1281
    %1822 = vmatprep.subr.bf16.mxu0 %v1286
    %1823 = vmatpush1.bf16.msra.mxu0 %v1285
    %1824 = vmatprep.subr.bf16.mxu0 %v1290
    %1825 = vmatpush1.bf16.msra.mxu0 %v1289
    %1826 = vmatprep.subr.bf16.mxu0 %v1294
    %1827 = vmatpush1.bf16.msra.mxu0 %v1293
    %1828 = vmatprep.subr.bf16.mxu0 %v1298
    %1829 = vmatpush1.bf16.msra.mxu0 %v1297
    %1830 = vmatprep.subr.bf16.mxu0 %v1302
    %1831 = vmatpush1.bf16.msra.mxu0 %v1301
    %1832 = vmatprep.subr.bf16.mxu0 %v1306
    %1833 = vmatpush1.bf16.msra.mxu0 %v1305
    %1834 = vmatprep.mubr.bf16.mxu0 %v1758
    %1835 = vmatmul.mubr.bf16.gmra.mrb[0].mxu0 %v1757
    %v1836 = vpop.f32.mrb[0].mxu0
    %v1837 = vadd.f32 %v1012, %v1836
    %v1838 = vpop.f32.mrb[0].mxu0
    %v1839 = vadd.f32 %v1016, %v1838
    %v1840 = vpop.f32.mrb[0].mxu0
    %v1841 = vadd.f32 %v1012, %v1840
    %v1842 = vpop.f32.mrb[0].mxu0
    %v1843 = vadd.f32 %v1016, %v1842
    %1844 = vdwg.mxu0
    %1845 = vmatprep.subr.bf16.mxu0 %v1554
    %1846 = vmatpush1.bf16.msra.mxu0 %v1553
    %1847 = vmatprep.subr.bf16.mxu0 %v1556
    %1848 = vmatpush1.bf16.msra.mxu0 %v1555
    %1849 = vmatprep.subr.bf16.mxu0 %v1558
    %1850 = vmatpush1.bf16.msra.mxu0 %v1557
    %1851 = vmatprep.subr.bf16.mxu0 %v1560
    %1852 = vmatpush1.bf16.msra.mxu0 %v1559
    %1853 = vmatprep.subr.bf16.mxu0 %v1562
    %1854 = vmatpush1.bf16.msra.mxu0 %v1561
    %1855 = vmatprep.subr.bf16.mxu0 %v1564
    %1856 = vmatpush1.bf16.msra.mxu0 %v1563
    %1857 = vmatprep.subr.bf16.mxu0 %v1566
    %1858 = vmatpush1.bf16.msra.mxu0 %v1565
    %1859 = vmatprep.subr.bf16.mxu0 %v1568
    %1860 = vmatpush1.bf16.msra.mxu0 %v1567
    %1861 = vmatprep.subr.bf16.mxu0 %v1570
    %1862 = vmatpush1.bf16.msra.mxu0 %v1569
    %1863 = vmatprep.subr.bf16.mxu0 %v1572
    %1864 = vmatpush1.bf16.msra.mxu0 %v1571
    %1865 = vmatprep.subr.bf16.mxu0 %v1574
    %1866 = vmatpush1.bf16.msra.mxu0 %v1573
    %1867 = vmatprep.subr.bf16.mxu0 %v1576
    %1868 = vmatpush1.bf16.msra.mxu0 %v1575
    %1869 = vmatprep.subr.bf16.mxu0 %v1578
    %1870 = vmatpush1.bf16.msra.mxu0 %v1577
    %1871 = vmatprep.subr.bf16.mxu0 %v1580
    %1872 = vmatpush1.bf16.msra.mxu0 %v1579
    %1873 = vmatprep.subr.bf16.mxu0 %v1582
    %1874 = vmatpush1.bf16.msra.mxu0 %v1581
    %1875 = vmatprep.subr.bf16.mxu0 %v1584
    %1876 = vmatpush1.bf16.msra.mxu0 %v1583
    %1877 = vmatprep.mubr.bf16.mxu0 %v1758
    %1878 = vmatmul.mubr.bf16.gmra.mrb[0].mxu0 %v1757
    %v1879 = vpop.f32.mrb[0].mxu0
    %v1880 = vadd.f32 %v1026, %v1879
    %v1881 = vpop.f32.mrb[0].mxu0
    %v1882 = vadd.f32 %v1030, %v1881
    %v1883 = vpop.f32.mrb[0].mxu0
    %v1884 = vadd.f32 %v1026, %v1883
    %v1885 = vpop.f32.mrb[0].mxu0
    %v1886 = vadd.f32 %v1030, %v1885
    %1887 = vdwg.mxu0
    %v1888 = vadd.f32 %v1745, %v1794
    %v1889 = vadd.f32 %v1746, %v1796
    %v1890 = vadd.f32 %v1751, %v1798
    %v1891 = vadd.f32 %v1752, %v1800
    %v1892 = vxor.u32 %v1888, 2147483648
    %v1893 = vxor.u32 %v1889, 2147483648
    %v1894 = vxor.u32 %v1890, 2147483648
    %v1895 = vxor.u32 %v1891, 2147483648
    %v1896 = vmul.f32 %v1892, 1.442695
    %v1897 = vpow.pop %v1896
    %v1898 = vmul.f32 %v1893, 1.442695
    %v1899 = vpow.pop %v1898
    %v1900 = vmul.f32 %v1894, 1.442695
    %v1901 = vpow.pop %v1900
    %v1902 = vmul.f32 %v1895, 1.442695
    %v1903 = vpow.pop %v1902
    %v1904 = vadd.f32 %v1897, 1.0
    %v1905 = vadd.f32 %v1899, 1.0
    %v1906 = vadd.f32 %v1901, 1.0
    %v1907 = vadd.f32 %v1903, 1.0
    %v1908 = vrcp.pop %v1904
    %v1909 = vmul.f32 1.0, %v1908
    %v1910 = vrcp.pop %v1905
    %v1911 = vmul.f32 1.0, %v1910
    %v1912 = vrcp.pop %v1906
    %v1913 = vmul.f32 1.0, %v1912
    %v1914 = vrcp.pop %v1907
    %v1915 = vmul.f32 1.0, %v1914
    %v1916 = vadd.f32 %v1747, %v1837
    %v1917 = vadd.f32 %v1748, %v1839
    %v1918 = vadd.f32 %v1753, %v1841
    %v1919 = vadd.f32 %v1754, %v1843
    %v1920 = vxor.u32 %v1916, 2147483648
    %v1921 = vxor.u32 %v1917, 2147483648
    %v1922 = vxor.u32 %v1918, 2147483648
    %v1923 = vxor.u32 %v1919, 2147483648
    %v1924 = vmul.f32 %v1920, 1.442695
    %v1925 = vpow.pop %v1924
    %v1926 = vmul.f32 %v1921, 1.442695
    %v1927 = vpow.pop %v1926
    %v1928 = vmul.f32 %v1922, 1.442695
    %v1929 = vpow.pop %v1928
    %v1930 = vmul.f32 %v1923, 1.442695
    %v1931 = vpow.pop %v1930
    %v1932 = vadd.f32 %v1925, 1.0
    %v1933 = vadd.f32 %v1927, 1.0
    %v1934 = vadd.f32 %v1929, 1.0
    %v1935 = vadd.f32 %v1931, 1.0
    %v1936 = vrcp.pop %v1932
    %v1937 = vmul.f32 1.0, %v1936
    %v1938 = vrcp.pop %v1933
    %v1939 = vmul.f32 1.0, %v1938
    %v1940 = vrcp.pop %v1934
    %v1941 = vmul.f32 1.0, %v1940
    %v1942 = vrcp.pop %v1935
    %v1943 = vmul.f32 1.0, %v1942
    %v1944 = vmul.f32 %v1909, %v1880
    %v1945 = vmul.f32 %v1911, %v1882
    %v1946 = vmul.f32 %v1913, %v1884
    %v1947 = vmul.f32 %v1915, %v1886
    %v1948 = vadd.f32 %v1749, %v1944
    %v1949 = vadd.f32 %v1750, %v1945
    %v1950 = vadd.f32 %v1755, %v1946
    %v1951 = vadd.f32 %v1756, %v1947
    %v1952 = vtanh.pop %v1948
    %v1953 = vtanh.pop %v1949
    %v1954 = vtanh.pop %v1950
    %v1955 = vtanh.pop %v1951
    %v1956 = vsub.f32 1.0, %v1937
    %v1957 = vsub.f32 1.0, %v1939
    %v1958 = vsub.f32 1.0, %v1941
    %v1959 = vsub.f32 1.0, %v1943
    %v1960 = vmul.f32 %v1956, %v1952
    %v1961 = vmul.f32 %v1957, %v1953
    %v1962 = vmul.f32 %v1958, %v1954
    %v1963 = vmul.f32 %v1959, %v1955
    %v1964 = vmul.f32 %v1937, %v1740
    %v1965 = vmul.f32 %v1939, %v1741
    %v1966 = vmul.f32 %v1941, %v1742
    %v1967 = vmul.f32 %v1943, %v1743
    %v1968 = vadd.f32 %v1960, %v1964
    %v1969 = vadd.f32 %v1961, %v1965
    %v1970 = vadd.f32 %v1962, %v1966
    %v1971 = vadd.f32 %v1963, %v1967
    %s1972 = scalar_lea.vmem [#allocation2], 192
    %v1973 = vld [vmem:[%s1972] sm:$0xff]
    %v1974 = vld [vmem:[%s1972 + $0x8] sm:$0xff]
    %v1975 = vld [vmem:[%s1972 + $0x10] sm:$0xff]
    %v1976 = vld [vmem:[%s1972 + $0x18] sm:$0xff]
    %v1977 = vld [vmem:[%s1972 + $0x20] sm:$0xff]
    %v1978 = vld [vmem:[%s1972 + $0x28] sm:$0xff]
    %v1979 = vld [vmem:[%s1972 + $0x30] sm:$0xff]
    %v1980 = vld [vmem:[%s1972 + $0x38] sm:$0xff]
    %v1981 = vld [vmem:[%s1972 + $0x40] sm:$0xff]
    %v1982 = vld [vmem:[%s1972 + $0x48] sm:$0xff]
    %v1983 = vld [vmem:[%s1972 + $0x50] sm:$0xff]
    %v1984 = vld [vmem:[%s1972 + $0x58] sm:$0xff]
    %v1985 = vpack.c.bf16 %v1970, %v1968
    %v1986 = vpack.c.bf16 %v1971, %v1969
    %1987 = vmatprep.subr.bf16.mxu0 %v1244
    %1988 = vmatpush1.bf16.msra.mxu0 %v1243
    %1989 = vmatprep.subr.bf16.mxu0 %v1248
    %1990 = vmatpush1.bf16.msra.mxu0 %v1247
    %1991 = vmatprep.subr.bf16.mxu0 %v1252
    %1992 = vmatpush1.bf16.msra.mxu0 %v1251
    %1993 = vmatprep.subr.bf16.mxu0 %v1256
    %1994 = vmatpush1.bf16.msra.mxu0 %v1255
    %1995 = vmatprep.subr.bf16.mxu0 %v1260
    %1996 = vmatpush1.bf16.msra.mxu0 %v1259
    %1997 = vmatprep.subr.bf16.mxu0 %v1264
    %1998 = vmatpush1.bf16.msra.mxu0 %v1263
    %1999 = vmatprep.subr.bf16.mxu0 %v1268
    %2000 = vmatpush1.bf16.msra.mxu0 %v1267
    %2001 = vmatprep.subr.bf16.mxu0 %v1272
    %2002 = vmatpush1.bf16.msra.mxu0 %v1271
    %2003 = vmatprep.subr.bf16.mxu0 %v1276
    %2004 = vmatpush1.bf16.msra.mxu0 %v1275
    %2005 = vmatprep.subr.bf16.mxu0 %v1280
    %2006 = vmatpush1.bf16.msra.mxu0 %v1279
    %2007 = vmatprep.subr.bf16.mxu0 %v1284
    %2008 = vmatpush1.bf16.msra.mxu0 %v1283
    %2009 = vmatprep.subr.bf16.mxu0 %v1288
    %2010 = vmatpush1.bf16.msra.mxu0 %v1287
    %2011 = vmatprep.subr.bf16.mxu0 %v1292
    %2012 = vmatpush1.bf16.msra.mxu0 %v1291
    %2013 = vmatprep.subr.bf16.mxu0 %v1296
    %2014 = vmatpush1.bf16.msra.mxu0 %v1295
    %2015 = vmatprep.subr.bf16.mxu0 %v1300
    %2016 = vmatpush1.bf16.msra.mxu0 %v1299
    %2017 = vmatprep.subr.bf16.mxu0 %v1304
    %2018 = vmatpush1.bf16.msra.mxu0 %v1303
    %2019 = vmatprep.mubr.bf16.mxu0 %v1986
    %2020 = vmatmul.mubr.bf16.gmra.mrb[0].mxu0 %v1985
    %v2021 = vpop.f32.mrb[0].mxu0
    %v2022 = vadd.f32 %v1004, %v2021
    %v2023 = vpop.f32.mrb[0].mxu0
    %v2024 = vadd.f32 %v1008, %v2023
    %v2025 = vpop.f32.mrb[0].mxu0
    %v2026 = vadd.f32 %v1004, %v2025
    %v2027 = vpop.f32.mrb[0].mxu0
    %v2028 = vadd.f32 %v1008, %v2027
    %2029 = vdwg.mxu0
    %2030 = vmatprep.subr.bf16.mxu0 %v1246
    %2031 = vmatpush1.bf16.msra.mxu0 %v1245
    %2032 = vmatprep.subr.bf16.mxu0 %v1250
    %2033 = vmatpush1.bf16.msra.mxu0 %v1249
    %2034 = vmatprep.subr.bf16.mxu0 %v1254
    %2035 = vmatpush1.bf16.msra.mxu0 %v1253
    %2036 = vmatprep.subr.bf16.mxu0 %v1258
    %2037 = vmatpush1.bf16.msra.mxu0 %v1257
    %2038 = vmatprep.subr.bf16.mxu0 %v1262
    %2039 = vmatpush1.bf16.msra.mxu0 %v1261
    %2040 = vmatprep.subr.bf16.mxu0 %v1266
    %2041 = vmatpush1.bf16.msra.mxu0 %v1265
    %2042 = vmatprep.subr.bf16.mxu0 %v1270
    %2043 = vmatpush1.bf16.msra.mxu0 %v1269
    %2044 = vmatprep.subr.bf16.mxu0 %v1274
    %2045 = vmatpush1.bf16.msra.mxu0 %v1273
    %2046 = vmatprep.subr.bf16.mxu0 %v1278
    %2047 = vmatpush1.bf16.msra.mxu0 %v1277
    %2048 = vmatprep.subr.bf16.mxu0 %v1282
    %2049 = vmatpush1.bf16.msra.mxu0 %v1281
    %2050 = vmatprep.subr.bf16.mxu0 %v1286
    %2051 = vmatpush1.bf16.msra.mxu0 %v1285
    %2052 = vmatprep.subr.bf16.mxu0 %v1290
    %2053 = vmatpush1.bf16.msra.mxu0 %v1289
    %2054 = vmatprep.subr.bf16.mxu0 %v1294
    %2055 = vmatpush1.bf16.msra.mxu0 %v1293
    %2056 = vmatprep.subr.bf16.mxu0 %v1298
    %2057 = vmatpush1.bf16.msra.mxu0 %v1297
    %2058 = vmatprep.subr.bf16.mxu0 %v1302
    %2059 = vmatpush1.bf16.msra.mxu0 %v1301
    %2060 = vmatprep.subr.bf16.mxu0 %v1306
    %2061 = vmatpush1.bf16.msra.mxu0 %v1305
    %2062 = vmatprep.mubr.bf16.mxu0 %v1986
    %2063 = vmatmul.mubr.bf16.gmra.mrb[0].mxu0 %v1985
    %v2064 = vpop.f32.mrb[0].mxu0
    %v2065 = vadd.f32 %v1012, %v2064
    %v2066 = vpop.f32.mrb[0].mxu0
    %v2067 = vadd.f32 %v1016, %v2066
    %v2068 = vpop.f32.mrb[0].mxu0
    %v2069 = vadd.f32 %v1012, %v2068
    %v2070 = vpop.f32.mrb[0].mxu0
    %v2071 = vadd.f32 %v1016, %v2070
    %2072 = vdwg.mxu0
    %2073 = vmatprep.subr.bf16.mxu0 %v1554
    %2074 = vmatpush1.bf16.msra.mxu0 %v1553
    %2075 = vmatprep.subr.bf16.mxu0 %v1556
    %2076 = vmatpush1.bf16.msra.mxu0 %v1555
    %2077 = vmatprep.subr.bf16.mxu0 %v1558
    %2078 = vmatpush1.bf16.msra.mxu0 %v1557
    %2079 = vmatprep.subr.bf16.mxu0 %v1560
    %2080 = vmatpush1.bf16.msra.mxu0 %v1559
    %2081 = vmatprep.subr.bf16.mxu0 %v1562
    %2082 = vmatpush1.bf16.msra.mxu0 %v1561
    %2083 = vmatprep.subr.bf16.mxu0 %v1564
    %2084 = vmatpush1.bf16.msra.mxu0 %v1563
    %2085 = vmatprep.subr.bf16.mxu0 %v1566
    %2086 = vmatpush1.bf16.msra.mxu0 %v1565
    %2087 = vmatprep.subr.bf16.mxu0 %v1568
    %2088 = vmatpush1.bf16.msra.mxu0 %v1567
    %2089 = vmatprep.subr.bf16.mxu0 %v1570
    %2090 = vmatpush1.bf16.msra.mxu0 %v1569
    %2091 = vmatprep.subr.bf16.mxu0 %v1572
    %2092 = vmatpush1.bf16.msra.mxu0 %v1571
    %2093 = vmatprep.subr.bf16.mxu0 %v1574
    %2094 = vmatpush1.bf16.msra.mxu0 %v1573
    %2095 = vmatprep.subr.bf16.mxu0 %v1576
    %2096 = vmatpush1.bf16.msra.mxu0 %v1575
    %2097 = vmatprep.subr.bf16.mxu0 %v1578
    %2098 = vmatpush1.bf16.msra.mxu0 %v1577
    %2099 = vmatprep.subr.bf16.mxu0 %v1580
    %2100 = vmatpush1.bf16.msra.mxu0 %v1579
    %2101 = vmatprep.subr.bf16.mxu0 %v1582
    %2102 = vmatpush1.bf16.msra.mxu0 %v1581
    %2103 = vmatprep.subr.bf16.mxu0 %v1584
    %2104 = vmatpush1.bf16.msra.mxu0 %v1583
    %2105 = vmatprep.mubr.bf16.mxu0 %v1986
    %2106 = vmatmul.mubr.bf16.gmra.mrb[0].mxu0 %v1985
    %v2107 = vpop.f32.mrb[0].mxu0
    %v2108 = vadd.f32 %v1026, %v2107
    %v2109 = vpop.f32.mrb[0].mxu0
    %v2110 = vadd.f32 %v1030, %v2109
    %v2111 = vpop.f32.mrb[0].mxu0
    %v2112 = vadd.f32 %v1026, %v2111
    %v2113 = vpop.f32.mrb[0].mxu0
    %v2114 = vadd.f32 %v1030, %v2113
    %2115 = vdwg.mxu0
    %v2116 = vadd.f32 %v1973, %v2022
    %v2117 = vadd.f32 %v1974, %v2024
    %v2118 = vadd.f32 %v1979, %v2026
    %v2119 = vadd.f32 %v1980, %v2028
    %v2120 = vxor.u32 %v2116, 2147483648
    %v2121 = vxor.u32 %v2117, 2147483648
    %v2122 = vxor.u32 %v2118, 2147483648
    %v2123 = vxor.u32 %v2119, 2147483648
    %v2124 = vmul.f32 %v2120, 1.442695
    %v2125 = vpow.pop %v2124
    %v2126 = vmul.f32 %v2121, 1.442695
    %v2127 = vpow.pop %v2126
    %v2128 = vmul.f32 %v2122, 1.442695
    %v2129 = vpow.pop %v2128
    %v2130 = vmul.f32 %v2123, 1.442695
    %v2131 = vpow.pop %v2130
    %v2132 = vadd.f32 %v2125, 1.0
    %v2133 = vadd.f32 %v2127, 1.0
    %v2134 = vadd.f32 %v2129, 1.0
    %v2135 = vadd.f32 %v2131, 1.0
    %v2136 = vrcp.pop %v2132
    %v2137 = vmul.f32 1.0, %v2136
    %v2138 = vrcp.pop %v2133
    %v2139 = vmul.f32 1.0, %v2138
    %v2140 = vrcp.pop %v2134
    %v2141 = vmul.f32 1.0, %v2140
    %v2142 = vrcp.pop %v2135
    %v2143 = vmul.f32 1.0, %v2142
    %v2144 = vadd.f32 %v1975, %v2065
    %v2145 = vadd.f32 %v1976, %v2067
    %v2146 = vadd.f32 %v1981, %v2069
    %v2147 = vadd.f32 %v1982, %v2071
    %v2148 = vxor.u32 %v2144, 2147483648
    %v2149 = vxor.u32 %v2145, 2147483648
    %v2150 = vxor.u32 %v2146, 2147483648
    %v2151 = vxor.u32 %v2147, 2147483648
    %v2152 = vmul.f32 %v2148, 1.442695
    %v2153 = vpow.pop %v2152
    %v2154 = vmul.f32 %v2149, 1.442695
    %v2155 = vpow.pop %v2154
    %v2156 = vmul.f32 %v2150, 1.442695
    %v2157 = vpow.pop %v2156
    %v2158 = vmul.f32 %v2151, 1.442695
    %v2159 = vpow.pop %v2158
    %v2160 = vadd.f32 %v2153, 1.0
    %v2161 = vadd.f32 %v2155, 1.0
    %v2162 = vadd.f32 %v2157, 1.0
    %v2163 = vadd.f32 %v2159, 1.0
    %v2164 = vrcp.pop %v2160
    %v2165 = vmul.f32 1.0, %v2164
    %v2166 = vrcp.pop %v2161
    %v2167 = vmul.f32 1.0, %v2166
    %v2168 = vrcp.pop %v2162
    %v2169 = vmul.f32 1.0, %v2168
    %v2170 = vrcp.pop %v2163
    %v2171 = vmul.f32 1.0, %v2170
    %v2172 = vmul.f32 %v2137, %v2108
    %v2173 = vmul.f32 %v2139, %v2110
    %v2174 = vmul.f32 %v2141, %v2112
    %v2175 = vmul.f32 %v2143, %v2114
    %v2176 = vadd.f32 %v1977, %v2172
    %v2177 = vadd.f32 %v1978, %v2173
    %v2178 = vadd.f32 %v1983, %v2174
    %v2179 = vadd.f32 %v1984, %v2175
    %v2180 = vtanh.pop %v2176
    %v2181 = vtanh.pop %v2177
    %v2182 = vtanh.pop %v2178
    %v2183 = vtanh.pop %v2179
    %v2184 = vsub.f32 1.0, %v2165
    %v2185 = vsub.f32 1.0, %v2167
    %v2186 = vsub.f32 1.0, %v2169
    %v2187 = vsub.f32 1.0, %v2171
    %v2188 = vmul.f32 %v2184, %v2180
    %v2189 = vmul.f32 %v2185, %v2181
    %v2190 = vmul.f32 %v2186, %v2182
    %v2191 = vmul.f32 %v2187, %v2183
    %v2192 = vmul.f32 %v2165, %v1968
    %v2193 = vmul.f32 %v2167, %v1969
    %v2194 = vmul.f32 %v2169, %v1970
    %v2195 = vmul.f32 %v2171, %v1971
    %v2196 = vadd.f32 %v2188, %v2192
    %v2197 = vadd.f32 %v2189, %v2193
    %v2198 = vadd.f32 %v2190, %v2194
    %v2199 = vadd.f32 %v2191, %v2195
    %s2200 = scalar_lea.vmem [#allocation2], 288
    %v2201 = vld [vmem:[%s2200] sm:$0xff]
    %v2202 = vld [vmem:[%s2200 + $0x8] sm:$0xff]
    %v2203 = vld [vmem:[%s2200 + $0x10] sm:$0xff]
    %v2204 = vld [vmem:[%s2200 + $0x18] sm:$0xff]
    %v2205 = vld [vmem:[%s2200 + $0x20] sm:$0xff]
    %v2206 = vld [vmem:[%s2200 + $0x28] sm:$0xff]
    %v2207 = vld [vmem:[%s2200 + $0x30] sm:$0xff]
    %v2208 = vld [vmem:[%s2200 + $0x38] sm:$0xff]
    %v2209 = vld [vmem:[%s2200 + $0x40] sm:$0xff]
    %v2210 = vld [vmem:[%s2200 + $0x48] sm:$0xff]
    %v2211 = vld [vmem:[%s2200 + $0x50] sm:$0xff]
    %v2212 = vld [vmem:[%s2200 + $0x58] sm:$0xff]
    %v2213 = vpack.c.bf16 %v2198, %v2196
    %v2214 = vpack.c.bf16 %v2199, %v2197
    %2215 = vmatprep.subr.bf16.mxu0 %v1244
    %2216 = vmatpush1.bf16.msra.mxu0 %v1243
    %2217 = vmatprep.subr.bf16.mxu0 %v1248
    %2218 = vmatpush1.bf16.msra.mxu0 %v1247
    %2219 = vmatprep.subr.bf16.mxu0 %v1252
    %2220 = vmatpush1.bf16.msra.mxu0 %v1251
    %2221 = vmatprep.subr.bf16.mxu0 %v1256
    %2222 = vmatpush1.bf16.msra.mxu0 %v1255
    %2223 = vmatprep.subr.bf16.mxu0 %v1260
    %2224 = vmatpush1.bf16.msra.mxu0 %v1259
    %2225 = vmatprep.subr.bf16.mxu0 %v1264
    %2226 = vmatpush1.bf16.msra.mxu0 %v1263
    %2227 = vmatprep.subr.bf16.mxu0 %v1268
    %2228 = vmatpush1.bf16.msra.mxu0 %v1267
    %2229 = vmatprep.subr.bf16.mxu0 %v1272
    %2230 = vmatpush1.bf16.msra.mxu0 %v1271
    %2231 = vmatprep.subr.bf16.mxu0 %v1276
    %2232 = vmatpush1.bf16.msra.mxu0 %v1275
    %2233 = vmatprep.subr.bf16.mxu0 %v1280
    %2234 = vmatpush1.bf16.msra.mxu0 %v1279
    %2235 = vmatprep.subr.bf16.mxu0 %v1284
    %2236 = vmatpush1.bf16.msra.mxu0 %v1283
    %2237 = vmatprep.subr.bf16.mxu0 %v1288
    %2238 = vmatpush1.bf16.msra.mxu0 %v1287
    %2239 = vmatprep.subr.bf16.mxu0 %v1292
    %2240 = vmatpush1.bf16.msra.mxu0 %v1291
    %2241 = vmatprep.subr.bf16.mxu0 %v1296
    %2242 = vmatpush1.bf16.msra.mxu0 %v1295
    %2243 = vmatprep.subr.bf16.mxu0 %v1300
    %2244 = vmatpush1.bf16.msra.mxu0 %v1299
    %2245 = vmatprep.subr.bf16.mxu0 %v1304
    %2246 = vmatpush1.bf16.msra.mxu0 %v1303
    %2247 = vmatprep.mubr.bf16.mxu0 %v2214
    %2248 = vmatmul.mubr.bf16.gmra.mrb[0].mxu0 %v2213
    %v2249 = vpop.f32.mrb[0].mxu0
    %v2250 = vadd.f32 %v1004, %v2249
    %v2251 = vpop.f32.mrb[0].mxu0
    %v2252 = vadd.f32 %v1008, %v2251
    %v2253 = vpop.f32.mrb[0].mxu0
    %v2254 = vadd.f32 %v1004, %v2253
    %v2255 = vpop.f32.mrb[0].mxu0
    %v2256 = vadd.f32 %v1008, %v2255
    %2257 = vdwg.mxu0
    %2258 = vmatprep.subr.bf16.mxu0 %v1246
    %2259 = vmatpush1.bf16.msra.mxu0 %v1245
    %2260 = vmatprep.subr.bf16.mxu0 %v1250
    %2261 = vmatpush1.bf16.msra.mxu0 %v1249
    %2262 = vmatprep.subr.bf16.mxu0 %v1254
    %2263 = vmatpush1.bf16.msra.mxu0 %v1253
    %2264 = vmatprep.subr.bf16.mxu0 %v1258
    %2265 = vmatpush1.bf16.msra.mxu0 %v1257
    %2266 = vmatprep.subr.bf16.mxu0 %v1262
    %2267 = vmatpush1.bf16.msra.mxu0 %v1261
    %2268 = vmatprep.subr.bf16.mxu0 %v1266
    %2269 = vmatpush1.bf16.msra.mxu0 %v1265
    %2270 = vmatprep.subr.bf16.mxu0 %v1270
    %2271 = vmatpush1.bf16.msra.mxu0 %v1269
    %2272 = vmatprep.subr.bf16.mxu0 %v1274
    %2273 = vmatpush1.bf16.msra.mxu0 %v1273
    %2274 = vmatprep.subr.bf16.mxu0 %v1278
    %2275 = vmatpush1.bf16.msra.mxu0 %v1277
    %2276 = vmatprep.subr.bf16.mxu0 %v1282
    %2277 = vmatpush1.bf16.msra.mxu0 %v1281
    %2278 = vmatprep.subr.bf16.mxu0 %v1286
    %2279 = vmatpush1.bf16.msra.mxu0 %v1285
    %2280 = vmatprep.subr.bf16.mxu0 %v1290
    %2281 = vmatpush1.bf16.msra.mxu0 %v1289
    %2282 = vmatprep.subr.bf16.mxu0 %v1294
    %2283 = vmatpush1.bf16.msra.mxu0 %v1293
    %2284 = vmatprep.subr.bf16.mxu0 %v1298
    %2285 = vmatpush1.bf16.msra.mxu0 %v1297
    %2286 = vmatprep.subr.bf16.mxu0 %v1302
    %2287 = vmatpush1.bf16.msra.mxu0 %v1301
    %2288 = vmatprep.subr.bf16.mxu0 %v1306
    %2289 = vmatpush1.bf16.msra.mxu0 %v1305
    %2290 = vmatprep.mubr.bf16.mxu0 %v2214
    %2291 = vmatmul.mubr.bf16.gmra.mrb[0].mxu0 %v2213
    %v2292 = vpop.f32.mrb[0].mxu0
    %v2293 = vadd.f32 %v1012, %v2292
    %v2294 = vpop.f32.mrb[0].mxu0
    %v2295 = vadd.f32 %v1016, %v2294
    %v2296 = vpop.f32.mrb[0].mxu0
    %v2297 = vadd.f32 %v1012, %v2296
    %v2298 = vpop.f32.mrb[0].mxu0
    %v2299 = vadd.f32 %v1016, %v2298
    %2300 = vdwg.mxu0
    %2301 = vmatprep.subr.bf16.mxu0 %v1554
    %2302 = vmatpush1.bf16.msra.mxu0 %v1553
    %2303 = vmatprep.subr.bf16.mxu0 %v1556
    %2304 = vmatpush1.bf16.msra.mxu0 %v1555
    %2305 = vmatprep.subr.bf16.mxu0 %v1558
    %2306 = vmatpush1.bf16.msra.mxu0 %v1557
    %2307 = vmatprep.subr.bf16.mxu0 %v1560
    %2308 = vmatpush1.bf16.msra.mxu0 %v1559
    %2309 = vmatprep.subr.bf16.mxu0 %v1562
    %2310 = vmatpush1.bf16.msra.mxu0 %v1561
    %2311 = vmatprep.subr.bf16.mxu0 %v1564
    %2312 = vmatpush1.bf16.msra.mxu0 %v1563
    %2313 = vmatprep.subr.bf16.mxu0 %v1566
    %2314 = vmatpush1.bf16.msra.mxu0 %v1565
    %2315 = vmatprep.subr.bf16.mxu0 %v1568
    %2316 = vmatpush1.bf16.msra.mxu0 %v1567
    %2317 = vmatprep.subr.bf16.mxu0 %v1570
    %2318 = vmatpush1.bf16.msra.mxu0 %v1569
    %2319 = vmatprep.subr.bf16.mxu0 %v1572
    %2320 = vmatpush1.bf16.msra.mxu0 %v1571
    %2321 = vmatprep.subr.bf16.mxu0 %v1574
    %2322 = vmatpush1.bf16.msra.mxu0 %v1573
    %2323 = vmatprep.subr.bf16.mxu0 %v1576
    %2324 = vmatpush1.bf16.msra.mxu0 %v1575
    %2325 = vmatprep.subr.bf16.mxu0 %v1578
    %2326 = vmatpush1.bf16.msra.mxu0 %v1577
    %2327 = vmatprep.subr.bf16.mxu0 %v1580
    %2328 = vmatpush1.bf16.msra.mxu0 %v1579
    %2329 = vmatprep.subr.bf16.mxu0 %v1582
    %2330 = vmatpush1.bf16.msra.mxu0 %v1581
    %2331 = vmatprep.subr.bf16.mxu0 %v1584
    %2332 = vmatpush1.bf16.msra.mxu0 %v1583
    %2333 = vmatprep.mubr.bf16.mxu0 %v2214
    %2334 = vmatmul.mubr.bf16.gmra.mrb[0].mxu0 %v2213
    %v2335 = vpop.f32.mrb[0].mxu0
    %v2336 = vadd.f32 %v1026, %v2335
    %v2337 = vpop.f32.mrb[0].mxu0
    %v2338 = vadd.f32 %v1030, %v2337
    %v2339 = vpop.f32.mrb[0].mxu0
    %v2340 = vadd.f32 %v1026, %v2339
    %v2341 = vpop.f32.mrb[0].mxu0
    %v2342 = vadd.f32 %v1030, %v2341
    %2343 = vdwg.mxu0
    %v2344 = vadd.f32 %v2201, %v2250
    %v2345 = vadd.f32 %v2202, %v2252
    %v2346 = vadd.f32 %v2207, %v2254
    %v2347 = vadd.f32 %v2208, %v2256
    %v2348 = vxor.u32 %v2344, 2147483648
    %v2349 = vxor.u32 %v2345, 2147483648
    %v2350 = vxor.u32 %v2346, 2147483648
    %v2351 = vxor.u32 %v2347, 2147483648
    %v2352 = vmul.f32 %v2348, 1.442695
    %v2353 = vpow.pop %v2352
    %v2354 = vmul.f32 %v2349, 1.442695
    %v2355 = vpow.pop %v2354
    %v2356 = vmul.f32 %v2350, 1.442695
    %v2357 = vpow.pop %v2356
    %v2358 = vmul.f32 %v2351, 1.442695
    %v2359 = vpow.pop %v2358
    %v2360 = vadd.f32 %v2353, 1.0
    %v2361 = vadd.f32 %v2355, 1.0
    %v2362 = vadd.f32 %v2357, 1.0
    %v2363 = vadd.f32 %v2359, 1.0
    %v2364 = vrcp.pop %v2360
    %v2365 = vmul.f32 1.0, %v2364
    %v2366 = vrcp.pop %v2361
    %v2367 = vmul.f32 1.0, %v2366
    %v2368 = vrcp.pop %v2362
    %v2369 = vmul.f32 1.0, %v2368
    %v2370 = vrcp.pop %v2363
    %v2371 = vmul.f32 1.0, %v2370
    %v2372 = vadd.f32 %v2203, %v2293
    %v2373 = vadd.f32 %v2204, %v2295
    %v2374 = vadd.f32 %v2209, %v2297
    %v2375 = vadd.f32 %v2210, %v2299
    %v2376 = vxor.u32 %v2372, 2147483648
    %v2377 = vxor.u32 %v2373, 2147483648
    %v2378 = vxor.u32 %v2374, 2147483648
    %v2379 = vxor.u32 %v2375, 2147483648
    %v2380 = vmul.f32 %v2376, 1.442695
    %v2381 = vpow.pop %v2380
    %v2382 = vmul.f32 %v2377, 1.442695
    %v2383 = vpow.pop %v2382
    %v2384 = vmul.f32 %v2378, 1.442695
    %v2385 = vpow.pop %v2384
    %v2386 = vmul.f32 %v2379, 1.442695
    %v2387 = vpow.pop %v2386
    %v2388 = vadd.f32 %v2381, 1.0
    %v2389 = vadd.f32 %v2383, 1.0
    %v2390 = vadd.f32 %v2385, 1.0
    %v2391 = vadd.f32 %v2387, 1.0
    %v2392 = vrcp.pop %v2388
    %v2393 = vmul.f32 1.0, %v2392
    %v2394 = vrcp.pop %v2389
    %v2395 = vmul.f32 1.0, %v2394
    %v2396 = vrcp.pop %v2390
    %v2397 = vmul.f32 1.0, %v2396
    %v2398 = vrcp.pop %v2391
    %v2399 = vmul.f32 1.0, %v2398
    %v2400 = vmul.f32 %v2365, %v2336
    %v2401 = vmul.f32 %v2367, %v2338
    %v2402 = vmul.f32 %v2369, %v2340
    %v2403 = vmul.f32 %v2371, %v2342
    %v2404 = vadd.f32 %v2205, %v2400
    %v2405 = vadd.f32 %v2206, %v2401
    %v2406 = vadd.f32 %v2211, %v2402
    %v2407 = vadd.f32 %v2212, %v2403
    %v2408 = vtanh.pop %v2404
    %v2409 = vtanh.pop %v2405
    %v2410 = vtanh.pop %v2406
    %v2411 = vtanh.pop %v2407
    %v2412 = vsub.f32 1.0, %v2393
    %v2413 = vsub.f32 1.0, %v2395
    %v2414 = vsub.f32 1.0, %v2397
    %v2415 = vsub.f32 1.0, %v2399
    %v2416 = vmul.f32 %v2412, %v2408
    %v2417 = vmul.f32 %v2413, %v2409
    %v2418 = vmul.f32 %v2414, %v2410
    %v2419 = vmul.f32 %v2415, %v2411
    %v2420 = vmul.f32 %v2393, %v2196
    %v2421 = vmul.f32 %v2395, %v2197
    %v2422 = vmul.f32 %v2397, %v2198
    %v2423 = vmul.f32 %v2399, %v2199
    %v2424 = vadd.f32 %v2416, %v2420
    %v2425 = vadd.f32 %v2417, %v2421
    %v2426 = vadd.f32 %v2418, %v2422
    %v2427 = vadd.f32 %v2419, %v2423
    %s2428 = scalar_lea.vmem [#allocation2], 384
    %v2429 = vld [vmem:[%s2428] sm:$0xff]
    %v2430 = vld [vmem:[%s2428 + $0x8] sm:$0xff]
    %v2431 = vld [vmem:[%s2428 + $0x10] sm:$0xff]
    %v2432 = vld [vmem:[%s2428 + $0x18] sm:$0xff]
    %v2433 = vld [vmem:[%s2428 + $0x20] sm:$0xff]
    %v2434 = vld [vmem:[%s2428 + $0x28] sm:$0xff]
    %v2435 = vld [vmem:[%s2428 + $0x30] sm:$0xff]
    %v2436 = vld [vmem:[%s2428 + $0x38] sm:$0xff]
    %v2437 = vld [vmem:[%s2428 + $0x40] sm:$0xff]
    %v2438 = vld [vmem:[%s2428 + $0x48] sm:$0xff]
    %v2439 = vld [vmem:[%s2428 + $0x50] sm:$0xff]
    %v2440 = vld [vmem:[%s2428 + $0x58] sm:$0xff]
    %v2441 = vpack.c.bf16 %v2426, %v2424
    %v2442 = vpack.c.bf16 %v2427, %v2425
    %2443 = vmatprep.subr.bf16.mxu0 %v1244
    %2444 = vmatpush1.bf16.msra.mxu0 %v1243
    %2445 = vmatprep.subr.bf16.mxu0 %v1248
    %2446 = vmatpush1.bf16.msra.mxu0 %v1247
    %2447 = vmatprep.subr.bf16.mxu0 %v1252
    %2448 = vmatpush1.bf16.msra.mxu0 %v1251
    %2449 = vmatprep.subr.bf16.mxu0 %v1256
    %2450 = vmatpush1.bf16.msra.mxu0 %v1255
    %2451 = vmatprep.subr.bf16.mxu0 %v1260
    %2452 = vmatpush1.bf16.msra.mxu0 %v1259
    %2453 = vmatprep.subr.bf16.mxu0 %v1264
    %2454 = vmatpush1.bf16.msra.mxu0 %v1263
    %2455 = vmatprep.subr.bf16.mxu0 %v1268
    %2456 = vmatpush1.bf16.msra.mxu0 %v1267
    %2457 = vmatprep.subr.bf16.mxu0 %v1272
    %2458 = vmatpush1.bf16.msra.mxu0 %v1271
    %2459 = vmatprep.subr.bf16.mxu0 %v1276
    %2460 = vmatpush1.bf16.msra.mxu0 %v1275
    %2461 = vmatprep.subr.bf16.mxu0 %v1280
    %2462 = vmatpush1.bf16.msra.mxu0 %v1279
    %2463 = vmatprep.subr.bf16.mxu0 %v1284
    %2464 = vmatpush1.bf16.msra.mxu0 %v1283
    %2465 = vmatprep.subr.bf16.mxu0 %v1288
    %2466 = vmatpush1.bf16.msra.mxu0 %v1287
    %2467 = vmatprep.subr.bf16.mxu0 %v1292
    %2468 = vmatpush1.bf16.msra.mxu0 %v1291
    %2469 = vmatprep.subr.bf16.mxu0 %v1296
    %2470 = vmatpush1.bf16.msra.mxu0 %v1295
    %2471 = vmatprep.subr.bf16.mxu0 %v1300
    %2472 = vmatpush1.bf16.msra.mxu0 %v1299
    %2473 = vmatprep.subr.bf16.mxu0 %v1304
    %2474 = vmatpush1.bf16.msra.mxu0 %v1303
    %2475 = vmatprep.mubr.bf16.mxu0 %v2442
    %2476 = vmatmul.mubr.bf16.gmra.mrb[0].mxu0 %v2441
    %v2477 = vpop.f32.mrb[0].mxu0
    %v2478 = vadd.f32 %v1004, %v2477
    %v2479 = vpop.f32.mrb[0].mxu0
    %v2480 = vadd.f32 %v1008, %v2479
    %v2481 = vpop.f32.mrb[0].mxu0
    %v2482 = vadd.f32 %v1004, %v2481
    %v2483 = vpop.f32.mrb[0].mxu0
    %v2484 = vadd.f32 %v1008, %v2483
    %2485 = vdwg.mxu0
    %2486 = vmatprep.subr.bf16.mxu0 %v1246
    %2487 = vmatpush1.bf16.msra.mxu0 %v1245
    %2488 = vmatprep.subr.bf16.mxu0 %v1250
    %2489 = vmatpush1.bf16.msra.mxu0 %v1249
    %2490 = vmatprep.subr.bf16.mxu0 %v1254
    %2491 = vmatpush1.bf16.msra.mxu0 %v1253
    %2492 = vmatprep.subr.bf16.mxu0 %v1258
    %2493 = vmatpush1.bf16.msra.mxu0 %v1257
    %2494 = vmatprep.subr.bf16.mxu0 %v1262
    %2495 = vmatpush1.bf16.msra.mxu0 %v1261
    %2496 = vmatprep.subr.bf16.mxu0 %v1266
    %2497 = vmatpush1.bf16.msra.mxu0 %v1265
    %2498 = vmatprep.subr.bf16.mxu0 %v1270
    %2499 = vmatpush1.bf16.msra.mxu0 %v1269
    %2500 = vmatprep.subr.bf16.mxu0 %v1274
    %2501 = vmatpush1.bf16.msra.mxu0 %v1273
    %2502 = vmatprep.subr.bf16.mxu0 %v1278
    %2503 = vmatpush1.bf16.msra.mxu0 %v1277
    %2504 = vmatprep.subr.bf16.mxu0 %v1282
    %2505 = vmatpush1.bf16.msra.mxu0 %v1281
    %2506 = vmatprep.subr.bf16.mxu0 %v1286
    %2507 = vmatpush1.bf16.msra.mxu0 %v1285
    %2508 = vmatprep.subr.bf16.mxu0 %v1290
    %2509 = vmatpush1.bf16.msra.mxu0 %v1289
    %2510 = vmatprep.subr.bf16.mxu0 %v1294
    %2511 = vmatpush1.bf16.msra.mxu0 %v1293
    %2512 = vmatprep.subr.bf16.mxu0 %v1298
    %2513 = vmatpush1.bf16.msra.mxu0 %v1297
    %2514 = vmatprep.subr.bf16.mxu0 %v1302
    %2515 = vmatpush1.bf16.msra.mxu0 %v1301
    %2516 = vmatprep.subr.bf16.mxu0 %v1306
    %2517 = vmatpush1.bf16.msra.mxu0 %v1305
    %2518 = vmatprep.mubr.bf16.mxu0 %v2442
    %2519 = vmatmul.mubr.bf16.gmra.mrb[0].mxu0 %v2441
    %v2520 = vpop.f32.mrb[0].mxu0
    %v2521 = vadd.f32 %v1012, %v2520
    %v2522 = vpop.f32.mrb[0].mxu0
    %v2523 = vadd.f32 %v1016, %v2522
    %v2524 = vpop.f32.mrb[0].mxu0
    %v2525 = vadd.f32 %v1012, %v2524
    %v2526 = vpop.f32.mrb[0].mxu0
    %v2527 = vadd.f32 %v1016, %v2526
    %2528 = vdwg.mxu0
    %2529 = vmatprep.subr.bf16.mxu0 %v1554
    %2530 = vmatpush1.bf16.msra.mxu0 %v1553
    %2531 = vmatprep.subr.bf16.mxu0 %v1556
    %2532 = vmatpush1.bf16.msra.mxu0 %v1555
    %2533 = vmatprep.subr.bf16.mxu0 %v1558
    %2534 = vmatpush1.bf16.msra.mxu0 %v1557
    %2535 = vmatprep.subr.bf16.mxu0 %v1560
    %2536 = vmatpush1.bf16.msra.mxu0 %v1559
    %2537 = vmatprep.subr.bf16.mxu0 %v1562
    %2538 = vmatpush1.bf16.msra.mxu0 %v1561
    %2539 = vmatprep.subr.bf16.mxu0 %v1564
    %2540 = vmatpush1.bf16.msra.mxu0 %v1563
    %2541 = vmatprep.subr.bf16.mxu0 %v1566
    %2542 = vmatpush1.bf16.msra.mxu0 %v1565
    %2543 = vmatprep.subr.bf16.mxu0 %v1568
    %2544 = vmatpush1.bf16.msra.mxu0 %v1567
    %2545 = vmatprep.subr.bf16.mxu0 %v1570
    %2546 = vmatpush1.bf16.msra.mxu0 %v1569
    %2547 = vmatprep.subr.bf16.mxu0 %v1572
    %2548 = vmatpush1.bf16.msra.mxu0 %v1571
    %2549 = vmatprep.subr.bf16.mxu0 %v1574
    %2550 = vmatpush1.bf16.msra.mxu0 %v1573
    %2551 = vmatprep.subr.bf16.mxu0 %v1576
    %2552 = vmatpush1.bf16.msra.mxu0 %v1575
    %2553 = vmatprep.subr.bf16.mxu0 %v1578
    %2554 = vmatpush1.bf16.msra.mxu0 %v1577
    %2555 = vmatprep.subr.bf16.mxu0 %v1580
    %2556 = vmatpush1.bf16.msra.mxu0 %v1579
    %2557 = vmatprep.subr.bf16.mxu0 %v1582
    %2558 = vmatpush1.bf16.msra.mxu0 %v1581
    %2559 = vmatprep.subr.bf16.mxu0 %v1584
    %2560 = vmatpush1.bf16.msra.mxu0 %v1583
    %2561 = vmatprep.mubr.bf16.mxu0 %v2442
    %2562 = vmatmul.mubr.bf16.gmra.mrb[0].mxu0 %v2441
    %v2563 = vpop.f32.mrb[0].mxu0
    %v2564 = vadd.f32 %v1026, %v2563
    %v2565 = vpop.f32.mrb[0].mxu0
    %v2566 = vadd.f32 %v1030, %v2565
    %v2567 = vpop.f32.mrb[0].mxu0
    %v2568 = vadd.f32 %v1026, %v2567
    %v2569 = vpop.f32.mrb[0].mxu0
    %v2570 = vadd.f32 %v1030, %v2569
    %2571 = vdwg.mxu0
    %v2572 = vadd.f32 %v2429, %v2478
    %v2573 = vadd.f32 %v2430, %v2480
    %v2574 = vadd.f32 %v2435, %v2482
    %v2575 = vadd.f32 %v2436, %v2484
    %v2576 = vxor.u32 %v2572, 2147483648
    %v2577 = vxor.u32 %v2573, 2147483648
    %v2578 = vxor.u32 %v2574, 2147483648
    %v2579 = vxor.u32 %v2575, 2147483648
    %v2580 = vmul.f32 %v2576, 1.442695
    %v2581 = vpow.pop %v2580
    %v2582 = vmul.f32 %v2577, 1.442695
    %v2583 = vpow.pop %v2582
    %v2584 = vmul.f32 %v2578, 1.442695
    %v2585 = vpow.pop %v2584
    %v2586 = vmul.f32 %v2579, 1.442695
    %v2587 = vpow.pop %v2586
    %v2588 = vadd.f32 %v2581, 1.0
    %v2589 = vadd.f32 %v2583, 1.0
    %v2590 = vadd.f32 %v2585, 1.0
    %v2591 = vadd.f32 %v2587, 1.0
    %v2592 = vrcp.pop %v2588
    %v2593 = vmul.f32 1.0, %v2592
    %v2594 = vrcp.pop %v2589
    %v2595 = vmul.f32 1.0, %v2594
    %v2596 = vrcp.pop %v2590
    %v2597 = vmul.f32 1.0, %v2596
    %v2598 = vrcp.pop %v2591
    %v2599 = vmul.f32 1.0, %v2598
    %v2600 = vadd.f32 %v2431, %v2521
    %v2601 = vadd.f32 %v2432, %v2523
    %v2602 = vadd.f32 %v2437, %v2525
    %v2603 = vadd.f32 %v2438, %v2527
    %v2604 = vxor.u32 %v2600, 2147483648
    %v2605 = vxor.u32 %v2601, 2147483648
    %v2606 = vxor.u32 %v2602, 2147483648
    %v2607 = vxor.u32 %v2603, 2147483648
    %v2608 = vmul.f32 %v2604, 1.442695
    %v2609 = vpow.pop %v2608
    %v2610 = vmul.f32 %v2605, 1.442695
    %v2611 = vpow.pop %v2610
    %v2612 = vmul.f32 %v2606, 1.442695
    %v2613 = vpow.pop %v2612
    %v2614 = vmul.f32 %v2607, 1.442695
    %v2615 = vpow.pop %v2614
    %v2616 = vadd.f32 %v2609, 1.0
    %v2617 = vadd.f32 %v2611, 1.0
    %v2618 = vadd.f32 %v2613, 1.0
    %v2619 = vadd.f32 %v2615, 1.0
    %v2620 = vrcp.pop %v2616
    %v2621 = vmul.f32 1.0, %v2620
    %v2622 = vrcp.pop %v2617
    %v2623 = vmul.f32 1.0, %v2622
    %v2624 = vrcp.pop %v2618
    %v2625 = vmul.f32 1.0, %v2624
    %v2626 = vrcp.pop %v2619
    %v2627 = vmul.f32 1.0, %v2626
    %v2628 = vmul.f32 %v2593, %v2564
    %v2629 = vmul.f32 %v2595, %v2566
    %v2630 = vmul.f32 %v2597, %v2568
    %v2631 = vmul.f32 %v2599, %v2570
    %v2632 = vadd.f32 %v2433, %v2628
    %v2633 = vadd.f32 %v2434, %v2629
    %v2634 = vadd.f32 %v2439, %v2630
    %v2635 = vadd.f32 %v2440, %v2631
    %v2636 = vtanh.pop %v2632
    %v2637 = vtanh.pop %v2633
    %v2638 = vtanh.pop %v2634
    %v2639 = vtanh.pop %v2635
    %v2640 = vsub.f32 1.0, %v2621
    %v2641 = vsub.f32 1.0, %v2623
    %v2642 = vsub.f32 1.0, %v2625
    %v2643 = vsub.f32 1.0, %v2627
    %v2644 = vmul.f32 %v2640, %v2636
    %v2645 = vmul.f32 %v2641, %v2637
    %v2646 = vmul.f32 %v2642, %v2638
    %v2647 = vmul.f32 %v2643, %v2639
    %v2648 = vmul.f32 %v2621, %v2424
    %v2649 = vmul.f32 %v2623, %v2425
    %v2650 = vmul.f32 %v2625, %v2426
    %v2651 = vmul.f32 %v2627, %v2427
    %v2652 = vadd.f32 %v2644, %v2648
    %v2653 = vadd.f32 %v2645, %v2649
    %v2654 = vadd.f32 %v2646, %v2650
    %v2655 = vadd.f32 %v2647, %v2651
    %s2656 = scalar_lea.vmem [#allocation2], 480
    %v2657 = vld [vmem:[%s2656] sm:$0xff]
    %v2658 = vld [vmem:[%s2656 + $0x8] sm:$0xff]
    %v2659 = vld [vmem:[%s2656 + $0x10] sm:$0xff]
    %v2660 = vld [vmem:[%s2656 + $0x18] sm:$0xff]
    %v2661 = vld [vmem:[%s2656 + $0x20] sm:$0xff]
    %v2662 = vld [vmem:[%s2656 + $0x28] sm:$0xff]
    %v2663 = vld [vmem:[%s2656 + $0x30] sm:$0xff]
    %v2664 = vld [vmem:[%s2656 + $0x38] sm:$0xff]
    %v2665 = vld [vmem:[%s2656 + $0x40] sm:$0xff]
    %v2666 = vld [vmem:[%s2656 + $0x48] sm:$0xff]
    %v2667 = vld [vmem:[%s2656 + $0x50] sm:$0xff]
    %v2668 = vld [vmem:[%s2656 + $0x58] sm:$0xff]
    %v2669 = vpack.c.bf16 %v2654, %v2652
    %v2670 = vpack.c.bf16 %v2655, %v2653
    %2671 = vmatprep.subr.bf16.mxu0 %v1244
    %2672 = vmatpush1.bf16.msra.mxu0 %v1243
    %2673 = vmatprep.subr.bf16.mxu0 %v1248
    %2674 = vmatpush1.bf16.msra.mxu0 %v1247
    %2675 = vmatprep.subr.bf16.mxu0 %v1252
    %2676 = vmatpush1.bf16.msra.mxu0 %v1251
    %2677 = vmatprep.subr.bf16.mxu0 %v1256
    %2678 = vmatpush1.bf16.msra.mxu0 %v1255
    %2679 = vmatprep.subr.bf16.mxu0 %v1260
    %2680 = vmatpush1.bf16.msra.mxu0 %v1259
    %2681 = vmatprep.subr.bf16.mxu0 %v1264
    %2682 = vmatpush1.bf16.msra.mxu0 %v1263
    %2683 = vmatprep.subr.bf16.mxu0 %v1268
    %2684 = vmatpush1.bf16.msra.mxu0 %v1267
    %2685 = vmatprep.subr.bf16.mxu0 %v1272
    %2686 = vmatpush1.bf16.msra.mxu0 %v1271
    %2687 = vmatprep.subr.bf16.mxu0 %v1276
    %2688 = vmatpush1.bf16.msra.mxu0 %v1275
    %2689 = vmatprep.subr.bf16.mxu0 %v1280
    %2690 = vmatpush1.bf16.msra.mxu0 %v1279
    %2691 = vmatprep.subr.bf16.mxu0 %v1284
    %2692 = vmatpush1.bf16.msra.mxu0 %v1283
    %2693 = vmatprep.subr.bf16.mxu0 %v1288
    %2694 = vmatpush1.bf16.msra.mxu0 %v1287
    %2695 = vmatprep.subr.bf16.mxu0 %v1292
    %2696 = vmatpush1.bf16.msra.mxu0 %v1291
    %2697 = vmatprep.subr.bf16.mxu0 %v1296
    %2698 = vmatpush1.bf16.msra.mxu0 %v1295
    %2699 = vmatprep.subr.bf16.mxu0 %v1300
    %2700 = vmatpush1.bf16.msra.mxu0 %v1299
    %2701 = vmatprep.subr.bf16.mxu0 %v1304
    %2702 = vmatpush1.bf16.msra.mxu0 %v1303
    %2703 = vmatprep.mubr.bf16.mxu0 %v2670
    %2704 = vmatmul.mubr.bf16.gmra.mrb[0].mxu0 %v2669
    %v2705 = vpop.f32.mrb[0].mxu0
    %v2706 = vadd.f32 %v1004, %v2705
    %v2707 = vpop.f32.mrb[0].mxu0
    %v2708 = vadd.f32 %v1008, %v2707
    %v2709 = vpop.f32.mrb[0].mxu0
    %v2710 = vadd.f32 %v1004, %v2709
    %v2711 = vpop.f32.mrb[0].mxu0
    %v2712 = vadd.f32 %v1008, %v2711
    %2713 = vdwg.mxu0
    %2714 = vmatprep.subr.bf16.mxu0 %v1246
    %2715 = vmatpush1.bf16.msra.mxu0 %v1245
    %2716 = vmatprep.subr.bf16.mxu0 %v1250
    %2717 = vmatpush1.bf16.msra.mxu0 %v1249
    %2718 = vmatprep.subr.bf16.mxu0 %v1254
    %2719 = vmatpush1.bf16.msra.mxu0 %v1253
    %2720 = vmatprep.subr.bf16.mxu0 %v1258
    %2721 = vmatpush1.bf16.msra.mxu0 %v1257
    %2722 = vmatprep.subr.bf16.mxu0 %v1262
    %2723 = vmatpush1.bf16.msra.mxu0 %v1261
    %2724 = vmatprep.subr.bf16.mxu0 %v1266
    %2725 = vmatpush1.bf16.msra.mxu0 %v1265
    %2726 = vmatprep.subr.bf16.mxu0 %v1270
    %2727 = vmatpush1.bf16.msra.mxu0 %v1269
    %2728 = vmatprep.subr.bf16.mxu0 %v1274
    %2729 = vmatpush1.bf16.msra.mxu0 %v1273
    %2730 = vmatprep.subr.bf16.mxu0 %v1278
    %2731 = vmatpush1.bf16.msra.mxu0 %v1277
    %2732 = vmatprep.subr.bf16.mxu0 %v1282
    %2733 = vmatpush1.bf16.msra.mxu0 %v1281
    %2734 = vmatprep.subr.bf16.mxu0 %v1286
    %2735 = vmatpush1.bf16.msra.mxu0 %v1285
    %2736 = vmatprep.subr.bf16.mxu0 %v1290
    %2737 = vmatpush1.bf16.msra.mxu0 %v1289
    %2738 = vmatprep.subr.bf16.mxu0 %v1294
    %2739 = vmatpush1.bf16.msra.mxu0 %v1293
    %2740 = vmatprep.subr.bf16.mxu0 %v1298
    %2741 = vmatpush1.bf16.msra.mxu0 %v1297
    %2742 = vmatprep.subr.bf16.mxu0 %v1302
    %2743 = vmatpush1.bf16.msra.mxu0 %v1301
    %2744 = vmatprep.subr.bf16.mxu0 %v1306
    %2745 = vmatpush1.bf16.msra.mxu0 %v1305
    %2746 = vmatprep.mubr.bf16.mxu0 %v2670
    %2747 = vmatmul.mubr.bf16.gmra.mrb[0].mxu0 %v2669
    %v2748 = vpop.f32.mrb[0].mxu0
    %v2749 = vadd.f32 %v1012, %v2748
    %v2750 = vpop.f32.mrb[0].mxu0
    %v2751 = vadd.f32 %v1016, %v2750
    %v2752 = vpop.f32.mrb[0].mxu0
    %v2753 = vadd.f32 %v1012, %v2752
    %v2754 = vpop.f32.mrb[0].mxu0
    %v2755 = vadd.f32 %v1016, %v2754
    %2756 = vdwg.mxu0
    %2757 = vmatprep.subr.bf16.mxu0 %v1554
    %2758 = vmatpush1.bf16.msra.mxu0 %v1553
    %2759 = vmatprep.subr.bf16.mxu0 %v1556
    %2760 = vmatpush1.bf16.msra.mxu0 %v1555
    %2761 = vmatprep.subr.bf16.mxu0 %v1558
    %2762 = vmatpush1.bf16.msra.mxu0 %v1557
    %2763 = vmatprep.subr.bf16.mxu0 %v1560
    %2764 = vmatpush1.bf16.msra.mxu0 %v1559
    %2765 = vmatprep.subr.bf16.mxu0 %v1562
    %2766 = vmatpush1.bf16.msra.mxu0 %v1561
    %2767 = vmatprep.subr.bf16.mxu0 %v1564
    %2768 = vmatpush1.bf16.msra.mxu0 %v1563
    %2769 = vmatprep.subr.bf16.mxu0 %v1566
    %2770 = vmatpush1.bf16.msra.mxu0 %v1565
    %2771 = vmatprep.subr.bf16.mxu0 %v1568
    %2772 = vmatpush1.bf16.msra.mxu0 %v1567
    %2773 = vmatprep.subr.bf16.mxu0 %v1570
    %2774 = vmatpush1.bf16.msra.mxu0 %v1569
    %2775 = vmatprep.subr.bf16.mxu0 %v1572
    %2776 = vmatpush1.bf16.msra.mxu0 %v1571
    %2777 = vmatprep.subr.bf16.mxu0 %v1574
    %2778 = vmatpush1.bf16.msra.mxu0 %v1573
    %2779 = vmatprep.subr.bf16.mxu0 %v1576
    %2780 = vmatpush1.bf16.msra.mxu0 %v1575
    %2781 = vmatprep.subr.bf16.mxu0 %v1578
    %2782 = vmatpush1.bf16.msra.mxu0 %v1577
    %2783 = vmatprep.subr.bf16.mxu0 %v1580
    %2784 = vmatpush1.bf16.msra.mxu0 %v1579
    %2785 = vmatprep.subr.bf16.mxu0 %v1582
    %2786 = vmatpush1.bf16.msra.mxu0 %v1581
    %2787 = vmatprep.subr.bf16.mxu0 %v1584
    %2788 = vmatpush1.bf16.msra.mxu0 %v1583
    %2789 = vmatprep.mubr.bf16.mxu0 %v2670
    %2790 = vmatmul.mubr.bf16.gmra.mrb[0].mxu0 %v2669
    %v2791 = vpop.f32.mrb[0].mxu0
    %v2792 = vadd.f32 %v1026, %v2791
    %v2793 = vpop.f32.mrb[0].mxu0
    %v2794 = vadd.f32 %v1030, %v2793
    %v2795 = vpop.f32.mrb[0].mxu0
    %v2796 = vadd.f32 %v1026, %v2795
    %v2797 = vpop.f32.mrb[0].mxu0
    %v2798 = vadd.f32 %v1030, %v2797
    %2799 = vdwg.mxu0
    %v2800 = vadd.f32 %v2657, %v2706
    %v2801 = vadd.f32 %v2658, %v2708
    %v2802 = vadd.f32 %v2663, %v2710
    %v2803 = vadd.f32 %v2664, %v2712
    %v2804 = vxor.u32 %v2800, 2147483648
    %v2805 = vxor.u32 %v2801, 2147483648
    %v2806 = vxor.u32 %v2802, 2147483648
    %v2807 = vxor.u32 %v2803, 2147483648
    %v2808 = vmul.f32 %v2804, 1.442695
    %v2809 = vpow.pop %v2808
    %v2810 = vmul.f32 %v2805, 1.442695
    %v2811 = vpow.pop %v2810
    %v2812 = vmul.f32 %v2806, 1.442695
    %v2813 = vpow.pop %v2812
    %v2814 = vmul.f32 %v2807, 1.442695
    %v2815 = vpow.pop %v2814
    %v2816 = vadd.f32 %v2809, 1.0
    %v2817 = vadd.f32 %v2811, 1.0
    %v2818 = vadd.f32 %v2813, 1.0
    %v2819 = vadd.f32 %v2815, 1.0
    %v2820 = vrcp.pop %v2816
    %v2821 = vmul.f32 1.0, %v2820
    %v2822 = vrcp.pop %v2817
    %v2823 = vmul.f32 1.0, %v2822
    %v2824 = vrcp.pop %v2818
    %v2825 = vmul.f32 1.0, %v2824
    %v2826 = vrcp.pop %v2819
    %v2827 = vmul.f32 1.0, %v2826
    %v2828 = vadd.f32 %v2659, %v2749
    %v2829 = vadd.f32 %v2660, %v2751
    %v2830 = vadd.f32 %v2665, %v2753
    %v2831 = vadd.f32 %v2666, %v2755
    %v2832 = vxor.u32 %v2828, 2147483648
    %v2833 = vxor.u32 %v2829, 2147483648
    %v2834 = vxor.u32 %v2830, 2147483648
    %v2835 = vxor.u32 %v2831, 2147483648
    %v2836 = vmul.f32 %v2832, 1.442695
    %v2837 = vpow.pop %v2836
    %v2838 = vmul.f32 %v2833, 1.442695
    %v2839 = vpow.pop %v2838
    %v2840 = vmul.f32 %v2834, 1.442695
    %v2841 = vpow.pop %v2840
    %v2842 = vmul.f32 %v2835, 1.442695
    %v2843 = vpow.pop %v2842
    %v2844 = vadd.f32 %v2837, 1.0
    %v2845 = vadd.f32 %v2839, 1.0
    %v2846 = vadd.f32 %v2841, 1.0
    %v2847 = vadd.f32 %v2843, 1.0
    %v2848 = vrcp.pop %v2844
    %v2849 = vmul.f32 1.0, %v2848
    %v2850 = vrcp.pop %v2845
    %v2851 = vmul.f32 1.0, %v2850
    %v2852 = vrcp.pop %v2846
    %v2853 = vmul.f32 1.0, %v2852
    %v2854 = vrcp.pop %v2847
    %v2855 = vmul.f32 1.0, %v2854
    %v2856 = vmul.f32 %v2821, %v2792
    %v2857 = vmul.f32 %v2823, %v2794
    %v2858 = vmul.f32 %v2825, %v2796
    %v2859 = vmul.f32 %v2827, %v2798
    %v2860 = vadd.f32 %v2661, %v2856
    %v2861 = vadd.f32 %v2662, %v2857
    %v2862 = vadd.f32 %v2667, %v2858
    %v2863 = vadd.f32 %v2668, %v2859
    %v2864 = vtanh.pop %v2860
    %v2865 = vtanh.pop %v2861
    %v2866 = vtanh.pop %v2862
    %v2867 = vtanh.pop %v2863
    %v2868 = vsub.f32 1.0, %v2849
    %v2869 = vsub.f32 1.0, %v2851
    %v2870 = vsub.f32 1.0, %v2853
    %v2871 = vsub.f32 1.0, %v2855
    %v2872 = vmul.f32 %v2868, %v2864
    %v2873 = vmul.f32 %v2869, %v2865
    %v2874 = vmul.f32 %v2870, %v2866
    %v2875 = vmul.f32 %v2871, %v2867
    %v2876 = vmul.f32 %v2849, %v2652
    %v2877 = vmul.f32 %v2851, %v2653
    %v2878 = vmul.f32 %v2853, %v2654
    %v2879 = vmul.f32 %v2855, %v2655
    %v2880 = vadd.f32 %v2872, %v2876
    %v2881 = vadd.f32 %v2873, %v2877
    %v2882 = vadd.f32 %v2874, %v2878
    %v2883 = vadd.f32 %v2875, %v2879
    %s2884 = scalar_lea.vmem [#allocation2], 576
    %v2885 = vld [vmem:[%s2884] sm:$0xff]
    %v2886 = vld [vmem:[%s2884 + $0x8] sm:$0xff]
    %v2887 = vld [vmem:[%s2884 + $0x10] sm:$0xff]
    %v2888 = vld [vmem:[%s2884 + $0x18] sm:$0xff]
    %v2889 = vld [vmem:[%s2884 + $0x20] sm:$0xff]
    %v2890 = vld [vmem:[%s2884 + $0x28] sm:$0xff]
    %v2891 = vld [vmem:[%s2884 + $0x30] sm:$0xff]
    %v2892 = vld [vmem:[%s2884 + $0x38] sm:$0xff]
    %v2893 = vld [vmem:[%s2884 + $0x40] sm:$0xff]
    %v2894 = vld [vmem:[%s2884 + $0x48] sm:$0xff]
    %v2895 = vld [vmem:[%s2884 + $0x50] sm:$0xff]
    %v2896 = vld [vmem:[%s2884 + $0x58] sm:$0xff]
    %v2897 = vpack.c.bf16 %v2882, %v2880
    %v2898 = vpack.c.bf16 %v2883, %v2881
    %2899 = vmatprep.subr.bf16.mxu0 %v1244
    %2900 = vmatpush1.bf16.msra.mxu0 %v1243
    %2901 = vmatprep.subr.bf16.mxu0 %v1248
    %2902 = vmatpush1.bf16.msra.mxu0 %v1247
    %2903 = vmatprep.subr.bf16.mxu0 %v1252
    %2904 = vmatpush1.bf16.msra.mxu0 %v1251
    %2905 = vmatprep.subr.bf16.mxu0 %v1256
    %2906 = vmatpush1.bf16.msra.mxu0 %v1255
    %2907 = vmatprep.subr.bf16.mxu0 %v1260
    %2908 = vmatpush1.bf16.msra.mxu0 %v1259
    %2909 = vmatprep.subr.bf16.mxu0 %v1264
    %2910 = vmatpush1.bf16.msra.mxu0 %v1263
    %2911 = vmatprep.subr.bf16.mxu0 %v1268
    %2912 = vmatpush1.bf16.msra.mxu0 %v1267
    %2913 = vmatprep.subr.bf16.mxu0 %v1272
    %2914 = vmatpush1.bf16.msra.mxu0 %v1271
    %2915 = vmatprep.subr.bf16.mxu0 %v1276
    %2916 = vmatpush1.bf16.msra.mxu0 %v1275
    %2917 = vmatprep.subr.bf16.mxu0 %v1280
    %2918 = vmatpush1.bf16.msra.mxu0 %v1279
    %2919 = vmatprep.subr.bf16.mxu0 %v1284
    %2920 = vmatpush1.bf16.msra.mxu0 %v1283
    %2921 = vmatprep.subr.bf16.mxu0 %v1288
    %2922 = vmatpush1.bf16.msra.mxu0 %v1287
    %2923 = vmatprep.subr.bf16.mxu0 %v1292
    %2924 = vmatpush1.bf16.msra.mxu0 %v1291
    %2925 = vmatprep.subr.bf16.mxu0 %v1296
    %2926 = vmatpush1.bf16.msra.mxu0 %v1295
    %2927 = vmatprep.subr.bf16.mxu0 %v1300
    %2928 = vmatpush1.bf16.msra.mxu0 %v1299
    %2929 = vmatprep.subr.bf16.mxu0 %v1304
    %2930 = vmatpush1.bf16.msra.mxu0 %v1303
    %2931 = vmatprep.mubr.bf16.mxu0 %v2898
    %2932 = vmatmul.mubr.bf16.gmra.mrb[0].mxu0 %v2897
    %v2933 = vpop.f32.mrb[0].mxu0
    %v2934 = vadd.f32 %v1004, %v2933
    %v2935 = vpop.f32.mrb[0].mxu0
    %v2936 = vadd.f32 %v1008, %v2935
    %v2937 = vpop.f32.mrb[0].mxu0
    %v2938 = vadd.f32 %v1004, %v2937
    %v2939 = vpop.f32.mrb[0].mxu0
    %v2940 = vadd.f32 %v1008, %v2939
    %2941 = vdwg.mxu0
    %2942 = vmatprep.subr.bf16.mxu0 %v1246
    %2943 = vmatpush1.bf16.msra.mxu0 %v1245
    %2944 = vmatprep.subr.bf16.mxu0 %v1250
    %2945 = vmatpush1.bf16.msra.mxu0 %v1249
    %2946 = vmatprep.subr.bf16.mxu0 %v1254
    %2947 = vmatpush1.bf16.msra.mxu0 %v1253
    %2948 = vmatprep.subr.bf16.mxu0 %v1258
    %2949 = vmatpush1.bf16.msra.mxu0 %v1257
    %2950 = vmatprep.subr.bf16.mxu0 %v1262
    %2951 = vmatpush1.bf16.msra.mxu0 %v1261
    %2952 = vmatprep.subr.bf16.mxu0 %v1266
    %2953 = vmatpush1.bf16.msra.mxu0 %v1265
    %2954 = vmatprep.subr.bf16.mxu0 %v1270
    %2955 = vmatpush1.bf16.msra.mxu0 %v1269
    %2956 = vmatprep.subr.bf16.mxu0 %v1274
    %2957 = vmatpush1.bf16.msra.mxu0 %v1273
    %2958 = vmatprep.subr.bf16.mxu0 %v1278
    %2959 = vmatpush1.bf16.msra.mxu0 %v1277
    %2960 = vmatprep.subr.bf16.mxu0 %v1282
    %2961 = vmatpush1.bf16.msra.mxu0 %v1281
    %2962 = vmatprep.subr.bf16.mxu0 %v1286
    %2963 = vmatpush1.bf16.msra.mxu0 %v1285
    %2964 = vmatprep.subr.bf16.mxu0 %v1290
    %2965 = vmatpush1.bf16.msra.mxu0 %v1289
    %2966 = vmatprep.subr.bf16.mxu0 %v1294
    %2967 = vmatpush1.bf16.msra.mxu0 %v1293
    %2968 = vmatprep.subr.bf16.mxu0 %v1298
    %2969 = vmatpush1.bf16.msra.mxu0 %v1297
    %2970 = vmatprep.subr.bf16.mxu0 %v1302
    %2971 = vmatpush1.bf16.msra.mxu0 %v1301
    %2972 = vmatprep.subr.bf16.mxu0 %v1306
    %2973 = vmatpush1.bf16.msra.mxu0 %v1305
    %2974 = vmatprep.mubr.bf16.mxu0 %v2898
    %2975 = vmatmul.mubr.bf16.gmra.mrb[0].mxu0 %v2897
    %v2976 = vpop.f32.mrb[0].mxu0
    %v2977 = vadd.f32 %v1012, %v2976
    %v2978 = vpop.f32.mrb[0].mxu0
    %v2979 = vadd.f32 %v1016, %v2978
    %v2980 = vpop.f32.mrb[0].mxu0
    %v2981 = vadd.f32 %v1012, %v2980
    %v2982 = vpop.f32.mrb[0].mxu0
    %v2983 = vadd.f32 %v1016, %v2982
    %2984 = vdwg.mxu0
    %2985 = vmatprep.subr.bf16.mxu0 %v1554
    %2986 = vmatpush1.bf16.msra.mxu0 %v1553
    %2987 = vmatprep.subr.bf16.mxu0 %v1556
    %2988 = vmatpush1.bf16.msra.mxu0 %v1555
    %2989 = vmatprep.subr.bf16.mxu0 %v1558
    %2990 = vmatpush1.bf16.msra.mxu0 %v1557
    %2991 = vmatprep.subr.bf16.mxu0 %v1560
    %2992 = vmatpush1.bf16.msra.mxu0 %v1559
    %2993 = vmatprep.subr.bf16.mxu0 %v1562
    %2994 = vmatpush1.bf16.msra.mxu0 %v1561
    %2995 = vmatprep.subr.bf16.mxu0 %v1564
    %2996 = vmatpush1.bf16.msra.mxu0 %v1563
    %2997 = vmatprep.subr.bf16.mxu0 %v1566
    %2998 = vmatpush1.bf16.msra.mxu0 %v1565
    %2999 = vmatprep.subr.bf16.mxu0 %v1568
    %3000 = vmatpush1.bf16.msra.mxu0 %v1567
    %3001 = vmatprep.subr.bf16.mxu0 %v1570
    %3002 = vmatpush1.bf16.msra.mxu0 %v1569
    %3003 = vmatprep.subr.bf16.mxu0 %v1572
    %3004 = vmatpush1.bf16.msra.mxu0 %v1571
    %3005 = vmatprep.subr.bf16.mxu0 %v1574
    %3006 = vmatpush1.bf16.msra.mxu0 %v1573
    %3007 = vmatprep.subr.bf16.mxu0 %v1576
    %3008 = vmatpush1.bf16.msra.mxu0 %v1575
    %3009 = vmatprep.subr.bf16.mxu0 %v1578
    %3010 = vmatpush1.bf16.msra.mxu0 %v1577
    %3011 = vmatprep.subr.bf16.mxu0 %v1580
    %3012 = vmatpush1.bf16.msra.mxu0 %v1579
    %3013 = vmatprep.subr.bf16.mxu0 %v1582
    %3014 = vmatpush1.bf16.msra.mxu0 %v1581
    %3015 = vmatprep.subr.bf16.mxu0 %v1584
    %3016 = vmatpush1.bf16.msra.mxu0 %v1583
    %3017 = vmatprep.mubr.bf16.mxu0 %v2898
    %3018 = vmatmul.mubr.bf16.gmra.mrb[0].mxu0 %v2897
    %v3019 = vpop.f32.mrb[0].mxu0
    %v3020 = vadd.f32 %v1026, %v3019
    %v3021 = vpop.f32.mrb[0].mxu0
    %v3022 = vadd.f32 %v1030, %v3021
    %v3023 = vpop.f32.mrb[0].mxu0
    %v3024 = vadd.f32 %v1026, %v3023
    %v3025 = vpop.f32.mrb[0].mxu0
    %v3026 = vadd.f32 %v1030, %v3025
    %3027 = vdwg.mxu0
    %v3028 = vadd.f32 %v2885, %v2934
    %v3029 = vadd.f32 %v2886, %v2936
    %v3030 = vadd.f32 %v2891, %v2938
    %v3031 = vadd.f32 %v2892, %v2940
    %v3032 = vxor.u32 %v3028, 2147483648
    %v3033 = vxor.u32 %v3029, 2147483648
    %v3034 = vxor.u32 %v3030, 2147483648
    %v3035 = vxor.u32 %v3031, 2147483648
    %v3036 = vmul.f32 %v3032, 1.442695
    %v3037 = vpow.pop %v3036
    %v3038 = vmul.f32 %v3033, 1.442695
    %v3039 = vpow.pop %v3038
    %v3040 = vmul.f32 %v3034, 1.442695
    %v3041 = vpow.pop %v3040
    %v3042 = vmul.f32 %v3035, 1.442695
    %v3043 = vpow.pop %v3042
    %v3044 = vadd.f32 %v3037, 1.0
    %v3045 = vadd.f32 %v3039, 1.0
    %v3046 = vadd.f32 %v3041, 1.0
    %v3047 = vadd.f32 %v3043, 1.0
    %v3048 = vrcp.pop %v3044
    %v3049 = vmul.f32 1.0, %v3048
    %v3050 = vrcp.pop %v3045
    %v3051 = vmul.f32 1.0, %v3050
    %v3052 = vrcp.pop %v3046
    %v3053 = vmul.f32 1.0, %v3052
    %v3054 = vrcp.pop %v3047
    %v3055 = vmul.f32 1.0, %v3054
    %v3056 = vadd.f32 %v2887, %v2977
    %v3057 = vadd.f32 %v2888, %v2979
    %v3058 = vadd.f32 %v2893, %v2981
    %v3059 = vadd.f32 %v2894, %v2983
    %v3060 = vxor.u32 %v3056, 2147483648
    %v3061 = vxor.u32 %v3057, 2147483648
    %v3062 = vxor.u32 %v3058, 2147483648
    %v3063 = vxor.u32 %v3059, 2147483648
    %v3064 = vmul.f32 %v3060, 1.442695
    %v3065 = vpow.pop %v3064
    %v3066 = vmul.f32 %v3061, 1.442695
    %v3067 = vpow.pop %v3066
    %v3068 = vmul.f32 %v3062, 1.442695
    %v3069 = vpow.pop %v3068
    %v3070 = vmul.f32 %v3063, 1.442695
    %v3071 = vpow.pop %v3070
    %v3072 = vadd.f32 %v3065, 1.0
    %v3073 = vadd.f32 %v3067, 1.0
    %v3074 = vadd.f32 %v3069, 1.0
    %v3075 = vadd.f32 %v3071, 1.0
    %v3076 = vrcp.pop %v3072
    %v3077 = vmul.f32 1.0, %v3076
    %v3078 = vrcp.pop %v3073
    %v3079 = vmul.f32 1.0, %v3078
    %v3080 = vrcp.pop %v3074
    %v3081 = vmul.f32 1.0, %v3080
    %v3082 = vrcp.pop %v3075
    %v3083 = vmul.f32 1.0, %v3082
    %v3084 = vmul.f32 %v3049, %v3020
    %v3085 = vmul.f32 %v3051, %v3022
    %v3086 = vmul.f32 %v3053, %v3024
    %v3087 = vmul.f32 %v3055, %v3026
    %v3088 = vadd.f32 %v2889, %v3084
    %v3089 = vadd.f32 %v2890, %v3085
    %v3090 = vadd.f32 %v2895, %v3086
    %v3091 = vadd.f32 %v2896, %v3087
    %v3092 = vtanh.pop %v3088
    %v3093 = vtanh.pop %v3089
    %v3094 = vtanh.pop %v3090
    %v3095 = vtanh.pop %v3091
    %v3096 = vsub.f32 1.0, %v3077
    %v3097 = vsub.f32 1.0, %v3079
    %v3098 = vsub.f32 1.0, %v3081
    %v3099 = vsub.f32 1.0, %v3083
    %v3100 = vmul.f32 %v3096, %v3092
    %v3101 = vmul.f32 %v3097, %v3093
    %v3102 = vmul.f32 %v3098, %v3094
    %v3103 = vmul.f32 %v3099, %v3095
    %v3104 = vmul.f32 %v3077, %v2880
    %v3105 = vmul.f32 %v3079, %v2881
    %v3106 = vmul.f32 %v3081, %v2882
    %v3107 = vmul.f32 %v3083, %v2883
    %v3108 = vadd.f32 %v3100, %v3104
    %v3109 = vadd.f32 %v3101, %v3105
    %v3110 = vadd.f32 %v3102, %v3106
    %v3111 = vadd.f32 %v3103, %v3107
    %s3112 = scalar_lea.vmem [#allocation2], 672
    %v3113 = vld [vmem:[%s3112] sm:$0xff]
    %v3114 = vld [vmem:[%s3112 + $0x8] sm:$0xff]
    %v3115 = vld [vmem:[%s3112 + $0x10] sm:$0xff]
    %v3116 = vld [vmem:[%s3112 + $0x18] sm:$0xff]
    %v3117 = vld [vmem:[%s3112 + $0x20] sm:$0xff]
    %v3118 = vld [vmem:[%s3112 + $0x28] sm:$0xff]
    %v3119 = vld [vmem:[%s3112 + $0x30] sm:$0xff]
    %v3120 = vld [vmem:[%s3112 + $0x38] sm:$0xff]
    %v3121 = vld [vmem:[%s3112 + $0x40] sm:$0xff]
    %v3122 = vld [vmem:[%s3112 + $0x48] sm:$0xff]
    %v3123 = vld [vmem:[%s3112 + $0x50] sm:$0xff]
    %v3124 = vld [vmem:[%s3112 + $0x58] sm:$0xff]
    %v3125 = vpack.c.bf16 %v3110, %v3108
    %v3126 = vpack.c.bf16 %v3111, %v3109
    %3127 = vmatprep.subr.bf16.mxu0 %v1244
    %3128 = vmatpush1.bf16.msra.mxu0 %v1243
    %3129 = vmatprep.subr.bf16.mxu0 %v1248
    %3130 = vmatpush1.bf16.msra.mxu0 %v1247
    %3131 = vmatprep.subr.bf16.mxu0 %v1252
    %3132 = vmatpush1.bf16.msra.mxu0 %v1251
    %3133 = vmatprep.subr.bf16.mxu0 %v1256
    %3134 = vmatpush1.bf16.msra.mxu0 %v1255
    %3135 = vmatprep.subr.bf16.mxu0 %v1260
    %3136 = vmatpush1.bf16.msra.mxu0 %v1259
    %3137 = vmatprep.subr.bf16.mxu0 %v1264
    %3138 = vmatpush1.bf16.msra.mxu0 %v1263
    %3139 = vmatprep.subr.bf16.mxu0 %v1268
    %3140 = vmatpush1.bf16.msra.mxu0 %v1267
    %3141 = vmatprep.subr.bf16.mxu0 %v1272
    %3142 = vmatpush1.bf16.msra.mxu0 %v1271
    %3143 = vmatprep.subr.bf16.mxu0 %v1276
    %3144 = vmatpush1.bf16.msra.mxu0 %v1275
    %3145 = vmatprep.subr.bf16.mxu0 %v1280
    %3146 = vmatpush1.bf16.msra.mxu0 %v1279
    %3147 = vmatprep.subr.bf16.mxu0 %v1284
    %3148 = vmatpush1.bf16.msra.mxu0 %v1283
    %3149 = vmatprep.subr.bf16.mxu0 %v1288
    %3150 = vmatpush1.bf16.msra.mxu0 %v1287
    %3151 = vmatprep.subr.bf16.mxu0 %v1292
    %3152 = vmatpush1.bf16.msra.mxu0 %v1291
    %3153 = vmatprep.subr.bf16.mxu0 %v1296
    %3154 = vmatpush1.bf16.msra.mxu0 %v1295
    %3155 = vmatprep.subr.bf16.mxu0 %v1300
    %3156 = vmatpush1.bf16.msra.mxu0 %v1299
    %3157 = vmatprep.subr.bf16.mxu0 %v1304
    %3158 = vmatpush1.bf16.msra.mxu0 %v1303
    %3159 = vmatprep.mubr.bf16.mxu0 %v3126
    %3160 = vmatmul.mubr.bf16.gmra.mrb[0].mxu0 %v3125
    %v3161 = vpop.f32.mrb[0].mxu0
    %v3162 = vadd.f32 %v1004, %v3161
    %v3163 = vpop.f32.mrb[0].mxu0
    %v3164 = vadd.f32 %v1008, %v3163
    %v3165 = vpop.f32.mrb[0].mxu0
    %v3166 = vadd.f32 %v1004, %v3165
    %v3167 = vpop.f32.mrb[0].mxu0
    %v3168 = vadd.f32 %v1008, %v3167
    %3169 = vdwg.mxu0
    %3170 = vmatprep.subr.bf16.mxu0 %v1246
    %3171 = vmatpush1.bf16.msra.mxu0 %v1245
    %3172 = vmatprep.subr.bf16.mxu0 %v1250
    %3173 = vmatpush1.bf16.msra.mxu0 %v1249
    %3174 = vmatprep.subr.bf16.mxu0 %v1254
    %3175 = vmatpush1.bf16.msra.mxu0 %v1253
    %3176 = vmatprep.subr.bf16.mxu0 %v1258
    %3177 = vmatpush1.bf16.msra.mxu0 %v1257
    %3178 = vmatprep.subr.bf16.mxu0 %v1262
    %3179 = vmatpush1.bf16.msra.mxu0 %v1261
    %3180 = vmatprep.subr.bf16.mxu0 %v1266
    %3181 = vmatpush1.bf16.msra.mxu0 %v1265
    %3182 = vmatprep.subr.bf16.mxu0 %v1270
    %3183 = vmatpush1.bf16.msra.mxu0 %v1269
    %3184 = vmatprep.subr.bf16.mxu0 %v1274
    %3185 = vmatpush1.bf16.msra.mxu0 %v1273
    %3186 = vmatprep.subr.bf16.mxu0 %v1278
    %3187 = vmatpush1.bf16.msra.mxu0 %v1277
    %3188 = vmatprep.subr.bf16.mxu0 %v1282
    %3189 = vmatpush1.bf16.msra.mxu0 %v1281
    %3190 = vmatprep.subr.bf16.mxu0 %v1286
    %3191 = vmatpush1.bf16.msra.mxu0 %v1285
    %3192 = vmatprep.subr.bf16.mxu0 %v1290
    %3193 = vmatpush1.bf16.msra.mxu0 %v1289
    %3194 = vmatprep.subr.bf16.mxu0 %v1294
    %3195 = vmatpush1.bf16.msra.mxu0 %v1293
    %3196 = vmatprep.subr.bf16.mxu0 %v1298
    %3197 = vmatpush1.bf16.msra.mxu0 %v1297
    %3198 = vmatprep.subr.bf16.mxu0 %v1302
    %3199 = vmatpush1.bf16.msra.mxu0 %v1301
    %3200 = vmatprep.subr.bf16.mxu0 %v1306
    %3201 = vmatpush1.bf16.msra.mxu0 %v1305
    %3202 = vmatprep.mubr.bf16.mxu0 %v3126
    %3203 = vmatmul.mubr.bf16.gmra.mrb[0].mxu0 %v3125
    %v3204 = vpop.f32.mrb[0].mxu0
    %v3205 = vadd.f32 %v1012, %v3204
    %v3206 = vpop.f32.mrb[0].mxu0
    %v3207 = vadd.f32 %v1016, %v3206
    %v3208 = vpop.f32.mrb[0].mxu0
    %v3209 = vadd.f32 %v1012, %v3208
    %v3210 = vpop.f32.mrb[0].mxu0
    %v3211 = vadd.f32 %v1016, %v3210
    %3212 = vdwg.mxu0
    %3213 = vmatprep.subr.bf16.mxu0 %v1554
    %3214 = vmatpush1.bf16.msra.mxu0 %v1553
    %3215 = vmatprep.subr.bf16.mxu0 %v1556
    %3216 = vmatpush1.bf16.msra.mxu0 %v1555
    %3217 = vmatprep.subr.bf16.mxu0 %v1558
    %3218 = vmatpush1.bf16.msra.mxu0 %v1557
    %3219 = vmatprep.subr.bf16.mxu0 %v1560
    %3220 = vmatpush1.bf16.msra.mxu0 %v1559
    %3221 = vmatprep.subr.bf16.mxu0 %v1562
    %3222 = vmatpush1.bf16.msra.mxu0 %v1561
    %3223 = vmatprep.subr.bf16.mxu0 %v1564
    %3224 = vmatpush1.bf16.msra.mxu0 %v1563
    %3225 = vmatprep.subr.bf16.mxu0 %v1566
    %3226 = vmatpush1.bf16.msra.mxu0 %v1565
    %3227 = vmatprep.subr.bf16.mxu0 %v1568
    %3228 = vmatpush1.bf16.msra.mxu0 %v1567
    %3229 = vmatprep.subr.bf16.mxu0 %v1570
    %3230 = vmatpush1.bf16.msra.mxu0 %v1569
    %3231 = vmatprep.subr.bf16.mxu0 %v1572
    %3232 = vmatpush1.bf16.msra.mxu0 %v1571
    %3233 = vmatprep.subr.bf16.mxu0 %v1574
    %3234 = vmatpush1.bf16.msra.mxu0 %v1573
    %3235 = vmatprep.subr.bf16.mxu0 %v1576
    %3236 = vmatpush1.bf16.msra.mxu0 %v1575
    %3237 = vmatprep.subr.bf16.mxu0 %v1578
    %3238 = vmatpush1.bf16.msra.mxu0 %v1577
    %3239 = vmatprep.subr.bf16.mxu0 %v1580
    %3240 = vmatpush1.bf16.msra.mxu0 %v1579
    %3241 = vmatprep.subr.bf16.mxu0 %v1582
    %3242 = vmatpush1.bf16.msra.mxu0 %v1581
    %3243 = vmatprep.subr.bf16.mxu0 %v1584
    %3244 = vmatpush1.bf16.msra.mxu0 %v1583
    %3245 = vmatprep.mubr.bf16.mxu0 %v3126
    %3246 = vmatmul.mubr.bf16.gmra.mrb[0].mxu0 %v3125
    %v3247 = vpop.f32.mrb[0].mxu0
    %v3248 = vadd.f32 %v1026, %v3247
    %v3249 = vpop.f32.mrb[0].mxu0
    %v3250 = vadd.f32 %v1030, %v3249
    %v3251 = vpop.f32.mrb[0].mxu0
    %v3252 = vadd.f32 %v1026, %v3251
    %v3253 = vpop.f32.mrb[0].mxu0
    %v3254 = vadd.f32 %v1030, %v3253
    %3255 = vdwg.mxu0
    %v3256 = vadd.f32 %v3113, %v3162
    %v3257 = vadd.f32 %v3114, %v3164
    %v3258 = vadd.f32 %v3119, %v3166
    %v3259 = vadd.f32 %v3120, %v3168
    %v3260 = vxor.u32 %v3256, 2147483648
    %v3261 = vxor.u32 %v3257, 2147483648
    %v3262 = vxor.u32 %v3258, 2147483648
    %v3263 = vxor.u32 %v3259, 2147483648
    %v3264 = vmul.f32 %v3260, 1.442695
    %v3265 = vpow.pop %v3264
    %v3266 = vmul.f32 %v3261, 1.442695
    %v3267 = vpow.pop %v3266
    %v3268 = vmul.f32 %v3262, 1.442695
    %v3269 = vpow.pop %v3268
    %v3270 = vmul.f32 %v3263, 1.442695
    %v3271 = vpow.pop %v3270
    %v3272 = vadd.f32 %v3265, 1.0
    %v3273 = vadd.f32 %v3267, 1.0
    %v3274 = vadd.f32 %v3269, 1.0
    %v3275 = vadd.f32 %v3271, 1.0
    %v3276 = vrcp.pop %v3272
    %v3277 = vmul.f32 1.0, %v3276
    %v3278 = vrcp.pop %v3273
    %v3279 = vmul.f32 1.0, %v3278
    %v3280 = vrcp.pop %v3274
    %v3281 = vmul.f32 1.0, %v3280
    %v3282 = vrcp.pop %v3275
    %v3283 = vmul.f32 1.0, %v3282
    %v3284 = vadd.f32 %v3115, %v3205
    %v3285 = vadd.f32 %v3116, %v3207
    %v3286 = vadd.f32 %v3121, %v3209
    %v3287 = vadd.f32 %v3122, %v3211
    %v3288 = vxor.u32 %v3284, 2147483648
    %v3289 = vxor.u32 %v3285, 2147483648
    %v3290 = vxor.u32 %v3286, 2147483648
    %v3291 = vxor.u32 %v3287, 2147483648
    %v3292 = vmul.f32 %v3288, 1.442695
    %v3293 = vpow.pop %v3292
    %v3294 = vmul.f32 %v3289, 1.442695
    %v3295 = vpow.pop %v3294
    %v3296 = vmul.f32 %v3290, 1.442695
    %v3297 = vpow.pop %v3296
    %v3298 = vmul.f32 %v3291, 1.442695
    %v3299 = vpow.pop %v3298
    %v3300 = vadd.f32 %v3293, 1.0
    %v3301 = vadd.f32 %v3295, 1.0
    %v3302 = vadd.f32 %v3297, 1.0
    %v3303 = vadd.f32 %v3299, 1.0
    %v3304 = vrcp.pop %v3300
    %v3305 = vmul.f32 1.0, %v3304
    %v3306 = vrcp.pop %v3301
    %v3307 = vmul.f32 1.0, %v3306
    %v3308 = vrcp.pop %v3302
    %v3309 = vmul.f32 1.0, %v3308
    %v3310 = vrcp.pop %v3303
    %v3311 = vmul.f32 1.0, %v3310
    %v3312 = vmul.f32 %v3277, %v3248
    %v3313 = vmul.f32 %v3279, %v3250
    %v3314 = vmul.f32 %v3281, %v3252
    %v3315 = vmul.f32 %v3283, %v3254
    %v3316 = vadd.f32 %v3117, %v3312
    %v3317 = vadd.f32 %v3118, %v3313
    %v3318 = vadd.f32 %v3123, %v3314
    %v3319 = vadd.f32 %v3124, %v3315
    %v3320 = vtanh.pop %v3316
    %v3321 = vtanh.pop %v3317
    %v3322 = vtanh.pop %v3318
    %v3323 = vtanh.pop %v3319
    %v3324 = vsub.f32 1.0, %v3305
    %v3325 = vsub.f32 1.0, %v3307
    %v3326 = vsub.f32 1.0, %v3309
    %v3327 = vsub.f32 1.0, %v3311
    %v3328 = vmul.f32 %v3324, %v3320
    %v3329 = vmul.f32 %v3325, %v3321
    %v3330 = vmul.f32 %v3326, %v3322
    %v3331 = vmul.f32 %v3327, %v3323
    %v3332 = vmul.f32 %v3305, %v3108
    %v3333 = vmul.f32 %v3307, %v3109
    %v3334 = vmul.f32 %v3309, %v3110
    %v3335 = vmul.f32 %v3311, %v3111
    %v3336 = vadd.f32 %v3328, %v3332
    %v3337 = vadd.f32 %v3329, %v3333
    %v3338 = vadd.f32 %v3330, %v3334
    %v3339 = vadd.f32 %v3331, %v3335
    %3340 = vst [vmem:[#allocation11] sm:$0xff] %v3336
    %3341 = vst [vmem:[#allocation11 + $0x8] sm:$0xff] %v3337
    %3342 = vst [vmem:[#allocation11 + $0x10] sm:$0xff] %v3338
    %3343 = vst [vmem:[#allocation11 + $0x18] sm:$0xff] %v3339
    // Predicated region
    $region50: #{tpu_custom_call.1} parent=1 // pred_check
      _
    $region51: #{tpu_custom_call.1} parent=1 // pred_check_branch
      %3345 = sbr.rel (0) target = $region53
    $region52: #{tpu_custom_call.1} parent=1 // pred_region
      %s3347 = ssub.s32 512, 512
      %3348 = vsyncadd [#allocation5], %s3347
      %s3349 = sshll.u32 [#allocation11], 4
      %s3350 = int_to_ptr.vmem [resolvable:$true] %s3349
      %3355 = dma.vmem_to_hbm [thread:$0]  %s3350, 512, %s7, [#allocation5], 256, 256, 16
    $region53: #{tpu_custom_call.1} parent=1 // pred_fallthru
      _
    // Predicated region
    $region54: #{tpu_custom_call.1} parent=1 // pred_check
      _
    $region55: #{tpu_custom_call.1} parent=1 // pred_check_branch
      %3357 = sbr.rel (0) target = $region57
    $region56: #{tpu_custom_call.1} parent=1 // pred_region
      %3358 = dma.done [#allocation5], 512
    $region57: #{tpu_custom_call.1} parent=1 // pred_fallthru
      _
    %3359 = vsyncpa [#allocation4], 1
    %3360 = vsyncpa [#allocation7], 1
    %3361 = vsyncpa [#allocation10], 1
    %3362 = vsyncpa [#allocation5], 1

</llo_original>
